<compile_context>
chip_gen: v7x
topology: tpu7x:2x2x1
jax: 0.10.0
libtpu: 0.0.40
codegen_flags: <defaults>
</compile_context>

<pallas_src>
import functools

import jax
import jax.numpy as jnp
from jax.experimental import pallas as pl
from jax.experimental.pallas import tpu as pltpu

NUM_CODES = 1024   # nn.Embedding(1024, 256)
EMB_DIM = 256
TILE_HW = 512      # spatial positions per grid step (multiple of 128)
_LANE = 128


def _round_up(x, m):
    return (x + m - 1) // m * m


def _vq_kernel(idx_ref, emb_hi_ref, emb_lo_ref, out_ref):
    # idx_ref:    (1, 1, T) int32            -- codebook indices for this tile
    # emb_hi_ref: (EMB_DIM, NUM_CODES) bf16  -- bf16(W.T), pre-transposed
    # emb_lo_ref: (EMB_DIM, NUM_CODES) bf16  -- bf16(W.T - f32(hi))
    # out_ref:    (1, EMB_DIM, T) f32        -- channel-major output tile
    t = out_ref.shape[-1]
    idx = idx_ref[0]                                                 # (1, T)
    codes = jax.lax.broadcasted_iota(jnp.int32, (NUM_CODES, t), 0)   # (1024, T)
    one_hot = (codes == idx).astype(jnp.bfloat16)                    # scatter_(1, idx, 1)
    # (256, 1024) @ (1024, T) -> (256, T): output already permuted to NCHW-major.
    z_hi = jnp.dot(emb_hi_ref[...], one_hot, preferred_element_type=jnp.float32)
    z_lo = jnp.dot(emb_lo_ref[...], one_hot, preferred_element_type=jnp.float32)
    out_ref[...] = (z_hi + z_lo)[None].astype(out_ref.dtype)


@functools.partial(jax.jit, static_argnames=("shape",))
def vector_quantizer_forward(indices, embedding_weight, shape):
    """Pallas implementation of VectorQuantizer.forward.

    indices: (b, c, n) integer codes with c*n == h*w
    embedding_weight: (1024, 256) f32
    shape: static tuple (b, h, w, 256)
    returns: (b, 256, h, w) f32
    """
    b, c, n = indices.shape
    sb, h, w, e = shape
    assert sb == b and e == EMB_DIM and c * n == h * w, (indices.shape, shape)
    hw = h * w

    tile_hw = min(TILE_HW, _round_up(hw, _LANE))
    hw_pad = _round_up(hw, tile_hw)

    idx = indices.reshape(b, hw).astype(jnp.int32)
    if hw_pad != hw:
        idx = jnp.pad(idx, ((0, 0), (0, hw_pad - hw)))
    idx = idx[:, None, :]                                  # (b, 1, hw_pad) lane-dense

    # hi/lo split of the f32 codebook (done once per call; in a real model this
    # would be precomputed alongside the weights).
    w_f32 = embedding_weight.astype(jnp.float32)           # (1024, 256)
    w_hi = w_f32.astype(jnp.bfloat16)
    w_lo = (w_f32 - w_hi.astype(jnp.float32)).astype(jnp.bfloat16)
    emb_hi_t = w_hi.T                                      # (256, 1024) bf16
    emb_lo_t = w_lo.T                                      # (256, 1024) bf16

    grid = (b, hw_pad // tile_hw)
    z_q = pl.pallas_call(
        _vq_kernel,
        out_shape=jax.ShapeDtypeStruct((b, EMB_DIM, hw_pad), jnp.float32),
        grid_spec=pltpu.PrefetchScalarGridSpec(
            num_scalar_prefetch=0,
            grid=grid,
            in_specs=[
                pl.BlockSpec((1, 1, tile_hw), lambda bi, ti: (bi, 0, ti)),
                pl.BlockSpec((EMB_DIM, NUM_CODES), lambda bi, ti: (0, 0)),
                pl.BlockSpec((EMB_DIM, NUM_CODES), lambda bi, ti: (0, 0)),
            ],
            out_specs=pl.BlockSpec((1, EMB_DIM, tile_hw), lambda bi, ti: (bi, 0, ti)),
        ),
        compiler_params=pltpu.CompilerParams(
            dimension_semantics=("parallel", "parallel"),
        ),
    )(idx, emb_hi_t, emb_lo_t)

    if hw_pad != hw:
        z_q = z_q[:, :, :hw]
    # (b, 256, h*w) -> (b, 256, h, w): pure reshape, no transpose pass.
    return z_q.reshape(b, EMB_DIM, h, w)


if __name__ == "__main__":
    key = jax.random.PRNGKey(0)
    k_emb, k_idx = jax.random.split(key)

    # Deterministic "nn.Embedding(1024, 256)" weights (default init: N(0, 1)).
    embedding_weight = jax.random.normal(k_emb, (NUM_CODES, EMB_DIM), dtype=jnp.float32)

    # Small example: indices (b, c, n) = (2, 8, 8) -> h = w = 8,
    # output shape = [2, 8, 8, 256] -> permuted to (2, 256, 8, 8).
    b, c, n = 2, 8, 8
    h, w_sp = 8, 8
    indices = jax.random.randint(k_idx, (b, c, n), 0, NUM_CODES, dtype=jnp.int32)
    out_shape = (b, h, w_sp, EMB_DIM)

    z_q = vector_quantizer_forward(indices, embedding_weight, out_shape)
    z_q = jax.block_until_ready(z_q)
    assert z_q.shape == (b, EMB_DIM, h, w_sp), z_q.shape

    # Exact check vs the hi+lo split path (the one-hot matmul selects each bf16
    # row exactly, so the kernel result must equal hi + lo to f32 precision).
    w_hi_f = embedding_weight.astype(jnp.bfloat16).astype(jnp.float32)
    w_lo_f = (embedding_weight - w_hi_f).astype(jnp.bfloat16).astype(jnp.float32)
    w_approx = w_hi_f + w_lo_f
    ref_split = w_approx[indices.reshape(-1)].reshape(out_shape).transpose(0, 3, 1, 2)
    assert jnp.allclose(z_q, ref_split, atol=1e-6), "mismatch vs hi/lo-split reference"

    # Tight check vs the full-f32 PyTorch semantics (hi+lo captures ~17 mantissa bits).
    ref_f32 = embedding_weight[indices.reshape(-1)].reshape(out_shape).transpose(0, 3, 1, 2)
    assert jnp.allclose(z_q, ref_f32, atol=5e-4), "mismatch vs f32 reference"

    print("KERNEL_OK")
</pallas_src>

<mosaic_0001>
module attributes {stable_mosaic.version = 11 : i64} {
  func.func @_vq_kernel(%arg0: i32, %arg1: i32, %arg2: memref<1x1x128xi32, #tpu.memory_space<vmem>>, %arg3: memref<256x1024xbf16, #tpu.memory_space<vmem>>, %arg4: memref<256x1024xbf16, #tpu.memory_space<vmem>>, %arg5: memref<1x256x128xf32, #tpu.memory_space<vmem>>) attributes {dimension_semantics = [#tpu.dimension_semantics<parallel>, #tpu.dimension_semantics<parallel>], iteration_bounds = array<i64: 2, 1>, scalar_prefetch = 0 : i64, scratch_operands = 0 : i64, tpu.core_type = #tpu.core_type<tc>, window_params = [{transform_indices = @transform_0, window_bounds = array<i64: 1, 1, 128>}, {pipeline_mode = #tpu.pipeline_mode<synchronous>, transform_indices = @transform_1, window_bounds = array<i64: 256, 1024>}, {pipeline_mode = #tpu.pipeline_mode<synchronous>, transform_indices = @transform_2, window_bounds = array<i64: 256, 1024>}, {transform_indices = @transform_3, window_bounds = array<i64: 1, 256, 128>}]} {
    %c0 = arith.constant 0 : index
    %c0_0 = arith.constant 0 : index
    %c0_1 = arith.constant 0 : index
    %0 = vector.load %arg2[%c0, %c0_0, %c0_1] : memref<1x1x128xi32, #tpu.memory_space<vmem>>, vector<1x1x128xi32>
    %1 = vector.shape_cast %0 : vector<1x1x128xi32> to vector<1x128xi32>
    %2 = tpu.iota {dimensions = array<i32: 0>} : vector<1024x128xi32>
    %3 = vector.broadcast %1 : vector<1x128xi32> to vector<1024x128xi32>
    %4 = arith.cmpi eq, %2, %3 : vector<1024x128xi32>
    %5 = arith.extui %4 : vector<1024x128xi1> to vector<1024x128xi32>
    %6 = arith.sitofp %5 : vector<1024x128xi32> to vector<1024x128xf32>
    %7 = arith.truncf %6 : vector<1024x128xf32> to vector<1024x128xbf16>
    %c0_2 = arith.constant 0 : index
    %c0_3 = arith.constant 0 : index
    %8 = vector.load %arg3[%c0_2, %c0_3] : memref<256x1024xbf16, #tpu.memory_space<vmem>>, vector<256x1024xbf16>
    %cst = arith.constant dense<0.000000e+00> : vector<256x128xf32>
    %9 = tpu.matmul %8, %7, %cst {dimension_numbers = #tpu.dot_dimension_numbers<[1], [0], [0], [1], [0, 0, 1, 1], [], []>} : vector<256x1024xbf16>, vector<1024x128xbf16>, vector<256x128xf32> -> vector<256x128xf32>
    %c0_4 = arith.constant 0 : index
    %c0_5 = arith.constant 0 : index
    %10 = vector.load %arg4[%c0_4, %c0_5] : memref<256x1024xbf16, #tpu.memory_space<vmem>>, vector<256x1024xbf16>
    %cst_6 = arith.constant dense<0.000000e+00> : vector<256x128xf32>
    %11 = tpu.matmul %10, %7, %cst_6 {dimension_numbers = #tpu.dot_dimension_numbers<[1], [0], [0], [1], [0, 0, 1, 1], [], []>} : vector<256x1024xbf16>, vector<1024x128xbf16>, vector<256x128xf32> -> vector<256x128xf32>
    %12 = arith.addf %9, %11 : vector<256x128xf32>
    %13 = vector.shape_cast %12 : vector<256x128xf32> to vector<1x256x128xf32>
    %c0_7 = arith.constant 0 : index
    %c0_8 = arith.constant 0 : index
    %c0_9 = arith.constant 0 : index
    %14 = vector.load %arg5[%c0_7, %c0_8, %c0_9] : memref<1x256x128xf32, #tpu.memory_space<vmem>>, vector<1x256x128xf32>
    tpu.vector_store %arg5[%c0_7, %c0_8, %c0_9], %13 {strides = array<i32>} : memref<1x256x128xf32, #tpu.memory_space<vmem>>, vector<1x256x128xf32>,
    return
  }
  func.func @transform_0(%arg0: i32, %arg1: i32) -> (i32, i32, i32) {
    %c0_i32 = arith.constant 0 : i32
    %c0_i32_0 = arith.constant 0 : i32
    return %arg0, %c0_i32, %arg1 : i32, i32, i32
  }
  func.func @transform_1(%arg0: i32, %arg1: i32) -> (i32, i32) {
    %c0_i32 = arith.constant 0 : i32
    %c0_i32_0 = arith.constant 0 : i32
    %c0_i32_1 = arith.constant 0 : i32
    return %c0_i32, %c0_i32_0 : i32, i32
  }
  func.func @transform_2(%arg0: i32, %arg1: i32) -> (i32, i32) {
    %c0_i32 = arith.constant 0 : i32
    %c0_i32_0 = arith.constant 0 : i32
    %c0_i32_1 = arith.constant 0 : i32
    return %c0_i32, %c0_i32_0 : i32, i32
  }
  func.func @transform_3(%arg0: i32, %arg1: i32) -> (i32, i32, i32) {
    %c0_i32 = arith.constant 0 : i32
    %c0_i32_0 = arith.constant 0 : i32
    return %arg0, %c0_i32, %arg1 : i32, i32, i32
  }
}

</mosaic_0001>

<llo_original>
// kernel: vector_quantizer_forward.1
$region0: #{vector_quantizer_forward.1}
  #allocation0 [shape = 'u32[]', space=smem, size = 0x4, offset = 0x4, fixed_abs, tag = 'smem constant byte address 0x4 - core index']
  #allocation1 [shape = 'u32[144,128]{1,0:T(1,128)}', space=vmem, size = 0x12000, scoped, tag = 'internal scratch']
  %s0 = inlined_call_operand.vmem [shape: s32[2,1,128], index: 0, kind: input, shape index: {}]
  %s1 = inlined_call_operand.vmem [shape: bf16[256,1024], index: 1, kind: input, shape index: {}]
  %s2 = inlined_call_operand.vmem [shape: bf16[256,1024], index: 2, kind: input, shape index: {}]
  %s3 = inlined_call_operand.vmem [shape: f32[2,256,128], index: 3, kind: output, shape index: {}]
  %s4 = sld [smem:[#allocation0]]
  $region45: #{vector_quantizer_forward.1} parent=0
    _
  %s6 = ssub.s32 1, %s4
  %s7 = scalar_select 0, %s6, %s4
  loop: start=0, step=1, limit=4
  $region2: #{vector_quantizer_forward.1} parent=0 // loop_pre_header
    _
  $region3: #{vector_quantizer_forward.1} parent=0 // loop_header
    %s9 = sphi 0, %s13
    %p10 = scmp.ge.s32.totalorder %s9, 4
    %s16 = sphi 0, %s28
    %s17 = sphi 0, %s24
    %s18 = sphi 0, %s16
    %s19 = sphi 0, %s17
    %s20 = sphi 0, %s18
    %s21 = sphi 0, %s19
    %s33 = sphi 0, %s35
    %s36 = sphi 0, %s33
    %s37 = sphi 0, %s36
    %s53 = sphi 0, %s37
    %s57 = sphi 0, %s57
    %s59 = sphi 0, %s57
    %s60 = sphi 0, %s59
    %s74 = sphi 0, %s60
    %s78 = sphi 0, %s78
    %s80 = sphi 0, %s78
    %s81 = sphi 0, %s80
    %s95 = sphi 0, %s81
    %s103 = sphi 0, %s105
    %s106 = sphi 0, %s103
    %s107 = sphi 0, %s106
    %s123 = sphi 0, %s107
  $region4: #{vector_quantizer_forward.1} parent=0 // loop_header_branch
    %12 = sbr.rel (%p10) target = $region8
  $region5: #{vector_quantizer_forward.1} parent=0 // loop_body
    %s14 = ssub.s32 %s9, 1
    %s15 = ssub.s32 %s9, 2
    %s22 = sadd.s32 1, %s17
    %p23 = scmp.ge.s32.totalorder %s22, 1
    %s24 = scalar_select %p23, 0, %s22
    %s25 = sadd.s32 1, %s16
    %s26 = scalar_select %p23, %s25, %s16
    %p27 = scmp.ge.s32.totalorder %s26, 2
    %s28 = scalar_select %p27, 0, %s26
    %s29 = ssub.s32 %s16, %s28
    %s30 = ssub.s32 %s17, %s24
    %s31 = sor.u32 %s29, %s30
    %p32 = scmp.eq.s32.totalorder %s31, 0
    %s34 = sadd.s32 %s33, 1
    %s35 = scalar_select %p32, %s33, %s34
    %p38 = pneg %p32
    %p39 = scmp.eq.s32.totalorder %s9, 1
    %p40 = por %p38, %p39
    %p41 = scmp.ne.s32.totalorder %s33, %s36
    %p42 = scmp.eq.s32.totalorder %s9, 0
    %p43 = por %p41, %p42
    %p44 = scmp.ne.s32.totalorder %s33, %s36
    %p45 = scmp.eq.s32.totalorder %s14, 1
    %p46 = por %p44, %p45
    %p47 = scmp.ne.s32.totalorder %s36, %s37
    %p48 = scmp.eq.s32.totalorder %s14, 0
    %p49 = por %p47, %p48
    %p50 = scmp.ne.s32.totalorder %s36, %s37
    %p51 = scmp.eq.s32.totalorder %s15, 1
    %p52 = por %p50, %p51
    %p54 = scmp.ne.s32.totalorder %s37, %s53
    %p55 = scmp.eq.s32.totalorder %s15, 0
    %p56 = por %p54, %p55
    %s58 = sadd.s32 %s57, 1
    %p61 = scmp.eq.s32.totalorder %s9, 1
    %p62 = scmp.ne.s32.totalorder %s57, %s59
    %p63 = scmp.eq.s32.totalorder %s9, 0
    %p64 = por %p62, %p63
    %p65 = scmp.ne.s32.totalorder %s57, %s59
    %p66 = scmp.eq.s32.totalorder %s14, 1
    %p67 = por %p65, %p66
    %p68 = scmp.ne.s32.totalorder %s59, %s60
    %p69 = scmp.eq.s32.totalorder %s14, 0
    %p70 = por %p68, %p69
    %p71 = scmp.ne.s32.totalorder %s59, %s60
    %p72 = scmp.eq.s32.totalorder %s15, 1
    %p73 = por %p71, %p72
    %p75 = scmp.ne.s32.totalorder %s60, %s74
    %p76 = scmp.eq.s32.totalorder %s15, 0
    %p77 = por %p75, %p76
    %s79 = sadd.s32 %s78, 1
    %p82 = scmp.eq.s32.totalorder %s9, 1
    %p83 = scmp.ne.s32.totalorder %s78, %s80
    %p84 = scmp.eq.s32.totalorder %s9, 0
    %p85 = por %p83, %p84
    %p86 = scmp.ne.s32.totalorder %s78, %s80
    %p87 = scmp.eq.s32.totalorder %s14, 1
    %p88 = por %p86, %p87
    %p89 = scmp.ne.s32.totalorder %s80, %s81
    %p90 = scmp.eq.s32.totalorder %s14, 0
    %p91 = por %p89, %p90
    %p92 = scmp.ne.s32.totalorder %s80, %s81
    %p93 = scmp.eq.s32.totalorder %s15, 1
    %p94 = por %p92, %p93
    %p96 = scmp.ne.s32.totalorder %s81, %s95
    %p97 = scmp.eq.s32.totalorder %s15, 0
    %p98 = por %p96, %p97
    %s99 = ssub.s32 %s16, %s28
    %s100 = ssub.s32 %s17, %s24
    %s101 = sor.u32 %s99, %s100
    %p102 = scmp.eq.s32.totalorder %s101, 0
    %s104 = sadd.s32 %s103, 1
    %s105 = scalar_select %p102, %s103, %s104
    %p108 = pneg %p102
    %p109 = scmp.eq.s32.totalorder %s9, 1
    %p110 = por %p108, %p109
    %p111 = scmp.ne.s32.totalorder %s103, %s106
    %p112 = scmp.eq.s32.totalorder %s9, 0
    %p113 = por %p111, %p112
    %p114 = scmp.ne.s32.totalorder %s103, %s106
    %p115 = scmp.eq.s32.totalorder %s14, 1
    %p116 = por %p114, %p115
    %p117 = scmp.ne.s32.totalorder %s106, %s107
    %p118 = scmp.eq.s32.totalorder %s14, 0
    %p119 = por %p117, %p118
    %p120 = scmp.ne.s32.totalorder %s106, %s107
    %p121 = scmp.eq.s32.totalorder %s15, 1
    %p122 = por %p120, %p121
    %p124 = scmp.ne.s32.totalorder %s107, %s123
    %p125 = scmp.eq.s32.totalorder %s15, 0
    %p126 = por %p124, %p125
    %p127 = scmp.le.s32.totalorder 1, %s9
    %p128 = scmp.lt.s32.totalorder %s9, 3
    %p129 = pnand %p127, %p128
    %p130 = pneg %p129
    // Predicated region
    $region9: #{vector_quantizer_forward.1} parent=5 // pred_check
      _
    $region10: #{vector_quantizer_forward.1} parent=5 // pred_check_branch
      %132 = sbr.rel (%p129) target = $region12
    $region11: #{vector_quantizer_forward.1} parent=5 // pred_region
      %s133 = ssub.s32 %s9, 1
      // Predicated region
      $region13: #{vector_quantizer_forward.1} parent=11 // pred_check
        %p134 = pneg %p70
      $region14: #{vector_quantizer_forward.1} parent=11 // pred_check_branch
        %136 = sbr.rel (%p134) target = $region16
      $region15: #{vector_quantizer_forward.1} parent=11 // pred_region
        _
      $region16: #{vector_quantizer_forward.1} parent=11 // pred_fallthru
        _
      // Predicated region
      $region17: #{vector_quantizer_forward.1} parent=11 // pred_check
        %p137 = pneg %p91
      $region18: #{vector_quantizer_forward.1} parent=11 // pred_check_branch
        %139 = sbr.rel (%p137) target = $region20
      $region19: #{vector_quantizer_forward.1} parent=11 // pred_region
        _
      $region20: #{vector_quantizer_forward.1} parent=11 // pred_fallthru
        _
    $region12: #{vector_quantizer_forward.1} parent=5 // pred_fallthru
      _
    %p140 = scmp.lt.s32.totalorder %s9, 2
    // Predicated region
    $region21: #{vector_quantizer_forward.1} parent=5 // pred_check
      %p141 = pneg %p140
    $region22: #{vector_quantizer_forward.1} parent=5 // pred_check_branch
      %143 = sbr.rel (%p141) target = $region24
    $region23: #{vector_quantizer_forward.1} parent=5 // pred_region
      // Predicated region
      $region25: #{vector_quantizer_forward.1} parent=23 // pred_check
        %p144 = pneg %p43
      $region26: #{vector_quantizer_forward.1} parent=23 // pred_check_branch
        %146 = sbr.rel (%p144) target = $region28
      $region27: #{vector_quantizer_forward.1} parent=23 // pred_region
        %p147 = scmp.lt.s32.totalorder %s16, 1
        %s148 = scalar_select %p147, %s16, 1
        %p149 = scmp.lt.s32.totalorder %s17, 0
        %s150 = scalar_select %p149, %s17, 0
        %s151 = sadd.s32 %s150, %s148
        %s152 = scalar_lea.vmem %s0, %s151
      $region28: #{vector_quantizer_forward.1} parent=23 // pred_fallthru
        _
    $region24: #{vector_quantizer_forward.1} parent=5 // pred_fallthru
      _
    %p153 = scmp.le.s32.totalorder 1, %s9
    %p154 = scmp.lt.s32.totalorder %s9, 3
    %p155 = pnand %p153, %p154
    %p156 = pneg %p155
    // Predicated region
    $region29: #{vector_quantizer_forward.1} parent=5 // pred_check
      _
    $region30: #{vector_quantizer_forward.1} parent=5 // pred_check_branch
      %158 = sbr.rel (%p155) target = $region32
    $region31: #{vector_quantizer_forward.1} parent=5 // pred_region
      %s159 = ssub.s32 %s9, 1
      %p160 = scmp.lt.s32.totalorder %s18, 1
      %s161 = scalar_select %p160, %s18, 1
      %p162 = scmp.lt.s32.totalorder %s19, 0
      %s163 = scalar_select %p162, %s19, 0
      %s164 = sadd.s32 %s163, %s161
      %s165 = scalar_lea.vmem %s0, %s164
      %p166 = pneg %p49
      %p167 = pneg %p46
      %p168 = pneg %p70
      %p169 = pneg %p67
      %p170 = pneg %p91
      %p171 = pneg %p88
      %p172 = pneg %p119
      %p173 = pneg %p116
      %p174 = scmp.lt.s32.totalorder %s18, 1
      %s175 = scalar_select %p174, %s18, 1
      %p176 = scmp.lt.s32.totalorder %s19, 0
      %s177 = scalar_select %p176, %s19, 0
      %s178 = smul.addr %s175, 32
      %s179 = sadd.s32 %s177, %s178
      %s180 = smul.addr %s179, 8
      %s181 = scalar_lea.vmem %s3, %s180
      %p182 = scmp.lt.s32.totalorder %s18, 1
      %s183 = scalar_select %p182, %s18, 1
      %p184 = scmp.lt.s32.totalorder %s19, 0
      %s185 = scalar_select %p184, %s19, 0
      %s186 = sadd.s32 %s185, %s183
      %s187 = scalar_lea.vmem %s0, %s186
      %p188 = scmp.lt.s32.totalorder %s18, 1
      %s189 = scalar_select %p188, %s18, 1
      %p190 = scmp.lt.s32.totalorder %s19, 0
      %s191 = scalar_select %p190, %s19, 0
      %s192 = smul.addr %s189, 32
      %s193 = sadd.s32 %s191, %s192
      %s194 = smul.addr %s193, 8
      %s195 = scalar_lea.vmem %s3, %s194
      %v197 = vld [vmem:[%s187] sm:$0x1]
      %v198 = vlaneseq
      %v199 = vshrl.u32 %v198, 7
      %v200 = vadd.s32 %v199, 8
      %v201 = vadd.s32 %v199, 16
      %v202 = vadd.s32 %v199, 24
      %v203 = vadd.s32 %v199, 32
      %v204 = vadd.s32 %v199, 40
      %v205 = vadd.s32 %v199, 48
      %v206 = vadd.s32 %v199, 56
      %v207 = vadd.s32 %v199, 64
      %v208 = vadd.s32 %v199, 72
      %v209 = vadd.s32 %v199, 80
      %v210 = vadd.s32 %v199, 88
      %v211 = vadd.s32 %v199, 96
      %v212 = vadd.s32 %v199, 104
      %v213 = vadd.s32 %v199, 112
      %v214 = vadd.s32 %v199, 120
      %v215 = vadd.s32 %v199, 128
      %v216 = vadd.s32 %v199, 136
      %v217 = vadd.s32 %v199, 144
      %v218 = vadd.s32 %v199, 152
      %v219 = vadd.s32 %v199, 160
      %v220 = vadd.s32 %v199, 168
      %v221 = vadd.s32 %v199, 176
      %v222 = vadd.s32 %v199, 184
      %v223 = vadd.s32 %v199, 192
      %v224 = vadd.s32 %v199, 200
      %v225 = vadd.s32 %v199, 208
      %v226 = vadd.s32 %v199, 216
      %v227 = vadd.s32 %v199, 224
      %v228 = vadd.s32 %v199, 232
      %v229 = vadd.s32 %v199, 240
      %v230 = vadd.s32 %v199, 248
      %v231 = vadd.s32 %v199, 256
      %v232 = vadd.s32 %v199, 264
      %v233 = vadd.s32 %v199, 272
      %v234 = vadd.s32 %v199, 280
      %v235 = vadd.s32 %v199, 288
      %v236 = vadd.s32 %v199, 296
      %v237 = vadd.s32 %v199, 304
      %v238 = vadd.s32 %v199, 312
      %v239 = vadd.s32 %v199, 320
      %v240 = vadd.s32 %v199, 328
      %v241 = vadd.s32 %v199, 336
      %v242 = vadd.s32 %v199, 344
      %v243 = vadd.s32 %v199, 352
      %v244 = vadd.s32 %v199, 360
      %v245 = vadd.s32 %v199, 368
      %v246 = vadd.s32 %v199, 376
      %v247 = vadd.s32 %v199, 384
      %v248 = vadd.s32 %v199, 392
      %v249 = vadd.s32 %v199, 400
      %v250 = vadd.s32 %v199, 408
      %v251 = vadd.s32 %v199, 416
      %v252 = vadd.s32 %v199, 424
      %v253 = vadd.s32 %v199, 432
      %v254 = vadd.s32 %v199, 440
      %v255 = vadd.s32 %v199, 448
      %v256 = vadd.s32 %v199, 456
      %v257 = vadd.s32 %v199, 464
      %v258 = vadd.s32 %v199, 472
      %v259 = vadd.s32 %v199, 480
      %v260 = vadd.s32 %v199, 488
      %v261 = vadd.s32 %v199, 496
      %v262 = vadd.s32 %v199, 504
      %v263 = vadd.s32 %v199, 512
      %v264 = vadd.s32 %v199, 520
      %v265 = vadd.s32 %v199, 528
      %v266 = vadd.s32 %v199, 536
      %v267 = vadd.s32 %v199, 544
      %v268 = vadd.s32 %v199, 552
      %v269 = vadd.s32 %v199, 560
      %v270 = vadd.s32 %v199, 568
      %v271 = vadd.s32 %v199, 576
      %v272 = vadd.s32 %v199, 584
      %v273 = vadd.s32 %v199, 592
      %v274 = vadd.s32 %v199, 600
      %v275 = vadd.s32 %v199, 608
      %v276 = vadd.s32 %v199, 616
      %v277 = vadd.s32 %v199, 624
      %v278 = vadd.s32 %v199, 632
      %v279 = vadd.s32 %v199, 640
      %v280 = vadd.s32 %v199, 648
      %v281 = vadd.s32 %v199, 656
      %v282 = vadd.s32 %v199, 664
      %v283 = vadd.s32 %v199, 672
      %v284 = vadd.s32 %v199, 680
      %v285 = vadd.s32 %v199, 688
      %v286 = vadd.s32 %v199, 696
      %v287 = vadd.s32 %v199, 704
      %v288 = vadd.s32 %v199, 712
      %v289 = vadd.s32 %v199, 720
      %v290 = vadd.s32 %v199, 728
      %v291 = vadd.s32 %v199, 736
      %v292 = vadd.s32 %v199, 744
      %v293 = vadd.s32 %v199, 752
      %v294 = vadd.s32 %v199, 760
      %v295 = vadd.s32 %v199, 768
      %v296 = vadd.s32 %v199, 776
      %v297 = vadd.s32 %v199, 784
      %v298 = vadd.s32 %v199, 792
      %v299 = vadd.s32 %v199, 800
      %v300 = vadd.s32 %v199, 808
      %v301 = vadd.s32 %v199, 816
      %v302 = vadd.s32 %v199, 824
      %v303 = vadd.s32 %v199, 832
      %v304 = vadd.s32 %v199, 840
      %v305 = vadd.s32 %v199, 848
      %v306 = vadd.s32 %v199, 856
      %v307 = vadd.s32 %v199, 864
      %v308 = vadd.s32 %v199, 872
      %v309 = vadd.s32 %v199, 880
      %v310 = vadd.s32 %v199, 888
      %v311 = vadd.s32 %v199, 896
      %v312 = vadd.s32 %v199, 904
      %v313 = vadd.s32 %v199, 912
      %v314 = vadd.s32 %v199, 920
      %v315 = vadd.s32 %v199, 928
      %v316 = vadd.s32 %v199, 936
      %v317 = vadd.s32 %v199, 944
      %v318 = vadd.s32 %v199, 952
      %v319 = vadd.s32 %v199, 960
      %v320 = vadd.s32 %v199, 968
      %v321 = vadd.s32 %v199, 976
      %v322 = vadd.s32 %v199, 984
      %v323 = vadd.s32 %v199, 992
      %v324 = vadd.s32 %v199, 1000
      %v325 = vadd.s32 %v199, 1008
      %v326 = vadd.s32 %v199, 1016
      %v327 = vlaneseq
      %v328 = vshrl.u32 %v327, 7
      %v329 = vsub.s32 0, %v328
      %v330 = vrot.slane %v197, %v329
      %vm331 = vcmp.eq.s32.totalorder %v199, %v330
      %vm332 = vcmp.eq.s32.totalorder %v200, %v330
      %vm333 = vcmp.eq.s32.totalorder %v201, %v330
      %vm334 = vcmp.eq.s32.totalorder %v202, %v330
      %vm335 = vcmp.eq.s32.totalorder %v203, %v330
      %vm336 = vcmp.eq.s32.totalorder %v204, %v330
      %vm337 = vcmp.eq.s32.totalorder %v205, %v330
      %vm338 = vcmp.eq.s32.totalorder %v206, %v330
      %vm339 = vcmp.eq.s32.totalorder %v207, %v330
      %vm340 = vcmp.eq.s32.totalorder %v208, %v330
      %vm341 = vcmp.eq.s32.totalorder %v209, %v330
      %vm342 = vcmp.eq.s32.totalorder %v210, %v330
      %vm343 = vcmp.eq.s32.totalorder %v211, %v330
      %vm344 = vcmp.eq.s32.totalorder %v212, %v330
      %vm345 = vcmp.eq.s32.totalorder %v213, %v330
      %vm346 = vcmp.eq.s32.totalorder %v214, %v330
      %vm347 = vcmp.eq.s32.totalorder %v215, %v330
      %vm348 = vcmp.eq.s32.totalorder %v216, %v330
      %vm349 = vcmp.eq.s32.totalorder %v217, %v330
      %vm350 = vcmp.eq.s32.totalorder %v218, %v330
      %vm351 = vcmp.eq.s32.totalorder %v219, %v330
      %vm352 = vcmp.eq.s32.totalorder %v220, %v330
      %vm353 = vcmp.eq.s32.totalorder %v221, %v330
      %vm354 = vcmp.eq.s32.totalorder %v222, %v330
      %vm355 = vcmp.eq.s32.totalorder %v223, %v330
      %vm356 = vcmp.eq.s32.totalorder %v224, %v330
      %vm357 = vcmp.eq.s32.totalorder %v225, %v330
      %vm358 = vcmp.eq.s32.totalorder %v226, %v330
      %vm359 = vcmp.eq.s32.totalorder %v227, %v330
      %vm360 = vcmp.eq.s32.totalorder %v228, %v330
      %vm361 = vcmp.eq.s32.totalorder %v229, %v330
      %vm362 = vcmp.eq.s32.totalorder %v230, %v330
      %vm363 = vcmp.eq.s32.totalorder %v231, %v330
      %vm364 = vcmp.eq.s32.totalorder %v232, %v330
      %vm365 = vcmp.eq.s32.totalorder %v233, %v330
      %vm366 = vcmp.eq.s32.totalorder %v234, %v330
      %vm367 = vcmp.eq.s32.totalorder %v235, %v330
      %vm368 = vcmp.eq.s32.totalorder %v236, %v330
      %vm369 = vcmp.eq.s32.totalorder %v237, %v330
      %vm370 = vcmp.eq.s32.totalorder %v238, %v330
      %vm371 = vcmp.eq.s32.totalorder %v239, %v330
      %vm372 = vcmp.eq.s32.totalorder %v240, %v330
      %vm373 = vcmp.eq.s32.totalorder %v241, %v330
      %vm374 = vcmp.eq.s32.totalorder %v242, %v330
      %vm375 = vcmp.eq.s32.totalorder %v243, %v330
      %vm376 = vcmp.eq.s32.totalorder %v244, %v330
      %vm377 = vcmp.eq.s32.totalorder %v245, %v330
      %vm378 = vcmp.eq.s32.totalorder %v246, %v330
      %vm379 = vcmp.eq.s32.totalorder %v247, %v330
      %vm380 = vcmp.eq.s32.totalorder %v248, %v330
      %vm381 = vcmp.eq.s32.totalorder %v249, %v330
      %vm382 = vcmp.eq.s32.totalorder %v250, %v330
      %vm383 = vcmp.eq.s32.totalorder %v251, %v330
      %vm384 = vcmp.eq.s32.totalorder %v252, %v330
      %vm385 = vcmp.eq.s32.totalorder %v253, %v330
      %vm386 = vcmp.eq.s32.totalorder %v254, %v330
      %vm387 = vcmp.eq.s32.totalorder %v255, %v330
      %vm388 = vcmp.eq.s32.totalorder %v256, %v330
      %vm389 = vcmp.eq.s32.totalorder %v257, %v330
      %vm390 = vcmp.eq.s32.totalorder %v258, %v330
      %vm391 = vcmp.eq.s32.totalorder %v259, %v330
      %vm392 = vcmp.eq.s32.totalorder %v260, %v330
      %vm393 = vcmp.eq.s32.totalorder %v261, %v330
      %vm394 = vcmp.eq.s32.totalorder %v262, %v330
      %vm395 = vcmp.eq.s32.totalorder %v263, %v330
      %vm396 = vcmp.eq.s32.totalorder %v264, %v330
      %vm397 = vcmp.eq.s32.totalorder %v265, %v330
      %vm398 = vcmp.eq.s32.totalorder %v266, %v330
      %vm399 = vcmp.eq.s32.totalorder %v267, %v330
      %vm400 = vcmp.eq.s32.totalorder %v268, %v330
      %vm401 = vcmp.eq.s32.totalorder %v269, %v330
      %vm402 = vcmp.eq.s32.totalorder %v270, %v330
      %vm403 = vcmp.eq.s32.totalorder %v271, %v330
      %vm404 = vcmp.eq.s32.totalorder %v272, %v330
      %vm405 = vcmp.eq.s32.totalorder %v273, %v330
      %vm406 = vcmp.eq.s32.totalorder %v274, %v330
      %vm407 = vcmp.eq.s32.totalorder %v275, %v330
      %vm408 = vcmp.eq.s32.totalorder %v276, %v330
      %vm409 = vcmp.eq.s32.totalorder %v277, %v330
      %vm410 = vcmp.eq.s32.totalorder %v278, %v330
      %vm411 = vcmp.eq.s32.totalorder %v279, %v330
      %vm412 = vcmp.eq.s32.totalorder %v280, %v330
      %vm413 = vcmp.eq.s32.totalorder %v281, %v330
      %vm414 = vcmp.eq.s32.totalorder %v282, %v330
      %vm415 = vcmp.eq.s32.totalorder %v283, %v330
      %vm416 = vcmp.eq.s32.totalorder %v284, %v330
      %vm417 = vcmp.eq.s32.totalorder %v285, %v330
      %vm418 = vcmp.eq.s32.totalorder %v286, %v330
      %vm419 = vcmp.eq.s32.totalorder %v287, %v330
      %vm420 = vcmp.eq.s32.totalorder %v288, %v330
      %vm421 = vcmp.eq.s32.totalorder %v289, %v330
      %vm422 = vcmp.eq.s32.totalorder %v290, %v330
      %vm423 = vcmp.eq.s32.totalorder %v291, %v330
      %vm424 = vcmp.eq.s32.totalorder %v292, %v330
      %vm425 = vcmp.eq.s32.totalorder %v293, %v330
      %vm426 = vcmp.eq.s32.totalorder %v294, %v330
      %vm427 = vcmp.eq.s32.totalorder %v295, %v330
      %vm428 = vcmp.eq.s32.totalorder %v296, %v330
      %vm429 = vcmp.eq.s32.totalorder %v297, %v330
      %vm430 = vcmp.eq.s32.totalorder %v298, %v330
      %vm431 = vcmp.eq.s32.totalorder %v299, %v330
      %vm432 = vcmp.eq.s32.totalorder %v300, %v330
      %vm433 = vcmp.eq.s32.totalorder %v301, %v330
      %vm434 = vcmp.eq.s32.totalorder %v302, %v330
      %vm435 = vcmp.eq.s32.totalorder %v303, %v330
      %vm436 = vcmp.eq.s32.totalorder %v304, %v330
      %vm437 = vcmp.eq.s32.totalorder %v305, %v330
      %vm438 = vcmp.eq.s32.totalorder %v306, %v330
      %vm439 = vcmp.eq.s32.totalorder %v307, %v330
      %vm440 = vcmp.eq.s32.totalorder %v308, %v330
      %vm441 = vcmp.eq.s32.totalorder %v309, %v330
      %vm442 = vcmp.eq.s32.totalorder %v310, %v330
      %vm443 = vcmp.eq.s32.totalorder %v311, %v330
      %vm444 = vcmp.eq.s32.totalorder %v312, %v330
      %vm445 = vcmp.eq.s32.totalorder %v313, %v330
      %vm446 = vcmp.eq.s32.totalorder %v314, %v330
      %vm447 = vcmp.eq.s32.totalorder %v315, %v330
      %vm448 = vcmp.eq.s32.totalorder %v316, %v330
      %vm449 = vcmp.eq.s32.totalorder %v317, %v330
      %vm450 = vcmp.eq.s32.totalorder %v318, %v330
      %vm451 = vcmp.eq.s32.totalorder %v319, %v330
      %vm452 = vcmp.eq.s32.totalorder %v320, %v330
      %vm453 = vcmp.eq.s32.totalorder %v321, %v330
      %vm454 = vcmp.eq.s32.totalorder %v322, %v330
      %vm455 = vcmp.eq.s32.totalorder %v323, %v330
      %vm456 = vcmp.eq.s32.totalorder %v324, %v330
      %vm457 = vcmp.eq.s32.totalorder %v325, %v330
      %vm458 = vcmp.eq.s32.totalorder %v326, %v330
      %v459 = vsel %vm331, 1, 0
      %v460 = vsel %vm332, 1, 0
      %v461 = vsel %vm333, 1, 0
      %v462 = vsel %vm334, 1, 0
      %v463 = vsel %vm335, 1, 0
      %v464 = vsel %vm336, 1, 0
      %v465 = vsel %vm337, 1, 0
      %v466 = vsel %vm338, 1, 0
      %v467 = vsel %vm339, 1, 0
      %v468 = vsel %vm340, 1, 0
      %v469 = vsel %vm341, 1, 0
      %v470 = vsel %vm342, 1, 0
      %v471 = vsel %vm343, 1, 0
      %v472 = vsel %vm344, 1, 0
      %v473 = vsel %vm345, 1, 0
      %v474 = vsel %vm346, 1, 0
      %v475 = vsel %vm347, 1, 0
      %v476 = vsel %vm348, 1, 0
      %v477 = vsel %vm349, 1, 0
      %v478 = vsel %vm350, 1, 0
      %v479 = vsel %vm351, 1, 0
      %v480 = vsel %vm352, 1, 0
      %v481 = vsel %vm353, 1, 0
      %v482 = vsel %vm354, 1, 0
      %v483 = vsel %vm355, 1, 0
      %v484 = vsel %vm356, 1, 0
      %v485 = vsel %vm357, 1, 0
      %v486 = vsel %vm358, 1, 0
      %v487 = vsel %vm359, 1, 0
      %v488 = vsel %vm360, 1, 0
      %v489 = vsel %vm361, 1, 0
      %v490 = vsel %vm362, 1, 0
      %v491 = vsel %vm363, 1, 0
      %v492 = vsel %vm364, 1, 0
      %v493 = vsel %vm365, 1, 0
      %v494 = vsel %vm366, 1, 0
      %v495 = vsel %vm367, 1, 0
      %v496 = vsel %vm368, 1, 0
      %v497 = vsel %vm369, 1, 0
      %v498 = vsel %vm370, 1, 0
      %v499 = vsel %vm371, 1, 0
      %v500 = vsel %vm372, 1, 0
      %v501 = vsel %vm373, 1, 0
      %v502 = vsel %vm374, 1, 0
      %v503 = vsel %vm375, 1, 0
      %v504 = vsel %vm376, 1, 0
      %v505 = vsel %vm377, 1, 0
      %v506 = vsel %vm378, 1, 0
      %v507 = vsel %vm379, 1, 0
      %v508 = vsel %vm380, 1, 0
      %v509 = vsel %vm381, 1, 0
      %v510 = vsel %vm382, 1, 0
      %v511 = vsel %vm383, 1, 0
      %v512 = vsel %vm384, 1, 0
      %v513 = vsel %vm385, 1, 0
      %v514 = vsel %vm386, 1, 0
      %v515 = vsel %vm387, 1, 0
      %v516 = vsel %vm388, 1, 0
      %v517 = vsel %vm389, 1, 0
      %v518 = vsel %vm390, 1, 0
      %v519 = vsel %vm391, 1, 0
      %v520 = vsel %vm392, 1, 0
      %v521 = vsel %vm393, 1, 0
      %v522 = vsel %vm394, 1, 0
      %v523 = vsel %vm395, 1, 0
      %v524 = vsel %vm396, 1, 0
      %v525 = vsel %vm397, 1, 0
      %v526 = vsel %vm398, 1, 0
      %v527 = vsel %vm399, 1, 0
      %v528 = vsel %vm400, 1, 0
      %v529 = vsel %vm401, 1, 0
      %v530 = vsel %vm402, 1, 0
      %v531 = vsel %vm403, 1, 0
      %v532 = vsel %vm404, 1, 0
      %v533 = vsel %vm405, 1, 0
      %v534 = vsel %vm406, 1, 0
      %v535 = vsel %vm407, 1, 0
      %v536 = vsel %vm408, 1, 0
      %v537 = vsel %vm409, 1, 0
      %v538 = vsel %vm410, 1, 0
      %v539 = vsel %vm411, 1, 0
      %v540 = vsel %vm412, 1, 0
      %v541 = vsel %vm413, 1, 0
      %v542 = vsel %vm414, 1, 0
      %v543 = vsel %vm415, 1, 0
      %v544 = vsel %vm416, 1, 0
      %v545 = vsel %vm417, 1, 0
      %v546 = vsel %vm418, 1, 0
      %v547 = vsel %vm419, 1, 0
      %v548 = vsel %vm420, 1, 0
      %v549 = vsel %vm421, 1, 0
      %v550 = vsel %vm422, 1, 0
      %v551 = vsel %vm423, 1, 0
      %v552 = vsel %vm424, 1, 0
      %v553 = vsel %vm425, 1, 0
      %v554 = vsel %vm426, 1, 0
      %v555 = vsel %vm427, 1, 0
      %v556 = vsel %vm428, 1, 0
      %v557 = vsel %vm429, 1, 0
      %v558 = vsel %vm430, 1, 0
      %v559 = vsel %vm431, 1, 0
      %v560 = vsel %vm432, 1, 0
      %v561 = vsel %vm433, 1, 0
      %v562 = vsel %vm434, 1, 0
      %v563 = vsel %vm435, 1, 0
      %v564 = vsel %vm436, 1, 0
      %v565 = vsel %vm437, 1, 0
      %v566 = vsel %vm438, 1, 0
      %v567 = vsel %vm439, 1, 0
      %v568 = vsel %vm440, 1, 0
      %v569 = vsel %vm441, 1, 0
      %v570 = vsel %vm442, 1, 0
      %v571 = vsel %vm443, 1, 0
      %v572 = vsel %vm444, 1, 0
      %v573 = vsel %vm445, 1, 0
      %v574 = vsel %vm446, 1, 0
      %v575 = vsel %vm447, 1, 0
      %v576 = vsel %vm448, 1, 0
      %v577 = vsel %vm449, 1, 0
      %v578 = vsel %vm450, 1, 0
      %v579 = vsel %vm451, 1, 0
      %v580 = vsel %vm452, 1, 0
      %v581 = vsel %vm453, 1, 0
      %v582 = vsel %vm454, 1, 0
      %v583 = vsel %vm455, 1, 0
      %v584 = vsel %vm456, 1, 0
      %v585 = vsel %vm457, 1, 0
      %v586 = vsel %vm458, 1, 0
      %v587 = vcvt.s32.f32 %v459
      %v588 = vcvt.s32.f32 %v460
      %v589 = vcvt.s32.f32 %v461
      %v590 = vcvt.s32.f32 %v462
      %v591 = vcvt.s32.f32 %v463
      %v592 = vcvt.s32.f32 %v464
      %v593 = vcvt.s32.f32 %v465
      %v594 = vcvt.s32.f32 %v466
      %v595 = vcvt.s32.f32 %v467
      %v596 = vcvt.s32.f32 %v468
      %v597 = vcvt.s32.f32 %v469
      %v598 = vcvt.s32.f32 %v470
      %v599 = vcvt.s32.f32 %v471
      %v600 = vcvt.s32.f32 %v472
      %v601 = vcvt.s32.f32 %v473
      %v602 = vcvt.s32.f32 %v474
      %v603 = vcvt.s32.f32 %v475
      %v604 = vcvt.s32.f32 %v476
      %v605 = vcvt.s32.f32 %v477
      %v606 = vcvt.s32.f32 %v478
      %v607 = vcvt.s32.f32 %v479
      %v608 = vcvt.s32.f32 %v480
      %v609 = vcvt.s32.f32 %v481
      %v610 = vcvt.s32.f32 %v482
      %v611 = vcvt.s32.f32 %v483
      %v612 = vcvt.s32.f32 %v484
      %v613 = vcvt.s32.f32 %v485
      %v614 = vcvt.s32.f32 %v486
      %v615 = vcvt.s32.f32 %v487
      %v616 = vcvt.s32.f32 %v488
      %v617 = vcvt.s32.f32 %v489
      %v618 = vcvt.s32.f32 %v490
      %v619 = vcvt.s32.f32 %v491
      %v620 = vcvt.s32.f32 %v492
      %v621 = vcvt.s32.f32 %v493
      %v622 = vcvt.s32.f32 %v494
      %v623 = vcvt.s32.f32 %v495
      %v624 = vcvt.s32.f32 %v496
      %v625 = vcvt.s32.f32 %v497
      %v626 = vcvt.s32.f32 %v498
      %v627 = vcvt.s32.f32 %v499
      %v628 = vcvt.s32.f32 %v500
      %v629 = vcvt.s32.f32 %v501
      %v630 = vcvt.s32.f32 %v502
      %v631 = vcvt.s32.f32 %v503
      %v632 = vcvt.s32.f32 %v504
      %v633 = vcvt.s32.f32 %v505
      %v634 = vcvt.s32.f32 %v506
      %v635 = vcvt.s32.f32 %v507
      %v636 = vcvt.s32.f32 %v508
      %v637 = vcvt.s32.f32 %v509
      %v638 = vcvt.s32.f32 %v510
      %v639 = vcvt.s32.f32 %v511
      %v640 = vcvt.s32.f32 %v512
      %v641 = vcvt.s32.f32 %v513
      %v642 = vcvt.s32.f32 %v514
      %v643 = vcvt.s32.f32 %v515
      %v644 = vcvt.s32.f32 %v516
      %v645 = vcvt.s32.f32 %v517
      %v646 = vcvt.s32.f32 %v518
      %v647 = vcvt.s32.f32 %v519
      %v648 = vcvt.s32.f32 %v520
      %v649 = vcvt.s32.f32 %v521
      %v650 = vcvt.s32.f32 %v522
      %v651 = vcvt.s32.f32 %v523
      %v652 = vcvt.s32.f32 %v524
      %v653 = vcvt.s32.f32 %v525
      %v654 = vcvt.s32.f32 %v526
      %v655 = vcvt.s32.f32 %v527
      %v656 = vcvt.s32.f32 %v528
      %v657 = vcvt.s32.f32 %v529
      %v658 = vcvt.s32.f32 %v530
      %v659 = vcvt.s32.f32 %v531
      %v660 = vcvt.s32.f32 %v532
      %v661 = vcvt.s32.f32 %v533
      %v662 = vcvt.s32.f32 %v534
      %v663 = vcvt.s32.f32 %v535
      %v664 = vcvt.s32.f32 %v536
      %v665 = vcvt.s32.f32 %v537
      %v666 = vcvt.s32.f32 %v538
      %v667 = vcvt.s32.f32 %v539
      %v668 = vcvt.s32.f32 %v540
      %v669 = vcvt.s32.f32 %v541
      %v670 = vcvt.s32.f32 %v542
      %v671 = vcvt.s32.f32 %v543
      %v672 = vcvt.s32.f32 %v544
      %v673 = vcvt.s32.f32 %v545
      %v674 = vcvt.s32.f32 %v546
      %v675 = vcvt.s32.f32 %v547
      %v676 = vcvt.s32.f32 %v548
      %v677 = vcvt.s32.f32 %v549
      %v678 = vcvt.s32.f32 %v550
      %v679 = vcvt.s32.f32 %v551
      %v680 = vcvt.s32.f32 %v552
      %v681 = vcvt.s32.f32 %v553
      %v682 = vcvt.s32.f32 %v554
      %v683 = vcvt.s32.f32 %v555
      %v684 = vcvt.s32.f32 %v556
      %v685 = vcvt.s32.f32 %v557
      %v686 = vcvt.s32.f32 %v558
      %v687 = vcvt.s32.f32 %v559
      %v688 = vcvt.s32.f32 %v560
      %v689 = vcvt.s32.f32 %v561
      %v690 = vcvt.s32.f32 %v562
      %v691 = vcvt.s32.f32 %v563
      %v692 = vcvt.s32.f32 %v564
      %v693 = vcvt.s32.f32 %v565
      %v694 = vcvt.s32.f32 %v566
      %v695 = vcvt.s32.f32 %v567
      %v696 = vcvt.s32.f32 %v568
      %v697 = vcvt.s32.f32 %v569
      %v698 = vcvt.s32.f32 %v570
      %v699 = vcvt.s32.f32 %v571
      %v700 = vcvt.s32.f32 %v572
      %v701 = vcvt.s32.f32 %v573
      %v702 = vcvt.s32.f32 %v574
      %v703 = vcvt.s32.f32 %v575
      %v704 = vcvt.s32.f32 %v576
      %v705 = vcvt.s32.f32 %v577
      %v706 = vcvt.s32.f32 %v578
      %v707 = vcvt.s32.f32 %v579
      %v708 = vcvt.s32.f32 %v580
      %v709 = vcvt.s32.f32 %v581
      %v710 = vcvt.s32.f32 %v582
      %v711 = vcvt.s32.f32 %v583
      %v712 = vcvt.s32.f32 %v584
      %v713 = vcvt.s32.f32 %v585
      %v714 = vcvt.s32.f32 %v586
      %v715 = vpack.c.bf16 %v588, %v587
      %v716 = vpack.c.bf16 %v590, %v589
      %v717 = vpack.c.bf16 %v592, %v591
      %v718 = vpack.c.bf16 %v594, %v593
      %v719 = vpack.c.bf16 %v596, %v595
      %v720 = vpack.c.bf16 %v598, %v597
      %v721 = vpack.c.bf16 %v600, %v599
      %v722 = vpack.c.bf16 %v602, %v601
      %v723 = vpack.c.bf16 %v604, %v603
      %v724 = vpack.c.bf16 %v606, %v605
      %v725 = vpack.c.bf16 %v608, %v607
      %v726 = vpack.c.bf16 %v610, %v609
      %v727 = vpack.c.bf16 %v612, %v611
      %v728 = vpack.c.bf16 %v614, %v613
      %v729 = vpack.c.bf16 %v616, %v615
      %v730 = vpack.c.bf16 %v618, %v617
      %v731 = vpack.c.bf16 %v620, %v619
      %v732 = vpack.c.bf16 %v622, %v621
      %v733 = vpack.c.bf16 %v624, %v623
      %v734 = vpack.c.bf16 %v626, %v625
      %v735 = vpack.c.bf16 %v628, %v627
      %v736 = vpack.c.bf16 %v630, %v629
      %v737 = vpack.c.bf16 %v632, %v631
      %v738 = vpack.c.bf16 %v634, %v633
      %v739 = vpack.c.bf16 %v636, %v635
      %v740 = vpack.c.bf16 %v638, %v637
      %v741 = vpack.c.bf16 %v640, %v639
      %v742 = vpack.c.bf16 %v642, %v641
      %v743 = vpack.c.bf16 %v644, %v643
      %v744 = vpack.c.bf16 %v646, %v645
      %v745 = vpack.c.bf16 %v648, %v647
      %v746 = vpack.c.bf16 %v650, %v649
      %v747 = vpack.c.bf16 %v652, %v651
      %v748 = vpack.c.bf16 %v654, %v653
      %v749 = vpack.c.bf16 %v656, %v655
      %v750 = vpack.c.bf16 %v658, %v657
      %v751 = vpack.c.bf16 %v660, %v659
      %v752 = vpack.c.bf16 %v662, %v661
      %v753 = vpack.c.bf16 %v664, %v663
      %v754 = vpack.c.bf16 %v666, %v665
      %v755 = vpack.c.bf16 %v668, %v667
      %v756 = vpack.c.bf16 %v670, %v669
      %v757 = vpack.c.bf16 %v672, %v671
      %v758 = vpack.c.bf16 %v674, %v673
      %v759 = vpack.c.bf16 %v676, %v675
      %v760 = vpack.c.bf16 %v678, %v677
      %v761 = vpack.c.bf16 %v680, %v679
      %v762 = vpack.c.bf16 %v682, %v681
      %v763 = vpack.c.bf16 %v684, %v683
      %v764 = vpack.c.bf16 %v686, %v685
      %v765 = vpack.c.bf16 %v688, %v687
      %v766 = vpack.c.bf16 %v690, %v689
      %v767 = vpack.c.bf16 %v692, %v691
      %v768 = vpack.c.bf16 %v694, %v693
      %v769 = vpack.c.bf16 %v696, %v695
      %v770 = vpack.c.bf16 %v698, %v697
      %v771 = vpack.c.bf16 %v700, %v699
      %v772 = vpack.c.bf16 %v702, %v701
      %v773 = vpack.c.bf16 %v704, %v703
      %v774 = vpack.c.bf16 %v706, %v705
      %v775 = vpack.c.bf16 %v708, %v707
      %v776 = vpack.c.bf16 %v710, %v709
      %v777 = vpack.c.bf16 %v712, %v711
      %v778 = vpack.c.bf16 %v714, %v713
      %v779 = vld [vmem:[%s1] sm:$0xff]
      %v780 = vld [vmem:[%s1 + $0x8] sm:$0xff]
      %v781 = vld [vmem:[%s1 + $0x10] sm:$0xff]
      %v782 = vld [vmem:[%s1 + $0x18] sm:$0xff]
      %v783 = vld [vmem:[%s1 + $0x20] sm:$0xff]
      %v784 = vld [vmem:[%s1 + $0x28] sm:$0xff]
      %v785 = vld [vmem:[%s1 + $0x30] sm:$0xff]
      %v786 = vld [vmem:[%s1 + $0x38] sm:$0xff]
      %v787 = vld [vmem:[%s1 + $0x40] sm:$0xff]
      %v788 = vld [vmem:[%s1 + $0x48] sm:$0xff]
      %v789 = vld [vmem:[%s1 + $0x50] sm:$0xff]
      %v790 = vld [vmem:[%s1 + $0x58] sm:$0xff]
      %v791 = vld [vmem:[%s1 + $0x60] sm:$0xff]
      %v792 = vld [vmem:[%s1 + $0x68] sm:$0xff]
      %v793 = vld [vmem:[%s1 + $0x70] sm:$0xff]
      %v794 = vld [vmem:[%s1 + $0x78] sm:$0xff]
      %v795 = vld [vmem:[%s1 + $0x80] sm:$0xff]
      %v796 = vld [vmem:[%s1 + $0x88] sm:$0xff]
      %v797 = vld [vmem:[%s1 + $0x90] sm:$0xff]
      %v798 = vld [vmem:[%s1 + $0x98] sm:$0xff]
      %v799 = vld [vmem:[%s1 + $0xa0] sm:$0xff]
      %v800 = vld [vmem:[%s1 + $0xa8] sm:$0xff]
      %v801 = vld [vmem:[%s1 + $0xb0] sm:$0xff]
      %v802 = vld [vmem:[%s1 + $0xb8] sm:$0xff]
      %v803 = vld [vmem:[%s1 + $0xc0] sm:$0xff]
      %v804 = vld [vmem:[%s1 + $0xc8] sm:$0xff]
      %v805 = vld [vmem:[%s1 + $0xd0] sm:$0xff]
      %v806 = vld [vmem:[%s1 + $0xd8] sm:$0xff]
      %v807 = vld [vmem:[%s1 + $0xe0] sm:$0xff]
      %v808 = vld [vmem:[%s1 + $0xe8] sm:$0xff]
      %v809 = vld [vmem:[%s1 + $0xf0] sm:$0xff]
      %v810 = vld [vmem:[%s1 + $0xf8] sm:$0xff]
      %v811 = vld [vmem:[%s1 + $0x100] sm:$0xff]
      %v812 = vld [vmem:[%s1 + $0x108] sm:$0xff]
      %v813 = vld [vmem:[%s1 + $0x110] sm:$0xff]
      %v814 = vld [vmem:[%s1 + $0x118] sm:$0xff]
      %v815 = vld [vmem:[%s1 + $0x120] sm:$0xff]
      %v816 = vld [vmem:[%s1 + $0x128] sm:$0xff]
      %v817 = vld [vmem:[%s1 + $0x130] sm:$0xff]
      %v818 = vld [vmem:[%s1 + $0x138] sm:$0xff]
      %v819 = vld [vmem:[%s1 + $0x140] sm:$0xff]
      %v820 = vld [vmem:[%s1 + $0x148] sm:$0xff]
      %v821 = vld [vmem:[%s1 + $0x150] sm:$0xff]
      %v822 = vld [vmem:[%s1 + $0x158] sm:$0xff]
      %v823 = vld [vmem:[%s1 + $0x160] sm:$0xff]
      %v824 = vld [vmem:[%s1 + $0x168] sm:$0xff]
      %v825 = vld [vmem:[%s1 + $0x170] sm:$0xff]
      %v826 = vld [vmem:[%s1 + $0x178] sm:$0xff]
      %v827 = vld [vmem:[%s1 + $0x180] sm:$0xff]
      %v828 = vld [vmem:[%s1 + $0x188] sm:$0xff]
      %v829 = vld [vmem:[%s1 + $0x190] sm:$0xff]
      %v830 = vld [vmem:[%s1 + $0x198] sm:$0xff]
      %v831 = vld [vmem:[%s1 + $0x1a0] sm:$0xff]
      %v832 = vld [vmem:[%s1 + $0x1a8] sm:$0xff]
      %v833 = vld [vmem:[%s1 + $0x1b0] sm:$0xff]
      %v834 = vld [vmem:[%s1 + $0x1b8] sm:$0xff]
      %v835 = vld [vmem:[%s1 + $0x1c0] sm:$0xff]
      %v836 = vld [vmem:[%s1 + $0x1c8] sm:$0xff]
      %v837 = vld [vmem:[%s1 + $0x1d0] sm:$0xff]
      %v838 = vld [vmem:[%s1 + $0x1d8] sm:$0xff]
      %v839 = vld [vmem:[%s1 + $0x1e0] sm:$0xff]
      %v840 = vld [vmem:[%s1 + $0x1e8] sm:$0xff]
      %v841 = vld [vmem:[%s1 + $0x1f0] sm:$0xff]
      %v842 = vld [vmem:[%s1 + $0x1f8] sm:$0xff]
      %v843 = vld [vmem:[%s1 + $0x200] sm:$0xff]
      %v844 = vld [vmem:[%s1 + $0x208] sm:$0xff]
      %v845 = vld [vmem:[%s1 + $0x210] sm:$0xff]
      %v846 = vld [vmem:[%s1 + $0x218] sm:$0xff]
      %v847 = vld [vmem:[%s1 + $0x220] sm:$0xff]
      %v848 = vld [vmem:[%s1 + $0x228] sm:$0xff]
      %v849 = vld [vmem:[%s1 + $0x230] sm:$0xff]
      %v850 = vld [vmem:[%s1 + $0x238] sm:$0xff]
      %v851 = vld [vmem:[%s1 + $0x240] sm:$0xff]
      %v852 = vld [vmem:[%s1 + $0x248] sm:$0xff]
      %v853 = vld [vmem:[%s1 + $0x250] sm:$0xff]
      %v854 = vld [vmem:[%s1 + $0x258] sm:$0xff]
      %v855 = vld [vmem:[%s1 + $0x260] sm:$0xff]
      %v856 = vld [vmem:[%s1 + $0x268] sm:$0xff]
      %v857 = vld [vmem:[%s1 + $0x270] sm:$0xff]
      %v858 = vld [vmem:[%s1 + $0x278] sm:$0xff]
      %v859 = vld [vmem:[%s1 + $0x280] sm:$0xff]
      %v860 = vld [vmem:[%s1 + $0x288] sm:$0xff]
      %v861 = vld [vmem:[%s1 + $0x290] sm:$0xff]
      %v862 = vld [vmem:[%s1 + $0x298] sm:$0xff]
      %v863 = vld [vmem:[%s1 + $0x2a0] sm:$0xff]
      %v864 = vld [vmem:[%s1 + $0x2a8] sm:$0xff]
      %v865 = vld [vmem:[%s1 + $0x2b0] sm:$0xff]
      %v866 = vld [vmem:[%s1 + $0x2b8] sm:$0xff]
      %v867 = vld [vmem:[%s1 + $0x2c0] sm:$0xff]
      %v868 = vld [vmem:[%s1 + $0x2c8] sm:$0xff]
      %v869 = vld [vmem:[%s1 + $0x2d0] sm:$0xff]
      %v870 = vld [vmem:[%s1 + $0x2d8] sm:$0xff]
      %v871 = vld [vmem:[%s1 + $0x2e0] sm:$0xff]
      %v872 = vld [vmem:[%s1 + $0x2e8] sm:$0xff]
      %v873 = vld [vmem:[%s1 + $0x2f0] sm:$0xff]
      %v874 = vld [vmem:[%s1 + $0x2f8] sm:$0xff]
      %v875 = vld [vmem:[%s1 + $0x300] sm:$0xff]
      %v876 = vld [vmem:[%s1 + $0x308] sm:$0xff]
      %v877 = vld [vmem:[%s1 + $0x310] sm:$0xff]
      %v878 = vld [vmem:[%s1 + $0x318] sm:$0xff]
      %v879 = vld [vmem:[%s1 + $0x320] sm:$0xff]
      %v880 = vld [vmem:[%s1 + $0x328] sm:$0xff]
      %v881 = vld [vmem:[%s1 + $0x330] sm:$0xff]
      %v882 = vld [vmem:[%s1 + $0x338] sm:$0xff]
      %v883 = vld [vmem:[%s1 + $0x340] sm:$0xff]
      %v884 = vld [vmem:[%s1 + $0x348] sm:$0xff]
      %v885 = vld [vmem:[%s1 + $0x350] sm:$0xff]
      %v886 = vld [vmem:[%s1 + $0x358] sm:$0xff]
      %v887 = vld [vmem:[%s1 + $0x360] sm:$0xff]
      %v888 = vld [vmem:[%s1 + $0x368] sm:$0xff]
      %v889 = vld [vmem:[%s1 + $0x370] sm:$0xff]
      %v890 = vld [vmem:[%s1 + $0x378] sm:$0xff]
      %v891 = vld [vmem:[%s1 + $0x380] sm:$0xff]
      %v892 = vld [vmem:[%s1 + $0x388] sm:$0xff]
      %v893 = vld [vmem:[%s1 + $0x390] sm:$0xff]
      %v894 = vld [vmem:[%s1 + $0x398] sm:$0xff]
      %v895 = vld [vmem:[%s1 + $0x3a0] sm:$0xff]
      %v896 = vld [vmem:[%s1 + $0x3a8] sm:$0xff]
      %v897 = vld [vmem:[%s1 + $0x3b0] sm:$0xff]
      %v898 = vld [vmem:[%s1 + $0x3b8] sm:$0xff]
      %v899 = vld [vmem:[%s1 + $0x3c0] sm:$0xff]
      %v900 = vld [vmem:[%s1 + $0x3c8] sm:$0xff]
      %v901 = vld [vmem:[%s1 + $0x3d0] sm:$0xff]
      %v902 = vld [vmem:[%s1 + $0x3d8] sm:$0xff]
      %v903 = vld [vmem:[%s1 + $0x3e0] sm:$0xff]
      %v904 = vld [vmem:[%s1 + $0x3e8] sm:$0xff]
      %v905 = vld [vmem:[%s1 + $0x3f0] sm:$0xff]
      %v906 = vld [vmem:[%s1 + $0x3f8] sm:$0xff]
      %v907 = vld [vmem:[%s2] sm:$0xff]
      %v908 = vld [vmem:[%s2 + $0x8] sm:$0xff]
      %v909 = vld [vmem:[%s2 + $0x10] sm:$0xff]
      %v910 = vld [vmem:[%s2 + $0x18] sm:$0xff]
      %v911 = vld [vmem:[%s2 + $0x20] sm:$0xff]
      %v912 = vld [vmem:[%s2 + $0x28] sm:$0xff]
      %v913 = vld [vmem:[%s2 + $0x30] sm:$0xff]
      %v914 = vld [vmem:[%s2 + $0x38] sm:$0xff]
      %v915 = vld [vmem:[%s2 + $0x40] sm:$0xff]
      %v916 = vld [vmem:[%s2 + $0x48] sm:$0xff]
      %v917 = vld [vmem:[%s2 + $0x50] sm:$0xff]
      %v918 = vld [vmem:[%s2 + $0x58] sm:$0xff]
      %v919 = vld [vmem:[%s2 + $0x60] sm:$0xff]
      %v920 = vld [vmem:[%s2 + $0x68] sm:$0xff]
      %v921 = vld [vmem:[%s2 + $0x70] sm:$0xff]
      %v922 = vld [vmem:[%s2 + $0x78] sm:$0xff]
      %v923 = vld [vmem:[%s2 + $0x80] sm:$0xff]
      %v924 = vld [vmem:[%s2 + $0x88] sm:$0xff]
      %v925 = vld [vmem:[%s2 + $0x90] sm:$0xff]
      %v926 = vld [vmem:[%s2 + $0x98] sm:$0xff]
      %v927 = vld [vmem:[%s2 + $0xa0] sm:$0xff]
      %v928 = vld [vmem:[%s2 + $0xa8] sm:$0xff]
      %v929 = vld [vmem:[%s2 + $0xb0] sm:$0xff]
      %v930 = vld [vmem:[%s2 + $0xb8] sm:$0xff]
      %v931 = vld [vmem:[%s2 + $0xc0] sm:$0xff]
      %v932 = vld [vmem:[%s2 + $0xc8] sm:$0xff]
      %v933 = vld [vmem:[%s2 + $0xd0] sm:$0xff]
      %v934 = vld [vmem:[%s2 + $0xd8] sm:$0xff]
      %v935 = vld [vmem:[%s2 + $0xe0] sm:$0xff]
      %v936 = vld [vmem:[%s2 + $0xe8] sm:$0xff]
      %v937 = vld [vmem:[%s2 + $0xf0] sm:$0xff]
      %v938 = vld [vmem:[%s2 + $0xf8] sm:$0xff]
      %v939 = vld [vmem:[%s2 + $0x100] sm:$0xff]
      %v940 = vld [vmem:[%s2 + $0x108] sm:$0xff]
      %v941 = vld [vmem:[%s2 + $0x110] sm:$0xff]
      %v942 = vld [vmem:[%s2 + $0x118] sm:$0xff]
      %v943 = vld [vmem:[%s2 + $0x120] sm:$0xff]
      %v944 = vld [vmem:[%s2 + $0x128] sm:$0xff]
      %v945 = vld [vmem:[%s2 + $0x130] sm:$0xff]
      %v946 = vld [vmem:[%s2 + $0x138] sm:$0xff]
      %v947 = vld [vmem:[%s2 + $0x140] sm:$0xff]
      %v948 = vld [vmem:[%s2 + $0x148] sm:$0xff]
      %v949 = vld [vmem:[%s2 + $0x150] sm:$0xff]
      %v950 = vld [vmem:[%s2 + $0x158] sm:$0xff]
      %v951 = vld [vmem:[%s2 + $0x160] sm:$0xff]
      %v952 = vld [vmem:[%s2 + $0x168] sm:$0xff]
      %v953 = vld [vmem:[%s2 + $0x170] sm:$0xff]
      %v954 = vld [vmem:[%s2 + $0x178] sm:$0xff]
      %v955 = vld [vmem:[%s2 + $0x180] sm:$0xff]
      %v956 = vld [vmem:[%s2 + $0x188] sm:$0xff]
      %v957 = vld [vmem:[%s2 + $0x190] sm:$0xff]
      %v958 = vld [vmem:[%s2 + $0x198] sm:$0xff]
      %v959 = vld [vmem:[%s2 + $0x1a0] sm:$0xff]
      %v960 = vld [vmem:[%s2 + $0x1a8] sm:$0xff]
      %v961 = vld [vmem:[%s2 + $0x1b0] sm:$0xff]
      %v962 = vld [vmem:[%s2 + $0x1b8] sm:$0xff]
      %v963 = vld [vmem:[%s2 + $0x1c0] sm:$0xff]
      %v964 = vld [vmem:[%s2 + $0x1c8] sm:$0xff]
      %v965 = vld [vmem:[%s2 + $0x1d0] sm:$0xff]
      %v966 = vld [vmem:[%s2 + $0x1d8] sm:$0xff]
      %v967 = vld [vmem:[%s2 + $0x1e0] sm:$0xff]
      %v968 = vld [vmem:[%s2 + $0x1e8] sm:$0xff]
      %v969 = vld [vmem:[%s2 + $0x1f0] sm:$0xff]
      %v970 = vld [vmem:[%s2 + $0x1f8] sm:$0xff]
      %v971 = vld [vmem:[%s2 + $0x200] sm:$0xff]
      %v972 = vld [vmem:[%s2 + $0x208] sm:$0xff]
      %v973 = vld [vmem:[%s2 + $0x210] sm:$0xff]
      %v974 = vld [vmem:[%s2 + $0x218] sm:$0xff]
      %v975 = vld [vmem:[%s2 + $0x220] sm:$0xff]
      %v976 = vld [vmem:[%s2 + $0x228] sm:$0xff]
      %v977 = vld [vmem:[%s2 + $0x230] sm:$0xff]
      %v978 = vld [vmem:[%s2 + $0x238] sm:$0xff]
      %v979 = vld [vmem:[%s2 + $0x240] sm:$0xff]
      %v980 = vld [vmem:[%s2 + $0x248] sm:$0xff]
      %v981 = vld [vmem:[%s2 + $0x250] sm:$0xff]
      %v982 = vld [vmem:[%s2 + $0x258] sm:$0xff]
      %v983 = vld [vmem:[%s2 + $0x260] sm:$0xff]
      %v984 = vld [vmem:[%s2 + $0x268] sm:$0xff]
      %v985 = vld [vmem:[%s2 + $0x270] sm:$0xff]
      %v986 = vld [vmem:[%s2 + $0x278] sm:$0xff]
      %v987 = vld [vmem:[%s2 + $0x280] sm:$0xff]
      %v988 = vld [vmem:[%s2 + $0x288] sm:$0xff]
      %v989 = vld [vmem:[%s2 + $0x290] sm:$0xff]
      %v990 = vld [vmem:[%s2 + $0x298] sm:$0xff]
      %v991 = vld [vmem:[%s2 + $0x2a0] sm:$0xff]
      %v992 = vld [vmem:[%s2 + $0x2a8] sm:$0xff]
      %v993 = vld [vmem:[%s2 + $0x2b0] sm:$0xff]
      %v994 = vld [vmem:[%s2 + $0x2b8] sm:$0xff]
      %v995 = vld [vmem:[%s2 + $0x2c0] sm:$0xff]
      %v996 = vld [vmem:[%s2 + $0x2c8] sm:$0xff]
      %v997 = vld [vmem:[%s2 + $0x2d0] sm:$0xff]
      %v998 = vld [vmem:[%s2 + $0x2d8] sm:$0xff]
      %v999 = vld [vmem:[%s2 + $0x2e0] sm:$0xff]
      %v1000 = vld [vmem:[%s2 + $0x2e8] sm:$0xff]
      %v1001 = vld [vmem:[%s2 + $0x2f0] sm:$0xff]
      %v1002 = vld [vmem:[%s2 + $0x2f8] sm:$0xff]
      %v1003 = vld [vmem:[%s2 + $0x300] sm:$0xff]
      %v1004 = vld [vmem:[%s2 + $0x308] sm:$0xff]
      %v1005 = vld [vmem:[%s2 + $0x310] sm:$0xff]
      %v1006 = vld [vmem:[%s2 + $0x318] sm:$0xff]
      %v1007 = vld [vmem:[%s2 + $0x320] sm:$0xff]
      %v1008 = vld [vmem:[%s2 + $0x328] sm:$0xff]
      %v1009 = vld [vmem:[%s2 + $0x330] sm:$0xff]
      %v1010 = vld [vmem:[%s2 + $0x338] sm:$0xff]
      %v1011 = vld [vmem:[%s2 + $0x340] sm:$0xff]
      %v1012 = vld [vmem:[%s2 + $0x348] sm:$0xff]
      %v1013 = vld [vmem:[%s2 + $0x350] sm:$0xff]
      %v1014 = vld [vmem:[%s2 + $0x358] sm:$0xff]
      %v1015 = vld [vmem:[%s2 + $0x360] sm:$0xff]
      %v1016 = vld [vmem:[%s2 + $0x368] sm:$0xff]
      %v1017 = vld [vmem:[%s2 + $0x370] sm:$0xff]
      %v1018 = vld [vmem:[%s2 + $0x378] sm:$0xff]
      %v1019 = vld [vmem:[%s2 + $0x380] sm:$0xff]
      %v1020 = vld [vmem:[%s2 + $0x388] sm:$0xff]
      %v1021 = vld [vmem:[%s2 + $0x390] sm:$0xff]
      %v1022 = vld [vmem:[%s2 + $0x398] sm:$0xff]
      %v1023 = vld [vmem:[%s2 + $0x3a0] sm:$0xff]
      %v1024 = vld [vmem:[%s2 + $0x3a8] sm:$0xff]
      %v1025 = vld [vmem:[%s2 + $0x3b0] sm:$0xff]
      %v1026 = vld [vmem:[%s2 + $0x3b8] sm:$0xff]
      %v1027 = vld [vmem:[%s2 + $0x3c0] sm:$0xff]
      %v1028 = vld [vmem:[%s2 + $0x3c8] sm:$0xff]
      %v1029 = vld [vmem:[%s2 + $0x3d0] sm:$0xff]
      %v1030 = vld [vmem:[%s2 + $0x3d8] sm:$0xff]
      %v1031 = vld [vmem:[%s2 + $0x3e0] sm:$0xff]
      %v1032 = vld [vmem:[%s2 + $0x3e8] sm:$0xff]
      %v1033 = vld [vmem:[%s2 + $0x3f0] sm:$0xff]
      %v1034 = vld [vmem:[%s2 + $0x3f8] sm:$0xff]
      %v1163 = vunpack.c.l.b16 %v907
      %v1164 = vunpack.c.h.b16 %v907
      %v1165 = vunpack.c.l.b16 %v908
      %v1166 = vunpack.c.h.b16 %v908
      %v1167 = vunpack.c.l.b16 %v909
      %v1168 = vunpack.c.h.b16 %v909
      %v1169 = vunpack.c.l.b16 %v910
      %v1170 = vunpack.c.h.b16 %v910
      %v1171 = vunpack.c.l.b16 %v911
      %v1172 = vunpack.c.h.b16 %v911
      %v1173 = vunpack.c.l.b16 %v912
      %v1174 = vunpack.c.h.b16 %v912
      %v1175 = vunpack.c.l.b16 %v913
      %v1176 = vunpack.c.h.b16 %v913
      %v1177 = vunpack.c.l.b16 %v914
      %v1178 = vunpack.c.h.b16 %v914
      %v1179 = vunpack.c.l.b16 %v915
      %v1180 = vunpack.c.h.b16 %v915
      %v1181 = vunpack.c.l.b16 %v916
      %v1182 = vunpack.c.h.b16 %v916
      %v1183 = vunpack.c.l.b16 %v917
      %v1184 = vunpack.c.h.b16 %v917
      %v1185 = vunpack.c.l.b16 %v918
      %v1186 = vunpack.c.h.b16 %v918
      %v1187 = vunpack.c.l.b16 %v919
      %v1188 = vunpack.c.h.b16 %v919
      %v1189 = vunpack.c.l.b16 %v920
      %v1190 = vunpack.c.h.b16 %v920
      %v1191 = vunpack.c.l.b16 %v921
      %v1192 = vunpack.c.h.b16 %v921
      %v1193 = vunpack.c.l.b16 %v922
      %v1194 = vunpack.c.h.b16 %v922
      %v1195 = vunpack.c.l.b16 %v923
      %v1196 = vunpack.c.h.b16 %v923
      %v1197 = vunpack.c.l.b16 %v924
      %v1198 = vunpack.c.h.b16 %v924
      %v1199 = vunpack.c.l.b16 %v925
      %v1200 = vunpack.c.h.b16 %v925
      %v1201 = vunpack.c.l.b16 %v926
      %v1202 = vunpack.c.h.b16 %v926
      %v1203 = vunpack.c.l.b16 %v927
      %v1204 = vunpack.c.h.b16 %v927
      %v1205 = vunpack.c.l.b16 %v928
      %v1206 = vunpack.c.h.b16 %v928
      %v1207 = vunpack.c.l.b16 %v929
      %v1208 = vunpack.c.h.b16 %v929
      %v1209 = vunpack.c.l.b16 %v930
      %v1210 = vunpack.c.h.b16 %v930
      %v1211 = vunpack.c.l.b16 %v931
      %v1212 = vunpack.c.h.b16 %v931
      %v1213 = vunpack.c.l.b16 %v932
      %v1214 = vunpack.c.h.b16 %v932
      %v1215 = vunpack.c.l.b16 %v933
      %v1216 = vunpack.c.h.b16 %v933
      %v1217 = vunpack.c.l.b16 %v934
      %v1218 = vunpack.c.h.b16 %v934
      %v1219 = vunpack.c.l.b16 %v935
      %v1220 = vunpack.c.h.b16 %v935
      %v1221 = vunpack.c.l.b16 %v936
      %v1222 = vunpack.c.h.b16 %v936
      %v1223 = vunpack.c.l.b16 %v937
      %v1224 = vunpack.c.h.b16 %v937
      %v1225 = vunpack.c.l.b16 %v938
      %v1226 = vunpack.c.h.b16 %v938
      %v1227 = vunpack.c.l.b16 %v939
      %v1228 = vunpack.c.h.b16 %v939
      %v1229 = vunpack.c.l.b16 %v940
      %v1230 = vunpack.c.h.b16 %v940
      %v1231 = vunpack.c.l.b16 %v941
      %v1232 = vunpack.c.h.b16 %v941
      %v1233 = vunpack.c.l.b16 %v942
      %v1234 = vunpack.c.h.b16 %v942
      %v1235 = vunpack.c.l.b16 %v943
      %v1236 = vunpack.c.h.b16 %v943
      %v1237 = vunpack.c.l.b16 %v944
      %v1238 = vunpack.c.h.b16 %v944
      %v1239 = vunpack.c.l.b16 %v945
      %v1240 = vunpack.c.h.b16 %v945
      %v1241 = vunpack.c.l.b16 %v946
      %v1242 = vunpack.c.h.b16 %v946
      %v1243 = vunpack.c.l.b16 %v947
      %v1244 = vunpack.c.h.b16 %v947
      %v1245 = vunpack.c.l.b16 %v948
      %v1246 = vunpack.c.h.b16 %v948
      %v1247 = vunpack.c.l.b16 %v949
      %v1248 = vunpack.c.h.b16 %v949
      %v1249 = vunpack.c.l.b16 %v950
      %v1250 = vunpack.c.h.b16 %v950
      %v1251 = vunpack.c.l.b16 %v951
      %v1252 = vunpack.c.h.b16 %v951
      %v1253 = vunpack.c.l.b16 %v952
      %v1254 = vunpack.c.h.b16 %v952
      %v1255 = vunpack.c.l.b16 %v953
      %v1256 = vunpack.c.h.b16 %v953
      %v1257 = vunpack.c.l.b16 %v954
      %v1258 = vunpack.c.h.b16 %v954
      %v1259 = vunpack.c.l.b16 %v955
      %v1260 = vunpack.c.h.b16 %v955
      %v1261 = vunpack.c.l.b16 %v956
      %v1262 = vunpack.c.h.b16 %v956
      %v1263 = vunpack.c.l.b16 %v957
      %v1264 = vunpack.c.h.b16 %v957
      %v1265 = vunpack.c.l.b16 %v958
      %v1266 = vunpack.c.h.b16 %v958
      %v1267 = vunpack.c.l.b16 %v959
      %v1268 = vunpack.c.h.b16 %v959
      %v1269 = vunpack.c.l.b16 %v960
      %v1270 = vunpack.c.h.b16 %v960
      %v1271 = vunpack.c.l.b16 %v961
      %v1272 = vunpack.c.h.b16 %v961
      %v1273 = vunpack.c.l.b16 %v962
      %v1274 = vunpack.c.h.b16 %v962
      %v1275 = vunpack.c.l.b16 %v963
      %v1276 = vunpack.c.h.b16 %v963
      %v1277 = vunpack.c.l.b16 %v964
      %v1278 = vunpack.c.h.b16 %v964
      %v1279 = vunpack.c.l.b16 %v965
      %v1280 = vunpack.c.h.b16 %v965
      %v1281 = vunpack.c.l.b16 %v966
      %v1282 = vunpack.c.h.b16 %v966
      %v1283 = vunpack.c.l.b16 %v967
      %v1284 = vunpack.c.h.b16 %v967
      %v1285 = vunpack.c.l.b16 %v968
      %v1286 = vunpack.c.h.b16 %v968
      %v1287 = vunpack.c.l.b16 %v969
      %v1288 = vunpack.c.h.b16 %v969
      %v1289 = vunpack.c.l.b16 %v970
      %v1290 = vunpack.c.h.b16 %v970
      %v1291 = vunpack.c.l.b16 %v971
      %v1292 = vunpack.c.h.b16 %v971
      %v1293 = vunpack.c.l.b16 %v972
      %v1294 = vunpack.c.h.b16 %v972
      %v1295 = vunpack.c.l.b16 %v973
      %v1296 = vunpack.c.h.b16 %v973
      %v1297 = vunpack.c.l.b16 %v974
      %v1298 = vunpack.c.h.b16 %v974
      %v1299 = vunpack.c.l.b16 %v975
      %v1300 = vunpack.c.h.b16 %v975
      %v1301 = vunpack.c.l.b16 %v976
      %v1302 = vunpack.c.h.b16 %v976
      %v1303 = vunpack.c.l.b16 %v977
      %v1304 = vunpack.c.h.b16 %v977
      %v1305 = vunpack.c.l.b16 %v978
      %v1306 = vunpack.c.h.b16 %v978
      %v1307 = vunpack.c.l.b16 %v979
      %v1308 = vunpack.c.h.b16 %v979
      %v1309 = vunpack.c.l.b16 %v980
      %v1310 = vunpack.c.h.b16 %v980
      %v1311 = vunpack.c.l.b16 %v981
      %v1312 = vunpack.c.h.b16 %v981
      %v1313 = vunpack.c.l.b16 %v982
      %v1314 = vunpack.c.h.b16 %v982
      %v1315 = vunpack.c.l.b16 %v983
      %v1316 = vunpack.c.h.b16 %v983
      %v1317 = vunpack.c.l.b16 %v984
      %v1318 = vunpack.c.h.b16 %v984
      %v1319 = vunpack.c.l.b16 %v985
      %v1320 = vunpack.c.h.b16 %v985
      %v1321 = vunpack.c.l.b16 %v986
      %v1322 = vunpack.c.h.b16 %v986
      %v1323 = vunpack.c.l.b16 %v987
      %v1324 = vunpack.c.h.b16 %v987
      %v1325 = vunpack.c.l.b16 %v988
      %v1326 = vunpack.c.h.b16 %v988
      %v1327 = vunpack.c.l.b16 %v989
      %v1328 = vunpack.c.h.b16 %v989
      %v1329 = vunpack.c.l.b16 %v990
      %v1330 = vunpack.c.h.b16 %v990
      %v1331 = vunpack.c.l.b16 %v991
      %v1332 = vunpack.c.h.b16 %v991
      %v1333 = vunpack.c.l.b16 %v992
      %v1334 = vunpack.c.h.b16 %v992
      %v1335 = vunpack.c.l.b16 %v993
      %v1336 = vunpack.c.h.b16 %v993
      %v1337 = vunpack.c.l.b16 %v994
      %v1338 = vunpack.c.h.b16 %v994
      %v1339 = vunpack.c.l.b16 %v995
      %v1340 = vunpack.c.h.b16 %v995
      %v1341 = vunpack.c.l.b16 %v996
      %v1342 = vunpack.c.h.b16 %v996
      %v1343 = vunpack.c.l.b16 %v997
      %v1344 = vunpack.c.h.b16 %v997
      %v1345 = vunpack.c.l.b16 %v998
      %v1346 = vunpack.c.h.b16 %v998
      %v1347 = vunpack.c.l.b16 %v999
      %v1348 = vunpack.c.h.b16 %v999
      %v1349 = vunpack.c.l.b16 %v1000
      %v1350 = vunpack.c.h.b16 %v1000
      %v1351 = vunpack.c.l.b16 %v1001
      %v1352 = vunpack.c.h.b16 %v1001
      %v1353 = vunpack.c.l.b16 %v1002
      %v1354 = vunpack.c.h.b16 %v1002
      %v1355 = vunpack.c.l.b16 %v1003
      %v1356 = vunpack.c.h.b16 %v1003
      %v1357 = vunpack.c.l.b16 %v1004
      %v1358 = vunpack.c.h.b16 %v1004
      %v1359 = vunpack.c.l.b16 %v1005
      %v1360 = vunpack.c.h.b16 %v1005
      %v1361 = vunpack.c.l.b16 %v1006
      %v1362 = vunpack.c.h.b16 %v1006
      %v1363 = vunpack.c.l.b16 %v1007
      %v1364 = vunpack.c.h.b16 %v1007
      %v1365 = vunpack.c.l.b16 %v1008
      %v1366 = vunpack.c.h.b16 %v1008
      %v1367 = vunpack.c.l.b16 %v1009
      %v1368 = vunpack.c.h.b16 %v1009
      %v1369 = vunpack.c.l.b16 %v1010
      %v1370 = vunpack.c.h.b16 %v1010
      %v1371 = vunpack.c.l.b16 %v1011
      %v1372 = vunpack.c.h.b16 %v1011
      %v1373 = vunpack.c.l.b16 %v1012
      %v1374 = vunpack.c.h.b16 %v1012
      %v1375 = vunpack.c.l.b16 %v1013
      %v1376 = vunpack.c.h.b16 %v1013
      %v1377 = vunpack.c.l.b16 %v1014
      %v1378 = vunpack.c.h.b16 %v1014
      %v1379 = vunpack.c.l.b16 %v1015
      %v1380 = vunpack.c.h.b16 %v1015
      %v1381 = vunpack.c.l.b16 %v1016
      %v1382 = vunpack.c.h.b16 %v1016
      %v1383 = vunpack.c.l.b16 %v1017
      %v1384 = vunpack.c.h.b16 %v1017
      %v1385 = vunpack.c.l.b16 %v1018
      %v1386 = vunpack.c.h.b16 %v1018
      %v1387 = vunpack.c.l.b16 %v1019
      %v1388 = vunpack.c.h.b16 %v1019
      %v1389 = vunpack.c.l.b16 %v1020
      %v1390 = vunpack.c.h.b16 %v1020
      %v1391 = vunpack.c.l.b16 %v1021
      %v1392 = vunpack.c.h.b16 %v1021
      %v1393 = vunpack.c.l.b16 %v1022
      %v1394 = vunpack.c.h.b16 %v1022
      %v1395 = vunpack.c.l.b16 %v1023
      %v1396 = vunpack.c.h.b16 %v1023
      %v1397 = vunpack.c.l.b16 %v1024
      %v1398 = vunpack.c.h.b16 %v1024
      %v1399 = vunpack.c.l.b16 %v1025
      %v1400 = vunpack.c.h.b16 %v1025
      %v1401 = vunpack.c.l.b16 %v1026
      %v1402 = vunpack.c.h.b16 %v1026
      %v1403 = vunpack.c.l.b16 %v1027
      %v1404 = vunpack.c.h.b16 %v1027
      %v1405 = vunpack.c.l.b16 %v1028
      %v1406 = vunpack.c.h.b16 %v1028
      %v1407 = vunpack.c.l.b16 %v1029
      %v1408 = vunpack.c.h.b16 %v1029
      %v1409 = vunpack.c.l.b16 %v1030
      %v1410 = vunpack.c.h.b16 %v1030
      %v1411 = vunpack.c.l.b16 %v1031
      %v1412 = vunpack.c.h.b16 %v1031
      %v1413 = vunpack.c.l.b16 %v1032
      %v1414 = vunpack.c.h.b16 %v1032
      %v1415 = vunpack.c.l.b16 %v1033
      %v1416 = vunpack.c.h.b16 %v1033
      %v1417 = vunpack.c.l.b16 %v1034
      %v1418 = vunpack.c.h.b16 %v1034
      %v1419 = vpack.c.b16 %v1171, %v1163
      %v1420 = vpack.c.b16 %v1172, %v1164
      %v1421 = vpack.c.b16 %v1173, %v1165
      %v1422 = vpack.c.b16 %v1174, %v1166
      %v1423 = vpack.c.b16 %v1175, %v1167
      %v1424 = vpack.c.b16 %v1176, %v1168
      %v1425 = vpack.c.b16 %v1177, %v1169
      %v1426 = vpack.c.b16 %v1178, %v1170
      %v1427 = vpack.c.b16 %v1187, %v1179
      %v1428 = vpack.c.b16 %v1188, %v1180
      %v1429 = vpack.c.b16 %v1189, %v1181
      %v1430 = vpack.c.b16 %v1190, %v1182
      %v1431 = vpack.c.b16 %v1191, %v1183
      %v1432 = vpack.c.b16 %v1192, %v1184
      %v1433 = vpack.c.b16 %v1193, %v1185
      %v1434 = vpack.c.b16 %v1194, %v1186
      %v1435 = vpack.c.b16 %v1203, %v1195
      %v1436 = vpack.c.b16 %v1204, %v1196
      %v1437 = vpack.c.b16 %v1205, %v1197
      %v1438 = vpack.c.b16 %v1206, %v1198
      %v1439 = vpack.c.b16 %v1207, %v1199
      %v1440 = vpack.c.b16 %v1208, %v1200
      %v1441 = vpack.c.b16 %v1209, %v1201
      %v1442 = vpack.c.b16 %v1210, %v1202
      %v1443 = vpack.c.b16 %v1219, %v1211
      %v1444 = vpack.c.b16 %v1220, %v1212
      %v1445 = vpack.c.b16 %v1221, %v1213
      %v1446 = vpack.c.b16 %v1222, %v1214
      %v1447 = vpack.c.b16 %v1223, %v1215
      %v1448 = vpack.c.b16 %v1224, %v1216
      %v1449 = vpack.c.b16 %v1225, %v1217
      %v1450 = vpack.c.b16 %v1226, %v1218
      %v1451 = vpack.c.b16 %v1235, %v1227
      %v1452 = vpack.c.b16 %v1236, %v1228
      %v1453 = vpack.c.b16 %v1237, %v1229
      %v1454 = vpack.c.b16 %v1238, %v1230
      %v1455 = vpack.c.b16 %v1239, %v1231
      %v1456 = vpack.c.b16 %v1240, %v1232
      %v1457 = vpack.c.b16 %v1241, %v1233
      %v1458 = vpack.c.b16 %v1242, %v1234
      %v1459 = vpack.c.b16 %v1251, %v1243
      %v1460 = vpack.c.b16 %v1252, %v1244
      %v1461 = vpack.c.b16 %v1253, %v1245
      %v1462 = vpack.c.b16 %v1254, %v1246
      %v1463 = vpack.c.b16 %v1255, %v1247
      %v1464 = vpack.c.b16 %v1256, %v1248
      %v1465 = vpack.c.b16 %v1257, %v1249
      %v1466 = vpack.c.b16 %v1258, %v1250
      %v1467 = vpack.c.b16 %v1267, %v1259
      %v1468 = vpack.c.b16 %v1268, %v1260
      %v1469 = vpack.c.b16 %v1269, %v1261
      %v1470 = vpack.c.b16 %v1270, %v1262
      %v1471 = vpack.c.b16 %v1271, %v1263
      %v1472 = vpack.c.b16 %v1272, %v1264
      %v1473 = vpack.c.b16 %v1273, %v1265
      %v1474 = vpack.c.b16 %v1274, %v1266
      %v1475 = vpack.c.b16 %v1283, %v1275
      %v1476 = vpack.c.b16 %v1284, %v1276
      %v1477 = vpack.c.b16 %v1285, %v1277
      %v1478 = vpack.c.b16 %v1286, %v1278
      %v1479 = vpack.c.b16 %v1287, %v1279
      %v1480 = vpack.c.b16 %v1288, %v1280
      %v1481 = vpack.c.b16 %v1289, %v1281
      %v1482 = vpack.c.b16 %v1290, %v1282
      %v1483 = vpack.c.b16 %v1299, %v1291
      %v1484 = vpack.c.b16 %v1300, %v1292
      %v1485 = vpack.c.b16 %v1301, %v1293
      %v1486 = vpack.c.b16 %v1302, %v1294
      %v1487 = vpack.c.b16 %v1303, %v1295
      %v1488 = vpack.c.b16 %v1304, %v1296
      %v1489 = vpack.c.b16 %v1305, %v1297
      %v1490 = vpack.c.b16 %v1306, %v1298
      %v1491 = vpack.c.b16 %v1315, %v1307
      %v1492 = vpack.c.b16 %v1316, %v1308
      %v1493 = vpack.c.b16 %v1317, %v1309
      %v1494 = vpack.c.b16 %v1318, %v1310
      %v1495 = vpack.c.b16 %v1319, %v1311
      %v1496 = vpack.c.b16 %v1320, %v1312
      %v1497 = vpack.c.b16 %v1321, %v1313
      %v1498 = vpack.c.b16 %v1322, %v1314
      %v1499 = vpack.c.b16 %v1331, %v1323
      %v1500 = vpack.c.b16 %v1332, %v1324
      %v1501 = vpack.c.b16 %v1333, %v1325
      %v1502 = vpack.c.b16 %v1334, %v1326
      %v1503 = vpack.c.b16 %v1335, %v1327
      %v1504 = vpack.c.b16 %v1336, %v1328
      %v1505 = vpack.c.b16 %v1337, %v1329
      %v1506 = vpack.c.b16 %v1338, %v1330
      %v1507 = vpack.c.b16 %v1347, %v1339
      %v1508 = vpack.c.b16 %v1348, %v1340
      %v1509 = vpack.c.b16 %v1349, %v1341
      %v1510 = vpack.c.b16 %v1350, %v1342
      %v1511 = vpack.c.b16 %v1351, %v1343
      %v1512 = vpack.c.b16 %v1352, %v1344
      %v1513 = vpack.c.b16 %v1353, %v1345
      %v1514 = vpack.c.b16 %v1354, %v1346
      %v1515 = vpack.c.b16 %v1363, %v1355
      %v1516 = vpack.c.b16 %v1364, %v1356
      %v1517 = vpack.c.b16 %v1365, %v1357
      %v1518 = vpack.c.b16 %v1366, %v1358
      %v1519 = vpack.c.b16 %v1367, %v1359
      %v1520 = vpack.c.b16 %v1368, %v1360
      %v1521 = vpack.c.b16 %v1369, %v1361
      %v1522 = vpack.c.b16 %v1370, %v1362
      %v1523 = vpack.c.b16 %v1379, %v1371
      %v1524 = vpack.c.b16 %v1380, %v1372
      %v1525 = vpack.c.b16 %v1381, %v1373
      %v1526 = vpack.c.b16 %v1382, %v1374
      %v1527 = vpack.c.b16 %v1383, %v1375
      %v1528 = vpack.c.b16 %v1384, %v1376
      %v1529 = vpack.c.b16 %v1385, %v1377
      %v1530 = vpack.c.b16 %v1386, %v1378
      %v1531 = vpack.c.b16 %v1395, %v1387
      %v1532 = vpack.c.b16 %v1396, %v1388
      %v1533 = vpack.c.b16 %v1397, %v1389
      %v1534 = vpack.c.b16 %v1398, %v1390
      %v1535 = vpack.c.b16 %v1399, %v1391
      %v1536 = vpack.c.b16 %v1400, %v1392
      %v1537 = vpack.c.b16 %v1401, %v1393
      %v1538 = vpack.c.b16 %v1402, %v1394
      %v1539 = vpack.c.b16 %v1411, %v1403
      %v1540 = vpack.c.b16 %v1412, %v1404
      %v1541 = vpack.c.b16 %v1413, %v1405
      %v1542 = vpack.c.b16 %v1414, %v1406
      %v1543 = vpack.c.b16 %v1415, %v1407
      %v1544 = vpack.c.b16 %v1416, %v1408
      %v1545 = vpack.c.b16 %v1417, %v1409
      %v1546 = vpack.c.b16 %v1418, %v1410
      %1675 = vmatprep.subr.bf16.mxu0 0
      %1676 = vmatpush1.bf16.msra.mxu0 %v715
      %1677 = vmatprep.subr.bf16.mxu0 0
      %1678 = vmatpush1.bf16.msra.mxu0 %v716
      %1679 = vmatprep.subr.bf16.mxu0 0
      %1680 = vmatpush1.bf16.msra.mxu0 %v717
      %1681 = vmatprep.subr.bf16.mxu0 0
      %1682 = vmatpush1.bf16.msra.mxu0 %v718
      %1683 = vmatprep.subr.bf16.mxu0 0
      %1684 = vmatpush1.bf16.msra.mxu0 %v719
      %1685 = vmatprep.subr.bf16.mxu0 0
      %1686 = vmatpush1.bf16.msra.mxu0 %v720
      %1687 = vmatprep.subr.bf16.mxu0 0
      %1688 = vmatpush1.bf16.msra.mxu0 %v721
      %1689 = vmatprep.subr.bf16.mxu0 0
      %1690 = vmatpush1.bf16.msra.mxu0 %v722
      %1691 = vmatprep.subr.bf16.mxu0 0
      %1692 = vmatpush1.bf16.msra.mxu0 %v723
      %1693 = vmatprep.subr.bf16.mxu0 0
      %1694 = vmatpush1.bf16.msra.mxu0 %v724
      %1695 = vmatprep.subr.bf16.mxu0 0
      %1696 = vmatpush1.bf16.msra.mxu0 %v725
      %1697 = vmatprep.subr.bf16.mxu0 0
      %1698 = vmatpush1.bf16.msra.mxu0 %v726
      %1699 = vmatprep.subr.bf16.mxu0 0
      %1700 = vmatpush1.bf16.msra.mxu0 %v727
      %1701 = vmatprep.subr.bf16.mxu0 0
      %1702 = vmatpush1.bf16.msra.mxu0 %v728
      %1703 = vmatprep.subr.bf16.mxu0 0
      %1704 = vmatpush1.bf16.msra.mxu0 %v729
      %1705 = vmatprep.subr.bf16.mxu0 0
      %1706 = vmatpush1.bf16.msra.mxu0 %v730
      %1707 = vmatprep.mubr.bf16.mxu0 %v1420
      %1708 = vmatmul.mubr.bf16.gmra.mrb[0].mxu0 %v1419
      %v1709 = vpop.f32.mrb[0].mxu0
      %v1710 = vadd.f32 0.0, %v1709
      %v1711 = vpop.f32.mrb[0].mxu0
      %v1712 = vpop.f32.mrb[0].mxu0
      %v1713 = vadd.f32 0.0, %v1712
      %v1714 = vpop.f32.mrb[0].mxu0
      %1715 = vmatprep.mubr.bf16.mxu0 %v1428
      %1716 = vmatmul.mubr.bf16.gmra.mrb[0].mxu0 %v1427
      %v1717 = vpop.f32.mrb[0].mxu0
      %v1718 = vadd.f32 0.0, %v1717
      %v1719 = vpop.f32.mrb[0].mxu0
      %v1720 = vpop.f32.mrb[0].mxu0
      %v1721 = vadd.f32 0.0, %v1720
      %v1722 = vpop.f32.mrb[0].mxu0
      %1723 = vmatprep.mubr.bf16.mxu0 %v1436
      %1724 = vmatmul.mubr.bf16.gmra.mrb[0].mxu0 %v1435
      %v1725 = vpop.f32.mrb[0].mxu0
      %v1726 = vadd.f32 0.0, %v1725
      %v1727 = vpop.f32.mrb[0].mxu0
      %v1728 = vpop.f32.mrb[0].mxu0
      %v1729 = vadd.f32 0.0, %v1728
      %v1730 = vpop.f32.mrb[0].mxu0
      %1731 = vmatprep.mubr.bf16.mxu0 %v1444
      %1732 = vmatmul.mubr.bf16.gmra.mrb[0].mxu0 %v1443
      %v1733 = vpop.f32.mrb[0].mxu0
      %v1734 = vadd.f32 0.0, %v1733
      %v1735 = vpop.f32.mrb[0].mxu0
      %v1736 = vpop.f32.mrb[0].mxu0
      %v1737 = vadd.f32 0.0, %v1736
      %v1738 = vpop.f32.mrb[0].mxu0
      %1739 = vmatprep.mubr.bf16.mxu0 %v1452
      %1740 = vmatmul.mubr.bf16.gmra.mrb[0].mxu0 %v1451
      %v1741 = vpop.f32.mrb[0].mxu0
      %v1742 = vadd.f32 0.0, %v1741
      %v1743 = vpop.f32.mrb[0].mxu0
      %v1744 = vpop.f32.mrb[0].mxu0
      %v1745 = vadd.f32 0.0, %v1744
      %v1746 = vpop.f32.mrb[0].mxu0
      %1747 = vmatprep.mubr.bf16.mxu0 %v1460
      %1748 = vmatmul.mubr.bf16.gmra.mrb[0].mxu0 %v1459
      %v1749 = vpop.f32.mrb[0].mxu0
      %v1750 = vadd.f32 0.0, %v1749
      %v1751 = vpop.f32.mrb[0].mxu0
      %v1752 = vpop.f32.mrb[0].mxu0
      %v1753 = vadd.f32 0.0, %v1752
      %v1754 = vpop.f32.mrb[0].mxu0
      %1755 = vmatprep.mubr.bf16.mxu0 %v1468
      %1756 = vmatmul.mubr.bf16.gmra.mrb[0].mxu0 %v1467
      %v1757 = vpop.f32.mrb[0].mxu0
      %v1758 = vadd.f32 0.0, %v1757
      %v1759 = vpop.f32.mrb[0].mxu0
      %v1760 = vpop.f32.mrb[0].mxu0
      %v1761 = vadd.f32 0.0, %v1760
      %v1762 = vpop.f32.mrb[0].mxu0
      %1763 = vmatprep.mubr.bf16.mxu0 %v1476
      %1764 = vmatmul.mubr.bf16.gmra.mrb[0].mxu0 %v1475
      %v1765 = vpop.f32.mrb[0].mxu0
      %v1766 = vadd.f32 0.0, %v1765
      %v1767 = vpop.f32.mrb[0].mxu0
      %v1768 = vpop.f32.mrb[0].mxu0
      %v1769 = vadd.f32 0.0, %v1768
      %v1770 = vpop.f32.mrb[0].mxu0
      %1771 = vmatprep.mubr.bf16.mxu0 %v1484
      %1772 = vmatmul.mubr.bf16.gmra.mrb[0].mxu0 %v1483
      %v1773 = vpop.f32.mrb[0].mxu0
      %v1774 = vadd.f32 0.0, %v1773
      %v1775 = vpop.f32.mrb[0].mxu0
      %v1776 = vpop.f32.mrb[0].mxu0
      %v1777 = vadd.f32 0.0, %v1776
      %v1778 = vpop.f32.mrb[0].mxu0
      %1779 = vmatprep.mubr.bf16.mxu0 %v1492
      %1780 = vmatmul.mubr.bf16.gmra.mrb[0].mxu0 %v1491
      %v1781 = vpop.f32.mrb[0].mxu0
      %v1782 = vadd.f32 0.0, %v1781
      %v1783 = vpop.f32.mrb[0].mxu0
      %v1784 = vpop.f32.mrb[0].mxu0
      %v1785 = vadd.f32 0.0, %v1784
      %v1786 = vpop.f32.mrb[0].mxu0
      %1787 = vmatprep.mubr.bf16.mxu0 %v1500
      %1788 = vmatmul.mubr.bf16.gmra.mrb[0].mxu0 %v1499
      %v1789 = vpop.f32.mrb[0].mxu0
      %v1790 = vadd.f32 0.0, %v1789
      %v1791 = vpop.f32.mrb[0].mxu0
      %v1792 = vpop.f32.mrb[0].mxu0
      %v1793 = vadd.f32 0.0, %v1792
      %v1794 = vpop.f32.mrb[0].mxu0
      %1795 = vmatprep.mubr.bf16.mxu0 %v1508
      %1796 = vmatmul.mubr.bf16.gmra.mrb[0].mxu0 %v1507
      %v1797 = vpop.f32.mrb[0].mxu0
      %v1798 = vadd.f32 0.0, %v1797
      %v1799 = vpop.f32.mrb[0].mxu0
      %v1800 = vpop.f32.mrb[0].mxu0
      %v1801 = vadd.f32 0.0, %v1800
      %v1802 = vpop.f32.mrb[0].mxu0
      %1803 = vmatprep.mubr.bf16.mxu0 %v1516
      %1804 = vmatmul.mubr.bf16.gmra.mrb[0].mxu0 %v1515
      %v1805 = vpop.f32.mrb[0].mxu0
      %v1806 = vadd.f32 0.0, %v1805
      %v1807 = vpop.f32.mrb[0].mxu0
      %v1808 = vpop.f32.mrb[0].mxu0
      %v1809 = vadd.f32 0.0, %v1808
      %v1810 = vpop.f32.mrb[0].mxu0
      %1811 = vmatprep.mubr.bf16.mxu0 %v1524
      %1812 = vmatmul.mubr.bf16.gmra.mrb[0].mxu0 %v1523
      %v1813 = vpop.f32.mrb[0].mxu0
      %v1814 = vadd.f32 0.0, %v1813
      %v1815 = vpop.f32.mrb[0].mxu0
      %v1816 = vpop.f32.mrb[0].mxu0
      %v1817 = vadd.f32 0.0, %v1816
      %v1818 = vpop.f32.mrb[0].mxu0
      %1819 = vmatprep.mubr.bf16.mxu0 %v1532
      %1820 = vmatmul.mubr.bf16.gmra.mrb[0].mxu0 %v1531
      %v1821 = vpop.f32.mrb[0].mxu0
      %v1822 = vadd.f32 0.0, %v1821
      %v1823 = vpop.f32.mrb[0].mxu0
      %v1824 = vpop.f32.mrb[0].mxu0
      %v1825 = vadd.f32 0.0, %v1824
      %v1826 = vpop.f32.mrb[0].mxu0
      %1827 = vmatprep.mubr.bf16.mxu0 %v1540
      %1828 = vmatmul.mubr.bf16.gmra.mrb[0].mxu0 %v1539
      %v1829 = vpop.f32.mrb[0].mxu0
      %v1830 = vadd.f32 0.0, %v1829
      %v1831 = vpop.f32.mrb[0].mxu0
      %v1832 = vpop.f32.mrb[0].mxu0
      %v1833 = vadd.f32 0.0, %v1832
      %v1834 = vpop.f32.mrb[0].mxu0
      %1835 = vdwg.mxu0
      %1836 = vmatprep.subr.bf16.mxu0 0
      %1837 = vmatpush1.bf16.msra.mxu0 %v731
      %1838 = vmatprep.subr.bf16.mxu0 0
      %1839 = vmatpush1.bf16.msra.mxu0 %v732
      %1840 = vmatprep.subr.bf16.mxu0 0
      %1841 = vmatpush1.bf16.msra.mxu0 %v733
      %1842 = vmatprep.subr.bf16.mxu0 0
      %1843 = vmatpush1.bf16.msra.mxu0 %v734
      %1844 = vmatprep.subr.bf16.mxu0 0
      %1845 = vmatpush1.bf16.msra.mxu0 %v735
      %1846 = vmatprep.subr.bf16.mxu0 0
      %1847 = vmatpush1.bf16.msra.mxu0 %v736
      %1848 = vmatprep.subr.bf16.mxu0 0
      %1849 = vmatpush1.bf16.msra.mxu0 %v737
      %1850 = vmatprep.subr.bf16.mxu0 0
      %1851 = vmatpush1.bf16.msra.mxu0 %v738
      %1852 = vmatprep.subr.bf16.mxu0 0
      %1853 = vmatpush1.bf16.msra.mxu0 %v739
      %1854 = vmatprep.subr.bf16.mxu0 0
      %1855 = vmatpush1.bf16.msra.mxu0 %v740
      %1856 = vmatprep.subr.bf16.mxu0 0
      %1857 = vmatpush1.bf16.msra.mxu0 %v741
      %1858 = vmatprep.subr.bf16.mxu0 0
      %1859 = vmatpush1.bf16.msra.mxu0 %v742
      %1860 = vmatprep.subr.bf16.mxu0 0
      %1861 = vmatpush1.bf16.msra.mxu0 %v743
      %1862 = vmatprep.subr.bf16.mxu0 0
      %1863 = vmatpush1.bf16.msra.mxu0 %v744
      %1864 = vmatprep.subr.bf16.mxu0 0
      %1865 = vmatpush1.bf16.msra.mxu0 %v745
      %1866 = vmatprep.subr.bf16.mxu0 0
      %1867 = vmatpush1.bf16.msra.mxu0 %v746
      %1868 = vmatprep.mubr.bf16.mxu0 %v1422
      %1869 = vmatmul.mubr.bf16.gmra.mrb[0].mxu0 %v1421
      %v1870 = vpop.f32.mrb[0].mxu0
      %v1871 = vadd.f32 %v1710, %v1870
      %v1872 = vpop.f32.mrb[0].mxu0
      %v1873 = vpop.f32.mrb[0].mxu0
      %v1874 = vadd.f32 %v1713, %v1873
      %v1875 = vpop.f32.mrb[0].mxu0
      %1876 = vmatprep.mubr.bf16.mxu0 %v1430
      %1877 = vmatmul.mubr.bf16.gmra.mrb[0].mxu0 %v1429
      %v1878 = vpop.f32.mrb[0].mxu0
      %v1879 = vadd.f32 %v1718, %v1878
      %v1880 = vpop.f32.mrb[0].mxu0
      %v1881 = vpop.f32.mrb[0].mxu0
      %v1882 = vadd.f32 %v1721, %v1881
      %v1883 = vpop.f32.mrb[0].mxu0
      %1884 = vmatprep.mubr.bf16.mxu0 %v1438
      %1885 = vmatmul.mubr.bf16.gmra.mrb[0].mxu0 %v1437
      %v1886 = vpop.f32.mrb[0].mxu0
      %v1887 = vadd.f32 %v1726, %v1886
      %v1888 = vpop.f32.mrb[0].mxu0
      %v1889 = vpop.f32.mrb[0].mxu0
      %v1890 = vadd.f32 %v1729, %v1889
      %v1891 = vpop.f32.mrb[0].mxu0
      %1892 = vmatprep.mubr.bf16.mxu0 %v1446
      %1893 = vmatmul.mubr.bf16.gmra.mrb[0].mxu0 %v1445
      %v1894 = vpop.f32.mrb[0].mxu0
      %v1895 = vadd.f32 %v1734, %v1894
      %v1896 = vpop.f32.mrb[0].mxu0
      %v1897 = vpop.f32.mrb[0].mxu0
      %v1898 = vadd.f32 %v1737, %v1897
      %v1899 = vpop.f32.mrb[0].mxu0
      %1900 = vmatprep.mubr.bf16.mxu0 %v1454
      %1901 = vmatmul.mubr.bf16.gmra.mrb[0].mxu0 %v1453
      %v1902 = vpop.f32.mrb[0].mxu0
      %v1903 = vadd.f32 %v1742, %v1902
      %v1904 = vpop.f32.mrb[0].mxu0
      %v1905 = vpop.f32.mrb[0].mxu0
      %v1906 = vadd.f32 %v1745, %v1905
      %v1907 = vpop.f32.mrb[0].mxu0
      %1908 = vmatprep.mubr.bf16.mxu0 %v1462
      %1909 = vmatmul.mubr.bf16.gmra.mrb[0].mxu0 %v1461
      %v1910 = vpop.f32.mrb[0].mxu0
      %v1911 = vadd.f32 %v1750, %v1910
      %v1912 = vpop.f32.mrb[0].mxu0
      %v1913 = vpop.f32.mrb[0].mxu0
      %v1914 = vadd.f32 %v1753, %v1913
      %v1915 = vpop.f32.mrb[0].mxu0
      %1916 = vmatprep.mubr.bf16.mxu0 %v1470
      %1917 = vmatmul.mubr.bf16.gmra.mrb[0].mxu0 %v1469
      %v1918 = vpop.f32.mrb[0].mxu0
      %v1919 = vadd.f32 %v1758, %v1918
      %v1920 = vpop.f32.mrb[0].mxu0
      %v1921 = vpop.f32.mrb[0].mxu0
      %v1922 = vadd.f32 %v1761, %v1921
      %v1923 = vpop.f32.mrb[0].mxu0
      %1924 = vmatprep.mubr.bf16.mxu0 %v1478
      %1925 = vmatmul.mubr.bf16.gmra.mrb[0].mxu0 %v1477
      %v1926 = vpop.f32.mrb[0].mxu0
      %v1927 = vadd.f32 %v1766, %v1926
      %v1928 = vpop.f32.mrb[0].mxu0
      %v1929 = vpop.f32.mrb[0].mxu0
      %v1930 = vadd.f32 %v1769, %v1929
      %v1931 = vpop.f32.mrb[0].mxu0
      %1932 = vmatprep.mubr.bf16.mxu0 %v1486
      %1933 = vmatmul.mubr.bf16.gmra.mrb[0].mxu0 %v1485
      %v1934 = vpop.f32.mrb[0].mxu0
      %v1935 = vadd.f32 %v1774, %v1934
      %v1936 = vpop.f32.mrb[0].mxu0
      %v1937 = vpop.f32.mrb[0].mxu0
      %v1938 = vadd.f32 %v1777, %v1937
      %v1939 = vpop.f32.mrb[0].mxu0
      %1940 = vmatprep.mubr.bf16.mxu0 %v1494
      %1941 = vmatmul.mubr.bf16.gmra.mrb[0].mxu0 %v1493
      %v1942 = vpop.f32.mrb[0].mxu0
      %v1943 = vadd.f32 %v1782, %v1942
      %v1944 = vpop.f32.mrb[0].mxu0
      %v1945 = vpop.f32.mrb[0].mxu0
      %v1946 = vadd.f32 %v1785, %v1945
      %v1947 = vpop.f32.mrb[0].mxu0
      %1948 = vmatprep.mubr.bf16.mxu0 %v1502
      %1949 = vmatmul.mubr.bf16.gmra.mrb[0].mxu0 %v1501
      %v1950 = vpop.f32.mrb[0].mxu0
      %v1951 = vadd.f32 %v1790, %v1950
      %v1952 = vpop.f32.mrb[0].mxu0
      %v1953 = vpop.f32.mrb[0].mxu0
      %v1954 = vadd.f32 %v1793, %v1953
      %v1955 = vpop.f32.mrb[0].mxu0
      %1956 = vmatprep.mubr.bf16.mxu0 %v1510
      %1957 = vmatmul.mubr.bf16.gmra.mrb[0].mxu0 %v1509
      %v1958 = vpop.f32.mrb[0].mxu0
      %v1959 = vadd.f32 %v1798, %v1958
      %v1960 = vpop.f32.mrb[0].mxu0
      %v1961 = vpop.f32.mrb[0].mxu0
      %v1962 = vadd.f32 %v1801, %v1961
      %v1963 = vpop.f32.mrb[0].mxu0
      %1964 = vmatprep.mubr.bf16.mxu0 %v1518
      %1965 = vmatmul.mubr.bf16.gmra.mrb[0].mxu0 %v1517
      %v1966 = vpop.f32.mrb[0].mxu0
      %v1967 = vadd.f32 %v1806, %v1966
      %v1968 = vpop.f32.mrb[0].mxu0
      %v1969 = vpop.f32.mrb[0].mxu0
      %v1970 = vadd.f32 %v1809, %v1969
      %v1971 = vpop.f32.mrb[0].mxu0
      %1972 = vmatprep.mubr.bf16.mxu0 %v1526
      %1973 = vmatmul.mubr.bf16.gmra.mrb[0].mxu0 %v1525
      %v1974 = vpop.f32.mrb[0].mxu0
      %v1975 = vadd.f32 %v1814, %v1974
      %v1976 = vpop.f32.mrb[0].mxu0
      %v1977 = vpop.f32.mrb[0].mxu0
      %v1978 = vadd.f32 %v1817, %v1977
      %v1979 = vpop.f32.mrb[0].mxu0
      %1980 = vmatprep.mubr.bf16.mxu0 %v1534
      %1981 = vmatmul.mubr.bf16.gmra.mrb[0].mxu0 %v1533
      %v1982 = vpop.f32.mrb[0].mxu0
      %v1983 = vadd.f32 %v1822, %v1982
      %v1984 = vpop.f32.mrb[0].mxu0
      %v1985 = vpop.f32.mrb[0].mxu0
      %v1986 = vadd.f32 %v1825, %v1985
      %v1987 = vpop.f32.mrb[0].mxu0
      %1988 = vmatprep.mubr.bf16.mxu0 %v1542
      %1989 = vmatmul.mubr.bf16.gmra.mrb[0].mxu0 %v1541
      %v1990 = vpop.f32.mrb[0].mxu0
      %v1991 = vadd.f32 %v1830, %v1990
      %v1992 = vpop.f32.mrb[0].mxu0
      %v1993 = vpop.f32.mrb[0].mxu0
      %v1994 = vadd.f32 %v1833, %v1993
      %v1995 = vpop.f32.mrb[0].mxu0
      %1996 = vdwg.mxu0
      %1997 = vmatprep.subr.bf16.mxu0 0
      %1998 = vmatpush1.bf16.msra.mxu0 %v747
      %1999 = vmatprep.subr.bf16.mxu0 0
      %2000 = vmatpush1.bf16.msra.mxu0 %v748
      %2001 = vmatprep.subr.bf16.mxu0 0
      %2002 = vmatpush1.bf16.msra.mxu0 %v749
      %2003 = vmatprep.subr.bf16.mxu0 0
      %2004 = vmatpush1.bf16.msra.mxu0 %v750
      %2005 = vmatprep.subr.bf16.mxu0 0
      %2006 = vmatpush1.bf16.msra.mxu0 %v751
      %2007 = vmatprep.subr.bf16.mxu0 0
      %2008 = vmatpush1.bf16.msra.mxu0 %v752
      %2009 = vmatprep.subr.bf16.mxu0 0
      %2010 = vmatpush1.bf16.msra.mxu0 %v753
      %2011 = vmatprep.subr.bf16.mxu0 0
      %2012 = vmatpush1.bf16.msra.mxu0 %v754
      %2013 = vmatprep.subr.bf16.mxu0 0
      %2014 = vmatpush1.bf16.msra.mxu0 %v755
      %2015 = vmatprep.subr.bf16.mxu0 0
      %2016 = vmatpush1.bf16.msra.mxu0 %v756
      %2017 = vmatprep.subr.bf16.mxu0 0
      %2018 = vmatpush1.bf16.msra.mxu0 %v757
      %2019 = vmatprep.subr.bf16.mxu0 0
      %2020 = vmatpush1.bf16.msra.mxu0 %v758
      %2021 = vmatprep.subr.bf16.mxu0 0
      %2022 = vmatpush1.bf16.msra.mxu0 %v759
      %2023 = vmatprep.subr.bf16.mxu0 0
      %2024 = vmatpush1.bf16.msra.mxu0 %v760
      %2025 = vmatprep.subr.bf16.mxu0 0
      %2026 = vmatpush1.bf16.msra.mxu0 %v761
      %2027 = vmatprep.subr.bf16.mxu0 0
      %2028 = vmatpush1.bf16.msra.mxu0 %v762
      %2029 = vmatprep.mubr.bf16.mxu0 %v1424
      %2030 = vmatmul.mubr.bf16.gmra.mrb[0].mxu0 %v1423
      %v2031 = vpop.f32.mrb[0].mxu0
      %v2032 = vadd.f32 %v1871, %v2031
      %v2033 = vpop.f32.mrb[0].mxu0
      %v2034 = vpop.f32.mrb[0].mxu0
      %v2035 = vadd.f32 %v1874, %v2034
      %v2036 = vpop.f32.mrb[0].mxu0
      %2037 = vmatprep.mubr.bf16.mxu0 %v1432
      %2038 = vmatmul.mubr.bf16.gmra.mrb[0].mxu0 %v1431
      %v2039 = vpop.f32.mrb[0].mxu0
      %v2040 = vadd.f32 %v1879, %v2039
      %v2041 = vpop.f32.mrb[0].mxu0
      %v2042 = vpop.f32.mrb[0].mxu0
      %v2043 = vadd.f32 %v1882, %v2042
      %v2044 = vpop.f32.mrb[0].mxu0
      %2045 = vmatprep.mubr.bf16.mxu0 %v1440
      %2046 = vmatmul.mubr.bf16.gmra.mrb[0].mxu0 %v1439
      %v2047 = vpop.f32.mrb[0].mxu0
      %v2048 = vadd.f32 %v1887, %v2047
      %v2049 = vpop.f32.mrb[0].mxu0
      %v2050 = vpop.f32.mrb[0].mxu0
      %v2051 = vadd.f32 %v1890, %v2050
      %v2052 = vpop.f32.mrb[0].mxu0
      %2053 = vmatprep.mubr.bf16.mxu0 %v1448
      %2054 = vmatmul.mubr.bf16.gmra.mrb[0].mxu0 %v1447
      %v2055 = vpop.f32.mrb[0].mxu0
      %v2056 = vadd.f32 %v1895, %v2055
      %v2057 = vpop.f32.mrb[0].mxu0
      %v2058 = vpop.f32.mrb[0].mxu0
      %v2059 = vadd.f32 %v1898, %v2058
      %v2060 = vpop.f32.mrb[0].mxu0
      %2061 = vmatprep.mubr.bf16.mxu0 %v1456
      %2062 = vmatmul.mubr.bf16.gmra.mrb[0].mxu0 %v1455
      %v2063 = vpop.f32.mrb[0].mxu0
      %v2064 = vadd.f32 %v1903, %v2063
      %v2065 = vpop.f32.mrb[0].mxu0
      %v2066 = vpop.f32.mrb[0].mxu0
      %v2067 = vadd.f32 %v1906, %v2066
      %v2068 = vpop.f32.mrb[0].mxu0
      %2069 = vmatprep.mubr.bf16.mxu0 %v1464
      %2070 = vmatmul.mubr.bf16.gmra.mrb[0].mxu0 %v1463
      %v2071 = vpop.f32.mrb[0].mxu0
      %v2072 = vadd.f32 %v1911, %v2071
      %v2073 = vpop.f32.mrb[0].mxu0
      %v2074 = vpop.f32.mrb[0].mxu0
      %v2075 = vadd.f32 %v1914, %v2074
      %v2076 = vpop.f32.mrb[0].mxu0
      %2077 = vmatprep.mubr.bf16.mxu0 %v1472
      %2078 = vmatmul.mubr.bf16.gmra.mrb[0].mxu0 %v1471
      %v2079 = vpop.f32.mrb[0].mxu0
      %v2080 = vadd.f32 %v1919, %v2079
      %v2081 = vpop.f32.mrb[0].mxu0
      %v2082 = vpop.f32.mrb[0].mxu0
      %v2083 = vadd.f32 %v1922, %v2082
      %v2084 = vpop.f32.mrb[0].mxu0
      %2085 = vmatprep.mubr.bf16.mxu0 %v1480
      %2086 = vmatmul.mubr.bf16.gmra.mrb[0].mxu0 %v1479
      %v2087 = vpop.f32.mrb[0].mxu0
      %v2088 = vadd.f32 %v1927, %v2087
      %v2089 = vpop.f32.mrb[0].mxu0
      %v2090 = vpop.f32.mrb[0].mxu0
      %v2091 = vadd.f32 %v1930, %v2090
      %v2092 = vpop.f32.mrb[0].mxu0
      %2093 = vmatprep.mubr.bf16.mxu0 %v1488
      %2094 = vmatmul.mubr.bf16.gmra.mrb[0].mxu0 %v1487
      %v2095 = vpop.f32.mrb[0].mxu0
      %v2096 = vadd.f32 %v1935, %v2095
      %v2097 = vpop.f32.mrb[0].mxu0
      %v2098 = vpop.f32.mrb[0].mxu0
      %v2099 = vadd.f32 %v1938, %v2098
      %v2100 = vpop.f32.mrb[0].mxu0
      %2101 = vmatprep.mubr.bf16.mxu0 %v1496
      %2102 = vmatmul.mubr.bf16.gmra.mrb[0].mxu0 %v1495
      %v2103 = vpop.f32.mrb[0].mxu0
      %v2104 = vadd.f32 %v1943, %v2103
      %v2105 = vpop.f32.mrb[0].mxu0
      %v2106 = vpop.f32.mrb[0].mxu0
      %v2107 = vadd.f32 %v1946, %v2106
      %v2108 = vpop.f32.mrb[0].mxu0
      %2109 = vmatprep.mubr.bf16.mxu0 %v1504
      %2110 = vmatmul.mubr.bf16.gmra.mrb[0].mxu0 %v1503
      %v2111 = vpop.f32.mrb[0].mxu0
      %v2112 = vadd.f32 %v1951, %v2111
      %v2113 = vpop.f32.mrb[0].mxu0
      %v2114 = vpop.f32.mrb[0].mxu0
      %v2115 = vadd.f32 %v1954, %v2114
      %v2116 = vpop.f32.mrb[0].mxu0
      %2117 = vmatprep.mubr.bf16.mxu0 %v1512
      %2118 = vmatmul.mubr.bf16.gmra.mrb[0].mxu0 %v1511
      %v2119 = vpop.f32.mrb[0].mxu0
      %v2120 = vadd.f32 %v1959, %v2119
      %v2121 = vpop.f32.mrb[0].mxu0
      %v2122 = vpop.f32.mrb[0].mxu0
      %v2123 = vadd.f32 %v1962, %v2122
      %v2124 = vpop.f32.mrb[0].mxu0
      %2125 = vmatprep.mubr.bf16.mxu0 %v1520
      %2126 = vmatmul.mubr.bf16.gmra.mrb[0].mxu0 %v1519
      %v2127 = vpop.f32.mrb[0].mxu0
      %v2128 = vadd.f32 %v1967, %v2127
      %v2129 = vpop.f32.mrb[0].mxu0
      %v2130 = vpop.f32.mrb[0].mxu0
      %v2131 = vadd.f32 %v1970, %v2130
      %v2132 = vpop.f32.mrb[0].mxu0
      %2133 = vmatprep.mubr.bf16.mxu0 %v1528
      %2134 = vmatmul.mubr.bf16.gmra.mrb[0].mxu0 %v1527
      %v2135 = vpop.f32.mrb[0].mxu0
      %v2136 = vadd.f32 %v1975, %v2135
      %v2137 = vpop.f32.mrb[0].mxu0
      %v2138 = vpop.f32.mrb[0].mxu0
      %v2139 = vadd.f32 %v1978, %v2138
      %v2140 = vpop.f32.mrb[0].mxu0
      %2141 = vmatprep.mubr.bf16.mxu0 %v1536
      %2142 = vmatmul.mubr.bf16.gmra.mrb[0].mxu0 %v1535
      %v2143 = vpop.f32.mrb[0].mxu0
      %v2144 = vadd.f32 %v1983, %v2143
      %v2145 = vpop.f32.mrb[0].mxu0
      %v2146 = vpop.f32.mrb[0].mxu0
      %v2147 = vadd.f32 %v1986, %v2146
      %v2148 = vpop.f32.mrb[0].mxu0
      %2149 = vmatprep.mubr.bf16.mxu0 %v1544
      %2150 = vmatmul.mubr.bf16.gmra.mrb[0].mxu0 %v1543
      %v2151 = vpop.f32.mrb[0].mxu0
      %v2152 = vadd.f32 %v1991, %v2151
      %v2153 = vpop.f32.mrb[0].mxu0
      %v2154 = vpop.f32.mrb[0].mxu0
      %v2155 = vadd.f32 %v1994, %v2154
      %v2156 = vpop.f32.mrb[0].mxu0
      %2157 = vdwg.mxu0
      %2158 = vmatprep.subr.bf16.mxu0 0
      %2159 = vmatpush1.bf16.msra.mxu0 %v763
      %2160 = vmatprep.subr.bf16.mxu0 0
      %2161 = vmatpush1.bf16.msra.mxu0 %v764
      %2162 = vmatprep.subr.bf16.mxu0 0
      %2163 = vmatpush1.bf16.msra.mxu0 %v765
      %2164 = vmatprep.subr.bf16.mxu0 0
      %2165 = vmatpush1.bf16.msra.mxu0 %v766
      %2166 = vmatprep.subr.bf16.mxu0 0
      %2167 = vmatpush1.bf16.msra.mxu0 %v767
      %2168 = vmatprep.subr.bf16.mxu0 0
      %2169 = vmatpush1.bf16.msra.mxu0 %v768
      %2170 = vmatprep.subr.bf16.mxu0 0
      %2171 = vmatpush1.bf16.msra.mxu0 %v769
      %2172 = vmatprep.subr.bf16.mxu0 0
      %2173 = vmatpush1.bf16.msra.mxu0 %v770
      %2174 = vmatprep.subr.bf16.mxu0 0
      %2175 = vmatpush1.bf16.msra.mxu0 %v771
      %2176 = vmatprep.subr.bf16.mxu0 0
      %2177 = vmatpush1.bf16.msra.mxu0 %v772
      %2178 = vmatprep.subr.bf16.mxu0 0
      %2179 = vmatpush1.bf16.msra.mxu0 %v773
      %2180 = vmatprep.subr.bf16.mxu0 0
      %2181 = vmatpush1.bf16.msra.mxu0 %v774
      %2182 = vmatprep.subr.bf16.mxu0 0
      %2183 = vmatpush1.bf16.msra.mxu0 %v775
      %2184 = vmatprep.subr.bf16.mxu0 0
      %2185 = vmatpush1.bf16.msra.mxu0 %v776
      %2186 = vmatprep.subr.bf16.mxu0 0
      %2187 = vmatpush1.bf16.msra.mxu0 %v777
      %2188 = vmatprep.subr.bf16.mxu0 0
      %2189 = vmatpush1.bf16.msra.mxu0 %v778
      %2190 = vmatprep.mubr.bf16.mxu0 %v1426
      %2191 = vmatmul.mubr.bf16.gmra.mrb[0].mxu0 %v1425
      %v2192 = vpop.f32.mrb[0].mxu0
      %v2193 = vadd.f32 %v2032, %v2192
      %v2194 = vpop.f32.mrb[0].mxu0
      %v2195 = vpop.f32.mrb[0].mxu0
      %v2196 = vadd.f32 %v2035, %v2195
      %v2197 = vpop.f32.mrb[0].mxu0
      %2198 = vmatprep.mubr.bf16.mxu0 %v1434
      %2199 = vmatmul.mubr.bf16.gmra.mrb[0].mxu0 %v1433
      %v2200 = vpop.f32.mrb[0].mxu0
      %v2201 = vadd.f32 %v2040, %v2200
      %v2202 = vpop.f32.mrb[0].mxu0
      %v2203 = vpop.f32.mrb[0].mxu0
      %v2204 = vadd.f32 %v2043, %v2203
      %v2205 = vpop.f32.mrb[0].mxu0
      %2206 = vmatprep.mubr.bf16.mxu0 %v1442
      %2207 = vmatmul.mubr.bf16.gmra.mrb[0].mxu0 %v1441
      %v2208 = vpop.f32.mrb[0].mxu0
      %v2209 = vadd.f32 %v2048, %v2208
      %v2210 = vpop.f32.mrb[0].mxu0
      %v2211 = vpop.f32.mrb[0].mxu0
      %v2212 = vadd.f32 %v2051, %v2211
      %v2213 = vpop.f32.mrb[0].mxu0
      %2214 = vmatprep.mubr.bf16.mxu0 %v1450
      %2215 = vmatmul.mubr.bf16.gmra.mrb[0].mxu0 %v1449
      %v2216 = vpop.f32.mrb[0].mxu0
      %v2217 = vadd.f32 %v2056, %v2216
      %v2218 = vpop.f32.mrb[0].mxu0
      %v2219 = vpop.f32.mrb[0].mxu0
      %v2220 = vadd.f32 %v2059, %v2219
      %v2221 = vpop.f32.mrb[0].mxu0
      %2222 = vmatprep.mubr.bf16.mxu0 %v1458
      %2223 = vmatmul.mubr.bf16.gmra.mrb[0].mxu0 %v1457
      %v2224 = vpop.f32.mrb[0].mxu0
      %v2225 = vadd.f32 %v2064, %v2224
      %v2226 = vpop.f32.mrb[0].mxu0
      %v2227 = vpop.f32.mrb[0].mxu0
      %v2228 = vadd.f32 %v2067, %v2227
      %v2229 = vpop.f32.mrb[0].mxu0
      %2230 = vmatprep.mubr.bf16.mxu0 %v1466
      %2231 = vmatmul.mubr.bf16.gmra.mrb[0].mxu0 %v1465
      %v2232 = vpop.f32.mrb[0].mxu0
      %v2233 = vadd.f32 %v2072, %v2232
      %v2234 = vpop.f32.mrb[0].mxu0
      %v2235 = vpop.f32.mrb[0].mxu0
      %v2236 = vadd.f32 %v2075, %v2235
      %v2237 = vpop.f32.mrb[0].mxu0
      %2238 = vmatprep.mubr.bf16.mxu0 %v1474
      %2239 = vmatmul.mubr.bf16.gmra.mrb[0].mxu0 %v1473
      %v2240 = vpop.f32.mrb[0].mxu0
      %v2241 = vadd.f32 %v2080, %v2240
      %v2242 = vpop.f32.mrb[0].mxu0
      %v2243 = vpop.f32.mrb[0].mxu0
      %v2244 = vadd.f32 %v2083, %v2243
      %v2245 = vpop.f32.mrb[0].mxu0
      %2246 = vmatprep.mubr.bf16.mxu0 %v1482
      %2247 = vmatmul.mubr.bf16.gmra.mrb[0].mxu0 %v1481
      %v2248 = vpop.f32.mrb[0].mxu0
      %v2249 = vadd.f32 %v2088, %v2248
      %v2250 = vpop.f32.mrb[0].mxu0
      %v2251 = vpop.f32.mrb[0].mxu0
      %v2252 = vadd.f32 %v2091, %v2251
      %v2253 = vpop.f32.mrb[0].mxu0
      %2254 = vmatprep.mubr.bf16.mxu0 %v1490
      %2255 = vmatmul.mubr.bf16.gmra.mrb[0].mxu0 %v1489
      %v2256 = vpop.f32.mrb[0].mxu0
      %v2257 = vadd.f32 %v2096, %v2256
      %v2258 = vpop.f32.mrb[0].mxu0
      %v2259 = vpop.f32.mrb[0].mxu0
      %v2260 = vadd.f32 %v2099, %v2259
      %v2261 = vpop.f32.mrb[0].mxu0
      %2262 = vmatprep.mubr.bf16.mxu0 %v1498
      %2263 = vmatmul.mubr.bf16.gmra.mrb[0].mxu0 %v1497
      %v2264 = vpop.f32.mrb[0].mxu0
      %v2265 = vadd.f32 %v2104, %v2264
      %v2266 = vpop.f32.mrb[0].mxu0
      %v2267 = vpop.f32.mrb[0].mxu0
      %v2268 = vadd.f32 %v2107, %v2267
      %v2269 = vpop.f32.mrb[0].mxu0
      %2270 = vmatprep.mubr.bf16.mxu0 %v1506
      %2271 = vmatmul.mubr.bf16.gmra.mrb[0].mxu0 %v1505
      %v2272 = vpop.f32.mrb[0].mxu0
      %v2273 = vadd.f32 %v2112, %v2272
      %v2274 = vpop.f32.mrb[0].mxu0
      %v2275 = vpop.f32.mrb[0].mxu0
      %v2276 = vadd.f32 %v2115, %v2275
      %v2277 = vpop.f32.mrb[0].mxu0
      %2278 = vmatprep.mubr.bf16.mxu0 %v1514
      %2279 = vmatmul.mubr.bf16.gmra.mrb[0].mxu0 %v1513
      %v2280 = vpop.f32.mrb[0].mxu0
      %v2281 = vadd.f32 %v2120, %v2280
      %v2282 = vpop.f32.mrb[0].mxu0
      %v2283 = vpop.f32.mrb[0].mxu0
      %v2284 = vadd.f32 %v2123, %v2283
      %v2285 = vpop.f32.mrb[0].mxu0
      %2286 = vmatprep.mubr.bf16.mxu0 %v1522
      %2287 = vmatmul.mubr.bf16.gmra.mrb[0].mxu0 %v1521
      %v2288 = vpop.f32.mrb[0].mxu0
      %v2289 = vadd.f32 %v2128, %v2288
      %v2290 = vpop.f32.mrb[0].mxu0
      %v2291 = vpop.f32.mrb[0].mxu0
      %v2292 = vadd.f32 %v2131, %v2291
      %v2293 = vpop.f32.mrb[0].mxu0
      %2294 = vmatprep.mubr.bf16.mxu0 %v1530
      %2295 = vmatmul.mubr.bf16.gmra.mrb[0].mxu0 %v1529
      %v2296 = vpop.f32.mrb[0].mxu0
      %v2297 = vadd.f32 %v2136, %v2296
      %v2298 = vpop.f32.mrb[0].mxu0
      %v2299 = vpop.f32.mrb[0].mxu0
      %v2300 = vadd.f32 %v2139, %v2299
      %v2301 = vpop.f32.mrb[0].mxu0
      %2302 = vmatprep.mubr.bf16.mxu0 %v1538
      %2303 = vmatmul.mubr.bf16.gmra.mrb[0].mxu0 %v1537
      %v2304 = vpop.f32.mrb[0].mxu0
      %v2305 = vadd.f32 %v2144, %v2304
      %v2306 = vpop.f32.mrb[0].mxu0
      %v2307 = vpop.f32.mrb[0].mxu0
      %v2308 = vadd.f32 %v2147, %v2307
      %v2309 = vpop.f32.mrb[0].mxu0
      %2310 = vmatprep.mubr.bf16.mxu0 %v1546
      %2311 = vmatmul.mubr.bf16.gmra.mrb[0].mxu0 %v1545
      %v2312 = vpop.f32.mrb[0].mxu0
      %v2313 = vadd.f32 %v2152, %v2312
      %v2314 = vpop.f32.mrb[0].mxu0
      %v2315 = vpop.f32.mrb[0].mxu0
      %v2316 = vadd.f32 %v2155, %v2315
      %v2317 = vpop.f32.mrb[0].mxu0
      %2318 = vdwg.mxu0
      %v2447 = vunpack.c.l.b16 %v779
      %v2448 = vunpack.c.h.b16 %v779
      %v2449 = vunpack.c.l.b16 %v780
      %v2450 = vunpack.c.h.b16 %v780
      %v2451 = vunpack.c.l.b16 %v781
      %v2452 = vunpack.c.h.b16 %v781
      %v2453 = vunpack.c.l.b16 %v782
      %v2454 = vunpack.c.h.b16 %v782
      %v2455 = vunpack.c.l.b16 %v783
      %v2456 = vunpack.c.h.b16 %v783
      %v2457 = vunpack.c.l.b16 %v784
      %v2458 = vunpack.c.h.b16 %v784
      %v2459 = vunpack.c.l.b16 %v785
      %v2460 = vunpack.c.h.b16 %v785
      %v2461 = vunpack.c.l.b16 %v786
      %v2462 = vunpack.c.h.b16 %v786
      %v2463 = vunpack.c.l.b16 %v787
      %v2464 = vunpack.c.h.b16 %v787
      %v2465 = vunpack.c.l.b16 %v788
      %v2466 = vunpack.c.h.b16 %v788
      %v2467 = vunpack.c.l.b16 %v789
      %v2468 = vunpack.c.h.b16 %v789
      %v2469 = vunpack.c.l.b16 %v790
      %v2470 = vunpack.c.h.b16 %v790
      %v2471 = vunpack.c.l.b16 %v791
      %v2472 = vunpack.c.h.b16 %v791
      %v2473 = vunpack.c.l.b16 %v792
      %v2474 = vunpack.c.h.b16 %v792
      %v2475 = vunpack.c.l.b16 %v793
      %v2476 = vunpack.c.h.b16 %v793
      %v2477 = vunpack.c.l.b16 %v794
      %v2478 = vunpack.c.h.b16 %v794
      %v2479 = vunpack.c.l.b16 %v795
      %v2480 = vunpack.c.h.b16 %v795
      %v2481 = vunpack.c.l.b16 %v796
      %v2482 = vunpack.c.h.b16 %v796
      %v2483 = vunpack.c.l.b16 %v797
      %v2484 = vunpack.c.h.b16 %v797
      %v2485 = vunpack.c.l.b16 %v798
      %v2486 = vunpack.c.h.b16 %v798
      %v2487 = vunpack.c.l.b16 %v799
      %v2488 = vunpack.c.h.b16 %v799
      %v2489 = vunpack.c.l.b16 %v800
      %v2490 = vunpack.c.h.b16 %v800
      %v2491 = vunpack.c.l.b16 %v801
      %v2492 = vunpack.c.h.b16 %v801
      %v2493 = vunpack.c.l.b16 %v802
      %v2494 = vunpack.c.h.b16 %v802
      %v2495 = vunpack.c.l.b16 %v803
      %v2496 = vunpack.c.h.b16 %v803
      %v2497 = vunpack.c.l.b16 %v804
      %v2498 = vunpack.c.h.b16 %v804
      %v2499 = vunpack.c.l.b16 %v805
      %v2500 = vunpack.c.h.b16 %v805
      %v2501 = vunpack.c.l.b16 %v806
      %v2502 = vunpack.c.h.b16 %v806
      %v2503 = vunpack.c.l.b16 %v807
      %v2504 = vunpack.c.h.b16 %v807
      %v2505 = vunpack.c.l.b16 %v808
      %v2506 = vunpack.c.h.b16 %v808
      %v2507 = vunpack.c.l.b16 %v809
      %v2508 = vunpack.c.h.b16 %v809
      %v2509 = vunpack.c.l.b16 %v810
      %v2510 = vunpack.c.h.b16 %v810
      %v2511 = vunpack.c.l.b16 %v811
      %v2512 = vunpack.c.h.b16 %v811
      %v2513 = vunpack.c.l.b16 %v812
      %v2514 = vunpack.c.h.b16 %v812
      %v2515 = vunpack.c.l.b16 %v813
      %v2516 = vunpack.c.h.b16 %v813
      %v2517 = vunpack.c.l.b16 %v814
      %v2518 = vunpack.c.h.b16 %v814
      %v2519 = vunpack.c.l.b16 %v815
      %v2520 = vunpack.c.h.b16 %v815
      %v2521 = vunpack.c.l.b16 %v816
      %v2522 = vunpack.c.h.b16 %v816
      %v2523 = vunpack.c.l.b16 %v817
      %v2524 = vunpack.c.h.b16 %v817
      %v2525 = vunpack.c.l.b16 %v818
      %v2526 = vunpack.c.h.b16 %v818
      %v2527 = vunpack.c.l.b16 %v819
      %v2528 = vunpack.c.h.b16 %v819
      %v2529 = vunpack.c.l.b16 %v820
      %v2530 = vunpack.c.h.b16 %v820
      %v2531 = vunpack.c.l.b16 %v821
      %v2532 = vunpack.c.h.b16 %v821
      %v2533 = vunpack.c.l.b16 %v822
      %v2534 = vunpack.c.h.b16 %v822
      %v2535 = vunpack.c.l.b16 %v823
      %v2536 = vunpack.c.h.b16 %v823
      %v2537 = vunpack.c.l.b16 %v824
      %v2538 = vunpack.c.h.b16 %v824
      %v2539 = vunpack.c.l.b16 %v825
      %v2540 = vunpack.c.h.b16 %v825
      %v2541 = vunpack.c.l.b16 %v826
      %v2542 = vunpack.c.h.b16 %v826
      %v2543 = vunpack.c.l.b16 %v827
      %v2544 = vunpack.c.h.b16 %v827
      %v2545 = vunpack.c.l.b16 %v828
      %v2546 = vunpack.c.h.b16 %v828
      %v2547 = vunpack.c.l.b16 %v829
      %v2548 = vunpack.c.h.b16 %v829
      %v2549 = vunpack.c.l.b16 %v830
      %v2550 = vunpack.c.h.b16 %v830
      %v2551 = vunpack.c.l.b16 %v831
      %v2552 = vunpack.c.h.b16 %v831
      %v2553 = vunpack.c.l.b16 %v832
      %v2554 = vunpack.c.h.b16 %v832
      %v2555 = vunpack.c.l.b16 %v833
      %v2556 = vunpack.c.h.b16 %v833
      %v2557 = vunpack.c.l.b16 %v834
      %v2558 = vunpack.c.h.b16 %v834
      %v2559 = vunpack.c.l.b16 %v835
      %v2560 = vunpack.c.h.b16 %v835
      %v2561 = vunpack.c.l.b16 %v836
      %v2562 = vunpack.c.h.b16 %v836
      %v2563 = vunpack.c.l.b16 %v837
      %v2564 = vunpack.c.h.b16 %v837
      %v2565 = vunpack.c.l.b16 %v838
      %v2566 = vunpack.c.h.b16 %v838
      %v2567 = vunpack.c.l.b16 %v839
      %v2568 = vunpack.c.h.b16 %v839
      %v2569 = vunpack.c.l.b16 %v840
      %v2570 = vunpack.c.h.b16 %v840
      %v2571 = vunpack.c.l.b16 %v841
      %v2572 = vunpack.c.h.b16 %v841
      %v2573 = vunpack.c.l.b16 %v842
      %v2574 = vunpack.c.h.b16 %v842
      %v2575 = vunpack.c.l.b16 %v843
      %v2576 = vunpack.c.h.b16 %v843
      %v2577 = vunpack.c.l.b16 %v844
      %v2578 = vunpack.c.h.b16 %v844
      %v2579 = vunpack.c.l.b16 %v845
      %v2580 = vunpack.c.h.b16 %v845
      %v2581 = vunpack.c.l.b16 %v846
      %v2582 = vunpack.c.h.b16 %v846
      %v2583 = vunpack.c.l.b16 %v847
      %v2584 = vunpack.c.h.b16 %v847
      %v2585 = vunpack.c.l.b16 %v848
      %v2586 = vunpack.c.h.b16 %v848
      %v2587 = vunpack.c.l.b16 %v849
      %v2588 = vunpack.c.h.b16 %v849
      %v2589 = vunpack.c.l.b16 %v850
      %v2590 = vunpack.c.h.b16 %v850
      %v2591 = vunpack.c.l.b16 %v851
      %v2592 = vunpack.c.h.b16 %v851
      %v2593 = vunpack.c.l.b16 %v852
      %v2594 = vunpack.c.h.b16 %v852
      %v2595 = vunpack.c.l.b16 %v853
      %v2596 = vunpack.c.h.b16 %v853
      %v2597 = vunpack.c.l.b16 %v854
      %v2598 = vunpack.c.h.b16 %v854
      %v2599 = vunpack.c.l.b16 %v855
      %v2600 = vunpack.c.h.b16 %v855
      %v2601 = vunpack.c.l.b16 %v856
      %v2602 = vunpack.c.h.b16 %v856
      %v2603 = vunpack.c.l.b16 %v857
      %v2604 = vunpack.c.h.b16 %v857
      %v2605 = vunpack.c.l.b16 %v858
      %v2606 = vunpack.c.h.b16 %v858
      %v2607 = vunpack.c.l.b16 %v859
      %v2608 = vunpack.c.h.b16 %v859
      %v2609 = vunpack.c.l.b16 %v860
      %v2610 = vunpack.c.h.b16 %v860
      %v2611 = vunpack.c.l.b16 %v861
      %v2612 = vunpack.c.h.b16 %v861
      %v2613 = vunpack.c.l.b16 %v862
      %v2614 = vunpack.c.h.b16 %v862
      %v2615 = vunpack.c.l.b16 %v863
      %v2616 = vunpack.c.h.b16 %v863
      %v2617 = vunpack.c.l.b16 %v864
      %v2618 = vunpack.c.h.b16 %v864
      %v2619 = vunpack.c.l.b16 %v865
      %v2620 = vunpack.c.h.b16 %v865
      %v2621 = vunpack.c.l.b16 %v866
      %v2622 = vunpack.c.h.b16 %v866
      %v2623 = vunpack.c.l.b16 %v867
      %v2624 = vunpack.c.h.b16 %v867
      %v2625 = vunpack.c.l.b16 %v868
      %v2626 = vunpack.c.h.b16 %v868
      %v2627 = vunpack.c.l.b16 %v869
      %v2628 = vunpack.c.h.b16 %v869
      %v2629 = vunpack.c.l.b16 %v870
      %v2630 = vunpack.c.h.b16 %v870
      %v2631 = vunpack.c.l.b16 %v871
      %v2632 = vunpack.c.h.b16 %v871
      %v2633 = vunpack.c.l.b16 %v872
      %v2634 = vunpack.c.h.b16 %v872
      %v2635 = vunpack.c.l.b16 %v873
      %v2636 = vunpack.c.h.b16 %v873
      %v2637 = vunpack.c.l.b16 %v874
      %v2638 = vunpack.c.h.b16 %v874
      %v2639 = vunpack.c.l.b16 %v875
      %v2640 = vunpack.c.h.b16 %v875
      %v2641 = vunpack.c.l.b16 %v876
      %v2642 = vunpack.c.h.b16 %v876
      %v2643 = vunpack.c.l.b16 %v877
      %v2644 = vunpack.c.h.b16 %v877
      %v2645 = vunpack.c.l.b16 %v878
      %v2646 = vunpack.c.h.b16 %v878
      %v2647 = vunpack.c.l.b16 %v879
      %v2648 = vunpack.c.h.b16 %v879
      %v2649 = vunpack.c.l.b16 %v880
      %v2650 = vunpack.c.h.b16 %v880
      %v2651 = vunpack.c.l.b16 %v881
      %v2652 = vunpack.c.h.b16 %v881
      %v2653 = vunpack.c.l.b16 %v882
      %v2654 = vunpack.c.h.b16 %v882
      %v2655 = vunpack.c.l.b16 %v883
      %v2656 = vunpack.c.h.b16 %v883
      %v2657 = vunpack.c.l.b16 %v884
      %v2658 = vunpack.c.h.b16 %v884
      %v2659 = vunpack.c.l.b16 %v885
      %v2660 = vunpack.c.h.b16 %v885
      %v2661 = vunpack.c.l.b16 %v886
      %v2662 = vunpack.c.h.b16 %v886
      %v2663 = vunpack.c.l.b16 %v887
      %v2664 = vunpack.c.h.b16 %v887
      %v2665 = vunpack.c.l.b16 %v888
      %v2666 = vunpack.c.h.b16 %v888
      %v2667 = vunpack.c.l.b16 %v889
      %v2668 = vunpack.c.h.b16 %v889
      %v2669 = vunpack.c.l.b16 %v890
      %v2670 = vunpack.c.h.b16 %v890
      %v2671 = vunpack.c.l.b16 %v891
      %v2672 = vunpack.c.h.b16 %v891
      %v2673 = vunpack.c.l.b16 %v892
      %v2674 = vunpack.c.h.b16 %v892
      %v2675 = vunpack.c.l.b16 %v893
      %v2676 = vunpack.c.h.b16 %v893
      %v2677 = vunpack.c.l.b16 %v894
      %v2678 = vunpack.c.h.b16 %v894
      %v2679 = vunpack.c.l.b16 %v895
      %v2680 = vunpack.c.h.b16 %v895
      %v2681 = vunpack.c.l.b16 %v896
      %v2682 = vunpack.c.h.b16 %v896
      %v2683 = vunpack.c.l.b16 %v897
      %v2684 = vunpack.c.h.b16 %v897
      %v2685 = vunpack.c.l.b16 %v898
      %v2686 = vunpack.c.h.b16 %v898
      %v2687 = vunpack.c.l.b16 %v899
      %v2688 = vunpack.c.h.b16 %v899
      %v2689 = vunpack.c.l.b16 %v900
      %v2690 = vunpack.c.h.b16 %v900
      %v2691 = vunpack.c.l.b16 %v901
      %v2692 = vunpack.c.h.b16 %v901
      %v2693 = vunpack.c.l.b16 %v902
      %v2694 = vunpack.c.h.b16 %v902
      %v2695 = vunpack.c.l.b16 %v903
      %v2696 = vunpack.c.h.b16 %v903
      %v2697 = vunpack.c.l.b16 %v904
      %v2698 = vunpack.c.h.b16 %v904
      %v2699 = vunpack.c.l.b16 %v905
      %v2700 = vunpack.c.h.b16 %v905
      %v2701 = vunpack.c.l.b16 %v906
      %v2702 = vunpack.c.h.b16 %v906
      %v2703 = vpack.c.b16 %v2455, %v2447
      %v2704 = vpack.c.b16 %v2456, %v2448
      %v2705 = vpack.c.b16 %v2457, %v2449
      %v2706 = vpack.c.b16 %v2458, %v2450
      %v2707 = vpack.c.b16 %v2459, %v2451
      %v2708 = vpack.c.b16 %v2460, %v2452
      %v2709 = vpack.c.b16 %v2461, %v2453
      %v2710 = vpack.c.b16 %v2462, %v2454
      %v2711 = vpack.c.b16 %v2471, %v2463
      %v2712 = vpack.c.b16 %v2472, %v2464
      %v2713 = vpack.c.b16 %v2473, %v2465
      %v2714 = vpack.c.b16 %v2474, %v2466
      %v2715 = vpack.c.b16 %v2475, %v2467
      %v2716 = vpack.c.b16 %v2476, %v2468
      %v2717 = vpack.c.b16 %v2477, %v2469
      %v2718 = vpack.c.b16 %v2478, %v2470
      %v2719 = vpack.c.b16 %v2487, %v2479
      %v2720 = vpack.c.b16 %v2488, %v2480
      %v2721 = vpack.c.b16 %v2489, %v2481
      %v2722 = vpack.c.b16 %v2490, %v2482
      %v2723 = vpack.c.b16 %v2491, %v2483
      %v2724 = vpack.c.b16 %v2492, %v2484
      %v2725 = vpack.c.b16 %v2493, %v2485
      %v2726 = vpack.c.b16 %v2494, %v2486
      %v2727 = vpack.c.b16 %v2503, %v2495
      %v2728 = vpack.c.b16 %v2504, %v2496
      %v2729 = vpack.c.b16 %v2505, %v2497
      %v2730 = vpack.c.b16 %v2506, %v2498
      %v2731 = vpack.c.b16 %v2507, %v2499
      %v2732 = vpack.c.b16 %v2508, %v2500
      %v2733 = vpack.c.b16 %v2509, %v2501
      %v2734 = vpack.c.b16 %v2510, %v2502
      %v2735 = vpack.c.b16 %v2519, %v2511
      %v2736 = vpack.c.b16 %v2520, %v2512
      %v2737 = vpack.c.b16 %v2521, %v2513
      %v2738 = vpack.c.b16 %v2522, %v2514
      %v2739 = vpack.c.b16 %v2523, %v2515
      %v2740 = vpack.c.b16 %v2524, %v2516
      %v2741 = vpack.c.b16 %v2525, %v2517
      %v2742 = vpack.c.b16 %v2526, %v2518
      %v2743 = vpack.c.b16 %v2535, %v2527
      %v2744 = vpack.c.b16 %v2536, %v2528
      %v2745 = vpack.c.b16 %v2537, %v2529
      %v2746 = vpack.c.b16 %v2538, %v2530
      %v2747 = vpack.c.b16 %v2539, %v2531
      %v2748 = vpack.c.b16 %v2540, %v2532
      %v2749 = vpack.c.b16 %v2541, %v2533
      %v2750 = vpack.c.b16 %v2542, %v2534
      %v2751 = vpack.c.b16 %v2551, %v2543
      %v2752 = vpack.c.b16 %v2552, %v2544
      %v2753 = vpack.c.b16 %v2553, %v2545
      %v2754 = vpack.c.b16 %v2554, %v2546
      %v2755 = vpack.c.b16 %v2555, %v2547
      %v2756 = vpack.c.b16 %v2556, %v2548
      %v2757 = vpack.c.b16 %v2557, %v2549
      %v2758 = vpack.c.b16 %v2558, %v2550
      %v2759 = vpack.c.b16 %v2567, %v2559
      %v2760 = vpack.c.b16 %v2568, %v2560
      %v2761 = vpack.c.b16 %v2569, %v2561
      %v2762 = vpack.c.b16 %v2570, %v2562
      %v2763 = vpack.c.b16 %v2571, %v2563
      %v2764 = vpack.c.b16 %v2572, %v2564
      %v2765 = vpack.c.b16 %v2573, %v2565
      %v2766 = vpack.c.b16 %v2574, %v2566
      %v2767 = vpack.c.b16 %v2583, %v2575
      %v2768 = vpack.c.b16 %v2584, %v2576
      %v2769 = vpack.c.b16 %v2585, %v2577
      %v2770 = vpack.c.b16 %v2586, %v2578
      %v2771 = vpack.c.b16 %v2587, %v2579
      %v2772 = vpack.c.b16 %v2588, %v2580
      %v2773 = vpack.c.b16 %v2589, %v2581
      %v2774 = vpack.c.b16 %v2590, %v2582
      %v2775 = vpack.c.b16 %v2599, %v2591
      %v2776 = vpack.c.b16 %v2600, %v2592
      %v2777 = vpack.c.b16 %v2601, %v2593
      %v2778 = vpack.c.b16 %v2602, %v2594
      %v2779 = vpack.c.b16 %v2603, %v2595
      %v2780 = vpack.c.b16 %v2604, %v2596
      %v2781 = vpack.c.b16 %v2605, %v2597
      %v2782 = vpack.c.b16 %v2606, %v2598
      %v2783 = vpack.c.b16 %v2615, %v2607
      %v2784 = vpack.c.b16 %v2616, %v2608
      %v2785 = vpack.c.b16 %v2617, %v2609
      %v2786 = vpack.c.b16 %v2618, %v2610
      %v2787 = vpack.c.b16 %v2619, %v2611
      %v2788 = vpack.c.b16 %v2620, %v2612
      %v2789 = vpack.c.b16 %v2621, %v2613
      %v2790 = vpack.c.b16 %v2622, %v2614
      %v2791 = vpack.c.b16 %v2631, %v2623
      %v2792 = vpack.c.b16 %v2632, %v2624
      %v2793 = vpack.c.b16 %v2633, %v2625
      %v2794 = vpack.c.b16 %v2634, %v2626
      %v2795 = vpack.c.b16 %v2635, %v2627
      %v2796 = vpack.c.b16 %v2636, %v2628
      %v2797 = vpack.c.b16 %v2637, %v2629
      %v2798 = vpack.c.b16 %v2638, %v2630
      %v2799 = vpack.c.b16 %v2647, %v2639
      %v2800 = vpack.c.b16 %v2648, %v2640
      %v2801 = vpack.c.b16 %v2649, %v2641
      %v2802 = vpack.c.b16 %v2650, %v2642
      %v2803 = vpack.c.b16 %v2651, %v2643
      %v2804 = vpack.c.b16 %v2652, %v2644
      %v2805 = vpack.c.b16 %v2653, %v2645
      %v2806 = vpack.c.b16 %v2654, %v2646
      %v2807 = vpack.c.b16 %v2663, %v2655
      %v2808 = vpack.c.b16 %v2664, %v2656
      %v2809 = vpack.c.b16 %v2665, %v2657
      %v2810 = vpack.c.b16 %v2666, %v2658
      %v2811 = vpack.c.b16 %v2667, %v2659
      %v2812 = vpack.c.b16 %v2668, %v2660
      %v2813 = vpack.c.b16 %v2669, %v2661
      %v2814 = vpack.c.b16 %v2670, %v2662
      %v2815 = vpack.c.b16 %v2679, %v2671
      %v2816 = vpack.c.b16 %v2680, %v2672
      %v2817 = vpack.c.b16 %v2681, %v2673
      %v2818 = vpack.c.b16 %v2682, %v2674
      %v2819 = vpack.c.b16 %v2683, %v2675
      %v2820 = vpack.c.b16 %v2684, %v2676
      %v2821 = vpack.c.b16 %v2685, %v2677
      %v2822 = vpack.c.b16 %v2686, %v2678
      %v2823 = vpack.c.b16 %v2695, %v2687
      %v2824 = vpack.c.b16 %v2696, %v2688
      %v2825 = vpack.c.b16 %v2697, %v2689
      %v2826 = vpack.c.b16 %v2698, %v2690
      %v2827 = vpack.c.b16 %v2699, %v2691
      %v2828 = vpack.c.b16 %v2700, %v2692
      %v2829 = vpack.c.b16 %v2701, %v2693
      %v2830 = vpack.c.b16 %v2702, %v2694
      %2959 = vmatprep.subr.bf16.mxu0 0
      %2960 = vmatpush1.bf16.msra.mxu0 %v715
      %2961 = vmatprep.subr.bf16.mxu0 0
      %2962 = vmatpush1.bf16.msra.mxu0 %v716
      %2963 = vmatprep.subr.bf16.mxu0 0
      %2964 = vmatpush1.bf16.msra.mxu0 %v717
      %2965 = vmatprep.subr.bf16.mxu0 0
      %2966 = vmatpush1.bf16.msra.mxu0 %v718
      %2967 = vmatprep.subr.bf16.mxu0 0
      %2968 = vmatpush1.bf16.msra.mxu0 %v719
      %2969 = vmatprep.subr.bf16.mxu0 0
      %2970 = vmatpush1.bf16.msra.mxu0 %v720
      %2971 = vmatprep.subr.bf16.mxu0 0
      %2972 = vmatpush1.bf16.msra.mxu0 %v721
      %2973 = vmatprep.subr.bf16.mxu0 0
      %2974 = vmatpush1.bf16.msra.mxu0 %v722
      %2975 = vmatprep.subr.bf16.mxu0 0
      %2976 = vmatpush1.bf16.msra.mxu0 %v723
      %2977 = vmatprep.subr.bf16.mxu0 0
      %2978 = vmatpush1.bf16.msra.mxu0 %v724
      %2979 = vmatprep.subr.bf16.mxu0 0
      %2980 = vmatpush1.bf16.msra.mxu0 %v725
      %2981 = vmatprep.subr.bf16.mxu0 0
      %2982 = vmatpush1.bf16.msra.mxu0 %v726
      %2983 = vmatprep.subr.bf16.mxu0 0
      %2984 = vmatpush1.bf16.msra.mxu0 %v727
      %2985 = vmatprep.subr.bf16.mxu0 0
      %2986 = vmatpush1.bf16.msra.mxu0 %v728
      %2987 = vmatprep.subr.bf16.mxu0 0
      %2988 = vmatpush1.bf16.msra.mxu0 %v729
      %2989 = vmatprep.subr.bf16.mxu0 0
      %2990 = vmatpush1.bf16.msra.mxu0 %v730
      %2991 = vmatprep.mubr.bf16.mxu0 %v2704
      %2992 = vmatmul.mubr.bf16.gmra.mrb[0].mxu0 %v2703
      %v2993 = vpop.f32.mrb[0].mxu0
      %v2994 = vadd.f32 %v2193, %v2993
      %v2995 = vpop.f32.mrb[0].mxu0
      %v2996 = vpop.f32.mrb[0].mxu0
      %v2997 = vadd.f32 %v2196, %v2996
      %v2998 = vpop.f32.mrb[0].mxu0
      %2999 = vmatprep.mubr.bf16.mxu0 %v2712
      %3000 = vmatmul.mubr.bf16.gmra.mrb[0].mxu0 %v2711
      %v3001 = vpop.f32.mrb[0].mxu0
      %v3002 = vadd.f32 %v2201, %v3001
      %v3003 = vpop.f32.mrb[0].mxu0
      %v3004 = vpop.f32.mrb[0].mxu0
      %v3005 = vadd.f32 %v2204, %v3004
      %v3006 = vpop.f32.mrb[0].mxu0
      %3007 = vmatprep.mubr.bf16.mxu0 %v2720
      %3008 = vmatmul.mubr.bf16.gmra.mrb[0].mxu0 %v2719
      %v3009 = vpop.f32.mrb[0].mxu0
      %v3010 = vadd.f32 %v2209, %v3009
      %v3011 = vpop.f32.mrb[0].mxu0
      %v3012 = vpop.f32.mrb[0].mxu0
      %v3013 = vadd.f32 %v2212, %v3012
      %v3014 = vpop.f32.mrb[0].mxu0
      %3015 = vmatprep.mubr.bf16.mxu0 %v2728
      %3016 = vmatmul.mubr.bf16.gmra.mrb[0].mxu0 %v2727
      %v3017 = vpop.f32.mrb[0].mxu0
      %v3018 = vadd.f32 %v2217, %v3017
      %v3019 = vpop.f32.mrb[0].mxu0
      %v3020 = vpop.f32.mrb[0].mxu0
      %v3021 = vadd.f32 %v2220, %v3020
      %v3022 = vpop.f32.mrb[0].mxu0
      %3023 = vmatprep.mubr.bf16.mxu0 %v2736
      %3024 = vmatmul.mubr.bf16.gmra.mrb[0].mxu0 %v2735
      %v3025 = vpop.f32.mrb[0].mxu0
      %v3026 = vadd.f32 %v2225, %v3025
      %v3027 = vpop.f32.mrb[0].mxu0
      %v3028 = vpop.f32.mrb[0].mxu0
      %v3029 = vadd.f32 %v2228, %v3028
      %v3030 = vpop.f32.mrb[0].mxu0
      %3031 = vmatprep.mubr.bf16.mxu0 %v2744
      %3032 = vmatmul.mubr.bf16.gmra.mrb[0].mxu0 %v2743
      %v3033 = vpop.f32.mrb[0].mxu0
      %v3034 = vadd.f32 %v2233, %v3033
      %v3035 = vpop.f32.mrb[0].mxu0
      %v3036 = vpop.f32.mrb[0].mxu0
      %v3037 = vadd.f32 %v2236, %v3036
      %v3038 = vpop.f32.mrb[0].mxu0
      %3039 = vmatprep.mubr.bf16.mxu0 %v2752
      %3040 = vmatmul.mubr.bf16.gmra.mrb[0].mxu0 %v2751
      %v3041 = vpop.f32.mrb[0].mxu0
      %v3042 = vadd.f32 %v2241, %v3041
      %v3043 = vpop.f32.mrb[0].mxu0
      %v3044 = vpop.f32.mrb[0].mxu0
      %v3045 = vadd.f32 %v2244, %v3044
      %v3046 = vpop.f32.mrb[0].mxu0
      %3047 = vmatprep.mubr.bf16.mxu0 %v2760
      %3048 = vmatmul.mubr.bf16.gmra.mrb[0].mxu0 %v2759
      %v3049 = vpop.f32.mrb[0].mxu0
      %v3050 = vadd.f32 %v2249, %v3049
      %v3051 = vpop.f32.mrb[0].mxu0
      %v3052 = vpop.f32.mrb[0].mxu0
      %v3053 = vadd.f32 %v2252, %v3052
      %v3054 = vpop.f32.mrb[0].mxu0
      %3055 = vmatprep.mubr.bf16.mxu0 %v2768
      %3056 = vmatmul.mubr.bf16.gmra.mrb[0].mxu0 %v2767
      %v3057 = vpop.f32.mrb[0].mxu0
      %v3058 = vadd.f32 %v2257, %v3057
      %v3059 = vpop.f32.mrb[0].mxu0
      %v3060 = vpop.f32.mrb[0].mxu0
      %v3061 = vadd.f32 %v2260, %v3060
      %v3062 = vpop.f32.mrb[0].mxu0
      %3063 = vmatprep.mubr.bf16.mxu0 %v2776
      %3064 = vmatmul.mubr.bf16.gmra.mrb[0].mxu0 %v2775
      %v3065 = vpop.f32.mrb[0].mxu0
      %v3066 = vadd.f32 %v2265, %v3065
      %v3067 = vpop.f32.mrb[0].mxu0
      %v3068 = vpop.f32.mrb[0].mxu0
      %v3069 = vadd.f32 %v2268, %v3068
      %v3070 = vpop.f32.mrb[0].mxu0
      %3071 = vmatprep.mubr.bf16.mxu0 %v2784
      %3072 = vmatmul.mubr.bf16.gmra.mrb[0].mxu0 %v2783
      %v3073 = vpop.f32.mrb[0].mxu0
      %v3074 = vadd.f32 %v2273, %v3073
      %v3075 = vpop.f32.mrb[0].mxu0
      %v3076 = vpop.f32.mrb[0].mxu0
      %v3077 = vadd.f32 %v2276, %v3076
      %v3078 = vpop.f32.mrb[0].mxu0
      %3079 = vmatprep.mubr.bf16.mxu0 %v2792
      %3080 = vmatmul.mubr.bf16.gmra.mrb[0].mxu0 %v2791
      %v3081 = vpop.f32.mrb[0].mxu0
      %v3082 = vadd.f32 %v2281, %v3081
      %v3083 = vpop.f32.mrb[0].mxu0
      %v3084 = vpop.f32.mrb[0].mxu0
      %v3085 = vadd.f32 %v2284, %v3084
      %v3086 = vpop.f32.mrb[0].mxu0
      %3087 = vmatprep.mubr.bf16.mxu0 %v2800
      %3088 = vmatmul.mubr.bf16.gmra.mrb[0].mxu0 %v2799
      %v3089 = vpop.f32.mrb[0].mxu0
      %v3090 = vadd.f32 %v2289, %v3089
      %v3091 = vpop.f32.mrb[0].mxu0
      %v3092 = vpop.f32.mrb[0].mxu0
      %v3093 = vadd.f32 %v2292, %v3092
      %v3094 = vpop.f32.mrb[0].mxu0
      %3095 = vmatprep.mubr.bf16.mxu0 %v2808
      %3096 = vmatmul.mubr.bf16.gmra.mrb[0].mxu0 %v2807
      %v3097 = vpop.f32.mrb[0].mxu0
      %v3098 = vadd.f32 %v2297, %v3097
      %v3099 = vpop.f32.mrb[0].mxu0
      %v3100 = vpop.f32.mrb[0].mxu0
      %v3101 = vadd.f32 %v2300, %v3100
      %v3102 = vpop.f32.mrb[0].mxu0
      %3103 = vmatprep.mubr.bf16.mxu0 %v2816
      %3104 = vmatmul.mubr.bf16.gmra.mrb[0].mxu0 %v2815
      %v3105 = vpop.f32.mrb[0].mxu0
      %v3106 = vadd.f32 %v2305, %v3105
      %v3107 = vpop.f32.mrb[0].mxu0
      %v3108 = vpop.f32.mrb[0].mxu0
      %v3109 = vadd.f32 %v2308, %v3108
      %v3110 = vpop.f32.mrb[0].mxu0
      %3111 = vmatprep.mubr.bf16.mxu0 %v2824
      %3112 = vmatmul.mubr.bf16.gmra.mrb[0].mxu0 %v2823
      %v3113 = vpop.f32.mrb[0].mxu0
      %v3114 = vadd.f32 %v2313, %v3113
      %v3115 = vpop.f32.mrb[0].mxu0
      %v3116 = vpop.f32.mrb[0].mxu0
      %v3117 = vadd.f32 %v2316, %v3116
      %v3118 = vpop.f32.mrb[0].mxu0
      %3119 = vdwg.mxu0
      %3120 = vmatprep.subr.bf16.mxu0 0
      %3121 = vmatpush1.bf16.msra.mxu0 %v731
      %3122 = vmatprep.subr.bf16.mxu0 0
      %3123 = vmatpush1.bf16.msra.mxu0 %v732
      %3124 = vmatprep.subr.bf16.mxu0 0
      %3125 = vmatpush1.bf16.msra.mxu0 %v733
      %3126 = vmatprep.subr.bf16.mxu0 0
      %3127 = vmatpush1.bf16.msra.mxu0 %v734
      %3128 = vmatprep.subr.bf16.mxu0 0
      %3129 = vmatpush1.bf16.msra.mxu0 %v735
      %3130 = vmatprep.subr.bf16.mxu0 0
      %3131 = vmatpush1.bf16.msra.mxu0 %v736
      %3132 = vmatprep.subr.bf16.mxu0 0
      %3133 = vmatpush1.bf16.msra.mxu0 %v737
      %3134 = vmatprep.subr.bf16.mxu0 0
      %3135 = vmatpush1.bf16.msra.mxu0 %v738
      %3136 = vmatprep.subr.bf16.mxu0 0
      %3137 = vmatpush1.bf16.msra.mxu0 %v739
      %3138 = vmatprep.subr.bf16.mxu0 0
      %3139 = vmatpush1.bf16.msra.mxu0 %v740
      %3140 = vmatprep.subr.bf16.mxu0 0
      %3141 = vmatpush1.bf16.msra.mxu0 %v741
      %3142 = vmatprep.subr.bf16.mxu0 0
      %3143 = vmatpush1.bf16.msra.mxu0 %v742
      %3144 = vmatprep.subr.bf16.mxu0 0
      %3145 = vmatpush1.bf16.msra.mxu0 %v743
      %3146 = vmatprep.subr.bf16.mxu0 0
      %3147 = vmatpush1.bf16.msra.mxu0 %v744
      %3148 = vmatprep.subr.bf16.mxu0 0
      %3149 = vmatpush1.bf16.msra.mxu0 %v745
      %3150 = vmatprep.subr.bf16.mxu0 0
      %3151 = vmatpush1.bf16.msra.mxu0 %v746
      %3152 = vmatprep.mubr.bf16.mxu0 %v2706
      %3153 = vmatmul.mubr.bf16.gmra.mrb[0].mxu0 %v2705
      %v3154 = vpop.f32.mrb[0].mxu0
      %v3155 = vadd.f32 %v2994, %v3154
      %v3156 = vpop.f32.mrb[0].mxu0
      %v3157 = vpop.f32.mrb[0].mxu0
      %v3158 = vadd.f32 %v2997, %v3157
      %v3159 = vpop.f32.mrb[0].mxu0
      %3160 = vmatprep.mubr.bf16.mxu0 %v2714
      %3161 = vmatmul.mubr.bf16.gmra.mrb[0].mxu0 %v2713
      %v3162 = vpop.f32.mrb[0].mxu0
      %v3163 = vadd.f32 %v3002, %v3162
      %v3164 = vpop.f32.mrb[0].mxu0
      %v3165 = vpop.f32.mrb[0].mxu0
      %v3166 = vadd.f32 %v3005, %v3165
      %v3167 = vpop.f32.mrb[0].mxu0
      %3168 = vmatprep.mubr.bf16.mxu0 %v2722
      %3169 = vmatmul.mubr.bf16.gmra.mrb[0].mxu0 %v2721
      %v3170 = vpop.f32.mrb[0].mxu0
      %v3171 = vadd.f32 %v3010, %v3170
      %v3172 = vpop.f32.mrb[0].mxu0
      %v3173 = vpop.f32.mrb[0].mxu0
      %v3174 = vadd.f32 %v3013, %v3173
      %v3175 = vpop.f32.mrb[0].mxu0
      %3176 = vmatprep.mubr.bf16.mxu0 %v2730
      %3177 = vmatmul.mubr.bf16.gmra.mrb[0].mxu0 %v2729
      %v3178 = vpop.f32.mrb[0].mxu0
      %v3179 = vadd.f32 %v3018, %v3178
      %v3180 = vpop.f32.mrb[0].mxu0
      %v3181 = vpop.f32.mrb[0].mxu0
      %v3182 = vadd.f32 %v3021, %v3181
      %v3183 = vpop.f32.mrb[0].mxu0
      %3184 = vmatprep.mubr.bf16.mxu0 %v2738
      %3185 = vmatmul.mubr.bf16.gmra.mrb[0].mxu0 %v2737
      %v3186 = vpop.f32.mrb[0].mxu0
      %v3187 = vadd.f32 %v3026, %v3186
      %v3188 = vpop.f32.mrb[0].mxu0
      %v3189 = vpop.f32.mrb[0].mxu0
      %v3190 = vadd.f32 %v3029, %v3189
      %v3191 = vpop.f32.mrb[0].mxu0
      %3192 = vmatprep.mubr.bf16.mxu0 %v2746
      %3193 = vmatmul.mubr.bf16.gmra.mrb[0].mxu0 %v2745
      %v3194 = vpop.f32.mrb[0].mxu0
      %v3195 = vadd.f32 %v3034, %v3194
      %v3196 = vpop.f32.mrb[0].mxu0
      %v3197 = vpop.f32.mrb[0].mxu0
      %v3198 = vadd.f32 %v3037, %v3197
      %v3199 = vpop.f32.mrb[0].mxu0
      %3200 = vmatprep.mubr.bf16.mxu0 %v2754
      %3201 = vmatmul.mubr.bf16.gmra.mrb[0].mxu0 %v2753
      %v3202 = vpop.f32.mrb[0].mxu0
      %v3203 = vadd.f32 %v3042, %v3202
      %v3204 = vpop.f32.mrb[0].mxu0
      %v3205 = vpop.f32.mrb[0].mxu0
      %v3206 = vadd.f32 %v3045, %v3205
      %v3207 = vpop.f32.mrb[0].mxu0
      %3208 = vmatprep.mubr.bf16.mxu0 %v2762
      %3209 = vmatmul.mubr.bf16.gmra.mrb[0].mxu0 %v2761
      %v3210 = vpop.f32.mrb[0].mxu0
      %v3211 = vadd.f32 %v3050, %v3210
      %v3212 = vpop.f32.mrb[0].mxu0
      %v3213 = vpop.f32.mrb[0].mxu0
      %v3214 = vadd.f32 %v3053, %v3213
      %v3215 = vpop.f32.mrb[0].mxu0
      %3216 = vmatprep.mubr.bf16.mxu0 %v2770
      %3217 = vmatmul.mubr.bf16.gmra.mrb[0].mxu0 %v2769
      %v3218 = vpop.f32.mrb[0].mxu0
      %v3219 = vadd.f32 %v3058, %v3218
      %v3220 = vpop.f32.mrb[0].mxu0
      %v3221 = vpop.f32.mrb[0].mxu0
      %v3222 = vadd.f32 %v3061, %v3221
      %v3223 = vpop.f32.mrb[0].mxu0
      %3224 = vmatprep.mubr.bf16.mxu0 %v2778
      %3225 = vmatmul.mubr.bf16.gmra.mrb[0].mxu0 %v2777
      %v3226 = vpop.f32.mrb[0].mxu0
      %v3227 = vadd.f32 %v3066, %v3226
      %v3228 = vpop.f32.mrb[0].mxu0
      %v3229 = vpop.f32.mrb[0].mxu0
      %v3230 = vadd.f32 %v3069, %v3229
      %v3231 = vpop.f32.mrb[0].mxu0
      %3232 = vmatprep.mubr.bf16.mxu0 %v2786
      %3233 = vmatmul.mubr.bf16.gmra.mrb[0].mxu0 %v2785
      %v3234 = vpop.f32.mrb[0].mxu0
      %v3235 = vadd.f32 %v3074, %v3234
      %v3236 = vpop.f32.mrb[0].mxu0
      %v3237 = vpop.f32.mrb[0].mxu0
      %v3238 = vadd.f32 %v3077, %v3237
      %v3239 = vpop.f32.mrb[0].mxu0
      %3240 = vmatprep.mubr.bf16.mxu0 %v2794
      %3241 = vmatmul.mubr.bf16.gmra.mrb[0].mxu0 %v2793
      %v3242 = vpop.f32.mrb[0].mxu0
      %v3243 = vadd.f32 %v3082, %v3242
      %v3244 = vpop.f32.mrb[0].mxu0
      %v3245 = vpop.f32.mrb[0].mxu0
      %v3246 = vadd.f32 %v3085, %v3245
      %v3247 = vpop.f32.mrb[0].mxu0
      %3248 = vmatprep.mubr.bf16.mxu0 %v2802
      %3249 = vmatmul.mubr.bf16.gmra.mrb[0].mxu0 %v2801
      %v3250 = vpop.f32.mrb[0].mxu0
      %v3251 = vadd.f32 %v3090, %v3250
      %v3252 = vpop.f32.mrb[0].mxu0
      %v3253 = vpop.f32.mrb[0].mxu0
      %v3254 = vadd.f32 %v3093, %v3253
      %v3255 = vpop.f32.mrb[0].mxu0
      %3256 = vmatprep.mubr.bf16.mxu0 %v2810
      %3257 = vmatmul.mubr.bf16.gmra.mrb[0].mxu0 %v2809
      %v3258 = vpop.f32.mrb[0].mxu0
      %v3259 = vadd.f32 %v3098, %v3258
      %v3260 = vpop.f32.mrb[0].mxu0
      %v3261 = vpop.f32.mrb[0].mxu0
      %v3262 = vadd.f32 %v3101, %v3261
      %v3263 = vpop.f32.mrb[0].mxu0
      %3264 = vmatprep.mubr.bf16.mxu0 %v2818
      %3265 = vmatmul.mubr.bf16.gmra.mrb[0].mxu0 %v2817
      %v3266 = vpop.f32.mrb[0].mxu0
      %v3267 = vadd.f32 %v3106, %v3266
      %v3268 = vpop.f32.mrb[0].mxu0
      %v3269 = vpop.f32.mrb[0].mxu0
      %v3270 = vadd.f32 %v3109, %v3269
      %v3271 = vpop.f32.mrb[0].mxu0
      %3272 = vmatprep.mubr.bf16.mxu0 %v2826
      %3273 = vmatmul.mubr.bf16.gmra.mrb[0].mxu0 %v2825
      %v3274 = vpop.f32.mrb[0].mxu0
      %v3275 = vadd.f32 %v3114, %v3274
      %v3276 = vpop.f32.mrb[0].mxu0
      %v3277 = vpop.f32.mrb[0].mxu0
      %v3278 = vadd.f32 %v3117, %v3277
      %v3279 = vpop.f32.mrb[0].mxu0
      %3280 = vdwg.mxu0
      %3281 = vmatprep.subr.bf16.mxu0 0
      %3282 = vmatpush1.bf16.msra.mxu0 %v747
      %3283 = vmatprep.subr.bf16.mxu0 0
      %3284 = vmatpush1.bf16.msra.mxu0 %v748
      %3285 = vmatprep.subr.bf16.mxu0 0
      %3286 = vmatpush1.bf16.msra.mxu0 %v749
      %3287 = vmatprep.subr.bf16.mxu0 0
      %3288 = vmatpush1.bf16.msra.mxu0 %v750
      %3289 = vmatprep.subr.bf16.mxu0 0
      %3290 = vmatpush1.bf16.msra.mxu0 %v751
      %3291 = vmatprep.subr.bf16.mxu0 0
      %3292 = vmatpush1.bf16.msra.mxu0 %v752
      %3293 = vmatprep.subr.bf16.mxu0 0
      %3294 = vmatpush1.bf16.msra.mxu0 %v753
      %3295 = vmatprep.subr.bf16.mxu0 0
      %3296 = vmatpush1.bf16.msra.mxu0 %v754
      %3297 = vmatprep.subr.bf16.mxu0 0
      %3298 = vmatpush1.bf16.msra.mxu0 %v755
      %3299 = vmatprep.subr.bf16.mxu0 0
      %3300 = vmatpush1.bf16.msra.mxu0 %v756
      %3301 = vmatprep.subr.bf16.mxu0 0
      %3302 = vmatpush1.bf16.msra.mxu0 %v757
      %3303 = vmatprep.subr.bf16.mxu0 0
      %3304 = vmatpush1.bf16.msra.mxu0 %v758
      %3305 = vmatprep.subr.bf16.mxu0 0
      %3306 = vmatpush1.bf16.msra.mxu0 %v759
      %3307 = vmatprep.subr.bf16.mxu0 0
      %3308 = vmatpush1.bf16.msra.mxu0 %v760
      %3309 = vmatprep.subr.bf16.mxu0 0
      %3310 = vmatpush1.bf16.msra.mxu0 %v761
      %3311 = vmatprep.subr.bf16.mxu0 0
      %3312 = vmatpush1.bf16.msra.mxu0 %v762
      %3313 = vmatprep.mubr.bf16.mxu0 %v2708
      %3314 = vmatmul.mubr.bf16.gmra.mrb[0].mxu0 %v2707
      %v3315 = vpop.f32.mrb[0].mxu0
      %v3316 = vadd.f32 %v3155, %v3315
      %v3317 = vpop.f32.mrb[0].mxu0
      %v3318 = vpop.f32.mrb[0].mxu0
      %v3319 = vadd.f32 %v3158, %v3318
      %v3320 = vpop.f32.mrb[0].mxu0
      %3321 = vmatprep.mubr.bf16.mxu0 %v2716
      %3322 = vmatmul.mubr.bf16.gmra.mrb[0].mxu0 %v2715
      %v3323 = vpop.f32.mrb[0].mxu0
      %v3324 = vadd.f32 %v3163, %v3323
      %v3325 = vpop.f32.mrb[0].mxu0
      %v3326 = vpop.f32.mrb[0].mxu0
      %v3327 = vadd.f32 %v3166, %v3326
      %v3328 = vpop.f32.mrb[0].mxu0
      %3329 = vmatprep.mubr.bf16.mxu0 %v2724
      %3330 = vmatmul.mubr.bf16.gmra.mrb[0].mxu0 %v2723
      %v3331 = vpop.f32.mrb[0].mxu0
      %v3332 = vadd.f32 %v3171, %v3331
      %v3333 = vpop.f32.mrb[0].mxu0
      %v3334 = vpop.f32.mrb[0].mxu0
      %v3335 = vadd.f32 %v3174, %v3334
      %v3336 = vpop.f32.mrb[0].mxu0
      %3337 = vmatprep.mubr.bf16.mxu0 %v2732
      %3338 = vmatmul.mubr.bf16.gmra.mrb[0].mxu0 %v2731
      %v3339 = vpop.f32.mrb[0].mxu0
      %v3340 = vadd.f32 %v3179, %v3339
      %v3341 = vpop.f32.mrb[0].mxu0
      %v3342 = vpop.f32.mrb[0].mxu0
      %v3343 = vadd.f32 %v3182, %v3342
      %v3344 = vpop.f32.mrb[0].mxu0
      %3345 = vmatprep.mubr.bf16.mxu0 %v2740
      %3346 = vmatmul.mubr.bf16.gmra.mrb[0].mxu0 %v2739
      %v3347 = vpop.f32.mrb[0].mxu0
      %v3348 = vadd.f32 %v3187, %v3347
      %v3349 = vpop.f32.mrb[0].mxu0
      %v3350 = vpop.f32.mrb[0].mxu0
      %v3351 = vadd.f32 %v3190, %v3350
      %v3352 = vpop.f32.mrb[0].mxu0
      %3353 = vmatprep.mubr.bf16.mxu0 %v2748
      %3354 = vmatmul.mubr.bf16.gmra.mrb[0].mxu0 %v2747
      %v3355 = vpop.f32.mrb[0].mxu0
      %v3356 = vadd.f32 %v3195, %v3355
      %v3357 = vpop.f32.mrb[0].mxu0
      %v3358 = vpop.f32.mrb[0].mxu0
      %v3359 = vadd.f32 %v3198, %v3358
      %v3360 = vpop.f32.mrb[0].mxu0
      %3361 = vmatprep.mubr.bf16.mxu0 %v2756
      %3362 = vmatmul.mubr.bf16.gmra.mrb[0].mxu0 %v2755
      %v3363 = vpop.f32.mrb[0].mxu0
      %v3364 = vadd.f32 %v3203, %v3363
      %v3365 = vpop.f32.mrb[0].mxu0
      %v3366 = vpop.f32.mrb[0].mxu0
      %v3367 = vadd.f32 %v3206, %v3366
      %v3368 = vpop.f32.mrb[0].mxu0
      %3369 = vmatprep.mubr.bf16.mxu0 %v2764
      %3370 = vmatmul.mubr.bf16.gmra.mrb[0].mxu0 %v2763
      %v3371 = vpop.f32.mrb[0].mxu0
      %v3372 = vadd.f32 %v3211, %v3371
      %v3373 = vpop.f32.mrb[0].mxu0
      %v3374 = vpop.f32.mrb[0].mxu0
      %v3375 = vadd.f32 %v3214, %v3374
      %v3376 = vpop.f32.mrb[0].mxu0
      %3377 = vmatprep.mubr.bf16.mxu0 %v2772
      %3378 = vmatmul.mubr.bf16.gmra.mrb[0].mxu0 %v2771
      %v3379 = vpop.f32.mrb[0].mxu0
      %v3380 = vadd.f32 %v3219, %v3379
      %v3381 = vpop.f32.mrb[0].mxu0
      %v3382 = vpop.f32.mrb[0].mxu0
      %v3383 = vadd.f32 %v3222, %v3382
      %v3384 = vpop.f32.mrb[0].mxu0
      %3385 = vmatprep.mubr.bf16.mxu0 %v2780
      %3386 = vmatmul.mubr.bf16.gmra.mrb[0].mxu0 %v2779
      %v3387 = vpop.f32.mrb[0].mxu0
      %v3388 = vadd.f32 %v3227, %v3387
      %v3389 = vpop.f32.mrb[0].mxu0
      %v3390 = vpop.f32.mrb[0].mxu0
      %v3391 = vadd.f32 %v3230, %v3390
      %v3392 = vpop.f32.mrb[0].mxu0
      %3393 = vmatprep.mubr.bf16.mxu0 %v2788
      %3394 = vmatmul.mubr.bf16.gmra.mrb[0].mxu0 %v2787
      %v3395 = vpop.f32.mrb[0].mxu0
      %v3396 = vadd.f32 %v3235, %v3395
      %v3397 = vpop.f32.mrb[0].mxu0
      %v3398 = vpop.f32.mrb[0].mxu0
      %v3399 = vadd.f32 %v3238, %v3398
      %v3400 = vpop.f32.mrb[0].mxu0
      %3401 = vmatprep.mubr.bf16.mxu0 %v2796
      %3402 = vmatmul.mubr.bf16.gmra.mrb[0].mxu0 %v2795
      %v3403 = vpop.f32.mrb[0].mxu0
      %v3404 = vadd.f32 %v3243, %v3403
      %v3405 = vpop.f32.mrb[0].mxu0
      %v3406 = vpop.f32.mrb[0].mxu0
      %v3407 = vadd.f32 %v3246, %v3406
      %v3408 = vpop.f32.mrb[0].mxu0
      %3409 = vmatprep.mubr.bf16.mxu0 %v2804
      %3410 = vmatmul.mubr.bf16.gmra.mrb[0].mxu0 %v2803
      %v3411 = vpop.f32.mrb[0].mxu0
      %v3412 = vadd.f32 %v3251, %v3411
      %v3413 = vpop.f32.mrb[0].mxu0
      %v3414 = vpop.f32.mrb[0].mxu0
      %v3415 = vadd.f32 %v3254, %v3414
      %v3416 = vpop.f32.mrb[0].mxu0
      %3417 = vmatprep.mubr.bf16.mxu0 %v2812
      %3418 = vmatmul.mubr.bf16.gmra.mrb[0].mxu0 %v2811
      %v3419 = vpop.f32.mrb[0].mxu0
      %v3420 = vadd.f32 %v3259, %v3419
      %v3421 = vpop.f32.mrb[0].mxu0
      %v3422 = vpop.f32.mrb[0].mxu0
      %v3423 = vadd.f32 %v3262, %v3422
      %v3424 = vpop.f32.mrb[0].mxu0
      %3425 = vmatprep.mubr.bf16.mxu0 %v2820
      %3426 = vmatmul.mubr.bf16.gmra.mrb[0].mxu0 %v2819
      %v3427 = vpop.f32.mrb[0].mxu0
      %v3428 = vadd.f32 %v3267, %v3427
      %v3429 = vpop.f32.mrb[0].mxu0
      %v3430 = vpop.f32.mrb[0].mxu0
      %v3431 = vadd.f32 %v3270, %v3430
      %v3432 = vpop.f32.mrb[0].mxu0
      %3433 = vmatprep.mubr.bf16.mxu0 %v2828
      %3434 = vmatmul.mubr.bf16.gmra.mrb[0].mxu0 %v2827
      %v3435 = vpop.f32.mrb[0].mxu0
      %v3436 = vadd.f32 %v3275, %v3435
      %v3437 = vpop.f32.mrb[0].mxu0
      %v3438 = vpop.f32.mrb[0].mxu0
      %v3439 = vadd.f32 %v3278, %v3438
      %v3440 = vpop.f32.mrb[0].mxu0
      %3441 = vdwg.mxu0
      %3442 = vmatprep.subr.bf16.mxu0 0
      %3443 = vmatpush1.bf16.msra.mxu0 %v763
      %3444 = vmatprep.subr.bf16.mxu0 0
      %3445 = vmatpush1.bf16.msra.mxu0 %v764
      %3446 = vmatprep.subr.bf16.mxu0 0
      %3447 = vmatpush1.bf16.msra.mxu0 %v765
      %3448 = vmatprep.subr.bf16.mxu0 0
      %3449 = vmatpush1.bf16.msra.mxu0 %v766
      %3450 = vmatprep.subr.bf16.mxu0 0
      %3451 = vmatpush1.bf16.msra.mxu0 %v767
      %3452 = vmatprep.subr.bf16.mxu0 0
      %3453 = vmatpush1.bf16.msra.mxu0 %v768
      %3454 = vmatprep.subr.bf16.mxu0 0
      %3455 = vmatpush1.bf16.msra.mxu0 %v769
      %3456 = vmatprep.subr.bf16.mxu0 0
      %3457 = vmatpush1.bf16.msra.mxu0 %v770
      %3458 = vmatprep.subr.bf16.mxu0 0
      %3459 = vmatpush1.bf16.msra.mxu0 %v771
      %3460 = vmatprep.subr.bf16.mxu0 0
      %3461 = vmatpush1.bf16.msra.mxu0 %v772
      %3462 = vmatprep.subr.bf16.mxu0 0
      %3463 = vmatpush1.bf16.msra.mxu0 %v773
      %3464 = vmatprep.subr.bf16.mxu0 0
      %3465 = vmatpush1.bf16.msra.mxu0 %v774
      %3466 = vmatprep.subr.bf16.mxu0 0
      %3467 = vmatpush1.bf16.msra.mxu0 %v775
      %3468 = vmatprep.subr.bf16.mxu0 0
      %3469 = vmatpush1.bf16.msra.mxu0 %v776
      %3470 = vmatprep.subr.bf16.mxu0 0
      %3471 = vmatpush1.bf16.msra.mxu0 %v777
      %3472 = vmatprep.subr.bf16.mxu0 0
      %3473 = vmatpush1.bf16.msra.mxu0 %v778
      %3474 = vmatprep.mubr.bf16.mxu0 %v2710
      %3475 = vmatmul.mubr.bf16.gmra.mrb[0].mxu0 %v2709
      %v3476 = vpop.f32.mrb[0].mxu0
      %v3477 = vadd.f32 %v3316, %v3476
      %v3478 = vpop.f32.mrb[0].mxu0
      %v3479 = vpop.f32.mrb[0].mxu0
      %v3480 = vadd.f32 %v3319, %v3479
      %v3481 = vpop.f32.mrb[0].mxu0
      %3482 = vmatprep.mubr.bf16.mxu0 %v2718
      %3483 = vmatmul.mubr.bf16.gmra.mrb[0].mxu0 %v2717
      %v3484 = vpop.f32.mrb[0].mxu0
      %v3485 = vadd.f32 %v3324, %v3484
      %v3486 = vpop.f32.mrb[0].mxu0
      %v3487 = vpop.f32.mrb[0].mxu0
      %v3488 = vadd.f32 %v3327, %v3487
      %v3489 = vpop.f32.mrb[0].mxu0
      %3490 = vmatprep.mubr.bf16.mxu0 %v2726
      %3491 = vmatmul.mubr.bf16.gmra.mrb[0].mxu0 %v2725
      %v3492 = vpop.f32.mrb[0].mxu0
      %v3493 = vadd.f32 %v3332, %v3492
      %v3494 = vpop.f32.mrb[0].mxu0
      %v3495 = vpop.f32.mrb[0].mxu0
      %v3496 = vadd.f32 %v3335, %v3495
      %v3497 = vpop.f32.mrb[0].mxu0
      %3498 = vmatprep.mubr.bf16.mxu0 %v2734
      %3499 = vmatmul.mubr.bf16.gmra.mrb[0].mxu0 %v2733
      %v3500 = vpop.f32.mrb[0].mxu0
      %v3501 = vadd.f32 %v3340, %v3500
      %v3502 = vpop.f32.mrb[0].mxu0
      %v3503 = vpop.f32.mrb[0].mxu0
      %v3504 = vadd.f32 %v3343, %v3503
      %v3505 = vpop.f32.mrb[0].mxu0
      %3506 = vmatprep.mubr.bf16.mxu0 %v2742
      %3507 = vmatmul.mubr.bf16.gmra.mrb[0].mxu0 %v2741
      %v3508 = vpop.f32.mrb[0].mxu0
      %v3509 = vadd.f32 %v3348, %v3508
      %v3510 = vpop.f32.mrb[0].mxu0
      %v3511 = vpop.f32.mrb[0].mxu0
      %v3512 = vadd.f32 %v3351, %v3511
      %v3513 = vpop.f32.mrb[0].mxu0
      %3514 = vmatprep.mubr.bf16.mxu0 %v2750
      %3515 = vmatmul.mubr.bf16.gmra.mrb[0].mxu0 %v2749
      %v3516 = vpop.f32.mrb[0].mxu0
      %v3517 = vadd.f32 %v3356, %v3516
      %v3518 = vpop.f32.mrb[0].mxu0
      %v3519 = vpop.f32.mrb[0].mxu0
      %v3520 = vadd.f32 %v3359, %v3519
      %v3521 = vpop.f32.mrb[0].mxu0
      %3522 = vmatprep.mubr.bf16.mxu0 %v2758
      %3523 = vmatmul.mubr.bf16.gmra.mrb[0].mxu0 %v2757
      %v3524 = vpop.f32.mrb[0].mxu0
      %v3525 = vadd.f32 %v3364, %v3524
      %v3526 = vpop.f32.mrb[0].mxu0
      %v3527 = vpop.f32.mrb[0].mxu0
      %v3528 = vadd.f32 %v3367, %v3527
      %v3529 = vpop.f32.mrb[0].mxu0
      %3530 = vmatprep.mubr.bf16.mxu0 %v2766
      %3531 = vmatmul.mubr.bf16.gmra.mrb[0].mxu0 %v2765
      %v3532 = vpop.f32.mrb[0].mxu0
      %v3533 = vadd.f32 %v3372, %v3532
      %v3534 = vpop.f32.mrb[0].mxu0
      %v3535 = vpop.f32.mrb[0].mxu0
      %v3536 = vadd.f32 %v3375, %v3535
      %v3537 = vpop.f32.mrb[0].mxu0
      %3538 = vmatprep.mubr.bf16.mxu0 %v2774
      %3539 = vmatmul.mubr.bf16.gmra.mrb[0].mxu0 %v2773
      %v3540 = vpop.f32.mrb[0].mxu0
      %v3541 = vadd.f32 %v3380, %v3540
      %v3542 = vpop.f32.mrb[0].mxu0
      %v3543 = vpop.f32.mrb[0].mxu0
      %v3544 = vadd.f32 %v3383, %v3543
      %v3545 = vpop.f32.mrb[0].mxu0
      %3546 = vmatprep.mubr.bf16.mxu0 %v2782
      %3547 = vmatmul.mubr.bf16.gmra.mrb[0].mxu0 %v2781
      %v3548 = vpop.f32.mrb[0].mxu0
      %v3549 = vadd.f32 %v3388, %v3548
      %v3550 = vpop.f32.mrb[0].mxu0
      %v3551 = vpop.f32.mrb[0].mxu0
      %v3552 = vadd.f32 %v3391, %v3551
      %v3553 = vpop.f32.mrb[0].mxu0
      %3554 = vmatprep.mubr.bf16.mxu0 %v2790
      %3555 = vmatmul.mubr.bf16.gmra.mrb[0].mxu0 %v2789
      %v3556 = vpop.f32.mrb[0].mxu0
      %v3557 = vadd.f32 %v3396, %v3556
      %v3558 = vpop.f32.mrb[0].mxu0
      %v3559 = vpop.f32.mrb[0].mxu0
      %v3560 = vadd.f32 %v3399, %v3559
      %v3561 = vpop.f32.mrb[0].mxu0
      %3562 = vmatprep.mubr.bf16.mxu0 %v2798
      %3563 = vmatmul.mubr.bf16.gmra.mrb[0].mxu0 %v2797
      %v3564 = vpop.f32.mrb[0].mxu0
      %v3565 = vadd.f32 %v3404, %v3564
      %v3566 = vpop.f32.mrb[0].mxu0
      %v3567 = vpop.f32.mrb[0].mxu0
      %v3568 = vadd.f32 %v3407, %v3567
      %v3569 = vpop.f32.mrb[0].mxu0
      %3570 = vmatprep.mubr.bf16.mxu0 %v2806
      %3571 = vmatmul.mubr.bf16.gmra.mrb[0].mxu0 %v2805
      %v3572 = vpop.f32.mrb[0].mxu0
      %v3573 = vadd.f32 %v3412, %v3572
      %v3574 = vpop.f32.mrb[0].mxu0
      %v3575 = vpop.f32.mrb[0].mxu0
      %v3576 = vadd.f32 %v3415, %v3575
      %v3577 = vpop.f32.mrb[0].mxu0
      %3578 = vmatprep.mubr.bf16.mxu0 %v2814
      %3579 = vmatmul.mubr.bf16.gmra.mrb[0].mxu0 %v2813
      %v3580 = vpop.f32.mrb[0].mxu0
      %v3581 = vadd.f32 %v3420, %v3580
      %v3582 = vpop.f32.mrb[0].mxu0
      %v3583 = vpop.f32.mrb[0].mxu0
      %v3584 = vadd.f32 %v3423, %v3583
      %v3585 = vpop.f32.mrb[0].mxu0
      %3586 = vmatprep.mubr.bf16.mxu0 %v2822
      %3587 = vmatmul.mubr.bf16.gmra.mrb[0].mxu0 %v2821
      %v3588 = vpop.f32.mrb[0].mxu0
      %v3589 = vadd.f32 %v3428, %v3588
      %v3590 = vpop.f32.mrb[0].mxu0
      %v3591 = vpop.f32.mrb[0].mxu0
      %v3592 = vadd.f32 %v3431, %v3591
      %v3593 = vpop.f32.mrb[0].mxu0
      %3594 = vmatprep.mubr.bf16.mxu0 %v2830
      %3595 = vmatmul.mubr.bf16.gmra.mrb[0].mxu0 %v2829
      %v3596 = vpop.f32.mrb[0].mxu0
      %v3597 = vadd.f32 %v3436, %v3596
      %v3598 = vpop.f32.mrb[0].mxu0
      %v3599 = vpop.f32.mrb[0].mxu0
      %v3600 = vadd.f32 %v3439, %v3599
      %v3601 = vpop.f32.mrb[0].mxu0
      %3602 = vdwg.mxu0
      %3603 = vst [vmem:[%s195] sm:$0xff] %v3477
      %3604 = vst [vmem:[%s195 + $0x8] sm:$0xff] %v3480
      %3605 = vst [vmem:[%s195 + $0x10] sm:$0xff] %v3485
      %3606 = vst [vmem:[%s195 + $0x18] sm:$0xff] %v3488
      %3607 = vst [vmem:[%s195 + $0x20] sm:$0xff] %v3493
      %3608 = vst [vmem:[%s195 + $0x28] sm:$0xff] %v3496
      %3609 = vst [vmem:[%s195 + $0x30] sm:$0xff] %v3501
      %3610 = vst [vmem:[%s195 + $0x38] sm:$0xff] %v3504
      %3611 = vst [vmem:[%s195 + $0x40] sm:$0xff] %v3509
      %3612 = vst [vmem:[%s195 + $0x48] sm:$0xff] %v3512
      %3613 = vst [vmem:[%s195 + $0x50] sm:$0xff] %v3517
      %3614 = vst [vmem:[%s195 + $0x58] sm:$0xff] %v3520
      %3615 = vst [vmem:[%s195 + $0x60] sm:$0xff] %v3525
      %3616 = vst [vmem:[%s195 + $0x68] sm:$0xff] %v3528
      %3617 = vst [vmem:[%s195 + $0x70] sm:$0xff] %v3533
      %3618 = vst [vmem:[%s195 + $0x78] sm:$0xff] %v3536
      %3619 = vst [vmem:[%s195 + $0x80] sm:$0xff] %v3541
      %3620 = vst [vmem:[%s195 + $0x88] sm:$0xff] %v3544
      %3621 = vst [vmem:[%s195 + $0x90] sm:$0xff] %v3549
      %3622 = vst [vmem:[%s195 + $0x98] sm:$0xff] %v3552
      %3623 = vst [vmem:[%s195 + $0xa0] sm:$0xff] %v3557
      %3624 = vst [vmem:[%s195 + $0xa8] sm:$0xff] %v3560
      %3625 = vst [vmem:[%s195 + $0xb0] sm:$0xff] %v3565
      %3626 = vst [vmem:[%s195 + $0xb8] sm:$0xff] %v3568
      %3627 = vst [vmem:[%s195 + $0xc0] sm:$0xff] %v3573
      %3628 = vst [vmem:[%s195 + $0xc8] sm:$0xff] %v3576
      %3629 = vst [vmem:[%s195 + $0xd0] sm:$0xff] %v3581
      %3630 = vst [vmem:[%s195 + $0xd8] sm:$0xff] %v3584
      %3631 = vst [vmem:[%s195 + $0xe0] sm:$0xff] %v3589
      %3632 = vst [vmem:[%s195 + $0xe8] sm:$0xff] %v3592
      %3633 = vst [vmem:[%s195 + $0xf0] sm:$0xff] %v3597
      %3634 = vst [vmem:[%s195 + $0xf8] sm:$0xff] %v3600
      %p3635 = scmp.lt.s32.totalorder %s18, 1
      %s3636 = scalar_select %p3635, %s18, 1
      %p3637 = scmp.lt.s32.totalorder %s19, 0
      %s3638 = scalar_select %p3637, %s19, 0
      %s3639 = smul.addr %s3636, 32
      %s3640 = sadd.s32 %s3638, %s3639
      %s3641 = smul.addr %s3640, 8
      %s3642 = scalar_lea.vmem %s3, %s3641
      // Predicated region
      $region33: #{vector_quantizer_forward.1} parent=31 // pred_check
        %p3643 = pneg %p116
      $region34: #{vector_quantizer_forward.1} parent=31 // pred_check_branch
        %3645 = sbr.rel (%p3643) target = $region36
      $region35: #{vector_quantizer_forward.1} parent=31 // pred_region
        _
      $region36: #{vector_quantizer_forward.1} parent=31 // pred_fallthru
        _
    $region32: #{vector_quantizer_forward.1} parent=5 // pred_fallthru
      _
    %p3646 = scmp.le.s32.totalorder 2, %s9
    // Predicated region
    $region37: #{vector_quantizer_forward.1} parent=5 // pred_check
      %p3647 = pneg %p3646
    $region38: #{vector_quantizer_forward.1} parent=5 // pred_check_branch
      %3649 = sbr.rel (%p3647) target = $region40
    $region39: #{vector_quantizer_forward.1} parent=5 // pred_region
      %s3650 = ssub.s32 %s9, 2
      // Predicated region
      $region41: #{vector_quantizer_forward.1} parent=39 // pred_check
        %p3651 = pneg %p122
      $region42: #{vector_quantizer_forward.1} parent=39 // pred_check_branch
        %3653 = sbr.rel (%p3651) target = $region44
      $region43: #{vector_quantizer_forward.1} parent=39 // pred_region
        %p3654 = scmp.lt.s32.totalorder %s20, 1
        %s3655 = scalar_select %p3654, %s20, 1
        %p3656 = scmp.lt.s32.totalorder %s21, 0
        %s3657 = scalar_select %p3656, %s21, 0
        %s3658 = smul.addr %s3655, 32
        %s3659 = sadd.s32 %s3657, %s3658
        %s3660 = smul.addr %s3659, 8
        %s3661 = scalar_lea.vmem %s3, %s3660
      $region44: #{vector_quantizer_forward.1} parent=39 // pred_fallthru
        _
    $region40: #{vector_quantizer_forward.1} parent=5 // pred_fallthru
      _
  $region6: #{vector_quantizer_forward.1} parent=0 // loop_footer
    %s13 = sadd.s32 1, %s9
  $region7: #{vector_quantizer_forward.1} parent=0 // loop_footer_branch
    %8 = sbr.rel target = $region3
  $region8: #{vector_quantizer_forward.1} parent=0 // loop_exit
    _

</llo_original>
